<compile_context>
chip_gen: v7x
topology: tpu7x:2x2x1
jax: 0.10.0
libtpu: 0.0.40
codegen_flags: <defaults>
</compile_context>

<pallas_src>
import functools

import numpy as np
import jax
import jax.numpy as jnp
from jax.experimental import pallas as pl
from jax.experimental.pallas import tpu as pltpu

# ----------------------------- model hyper-params -----------------------------
IN_DIM = 64
MEM_DIM = 32
HIDDEN_DIM = 32        # must equal MEM_DIM: the original module applies wp=Linear(mem_dim,2)
                       # to the (1, hidden_dim) output of wh, which only works if equal.
MAX_NUM_PARA = 4
MAX_NUM_SENT = 8
NUM_CLASSES = 2        # wp output dim is hard-coded to 2 in the reference module


def _vmem():
    return pl.BlockSpec(memory_space=pltpu.MemorySpace.VMEM)


# --------------------------------- fused kernel --------------------------------
def _lstm_cell(gates, c, H):
    # PyTorch gate order: i, f, g, o
    i = jax.nn.sigmoid(gates[:, 0 * H:1 * H])
    f = jax.nn.sigmoid(gates[:, 1 * H:2 * H])
    g = jnp.tanh(gates[:, 2 * H:3 * H])
    o = jax.nn.sigmoid(gates[:, 3 * H:4 * H])
    c_new = f * c + i * g
    h_new = o * jnp.tanh(c_new)
    return h_new, c_new


def _fused_kernel(num_para, np_pad,
                  rsent_ref, news_ref, para_pad_ref,
                  st_wT_ref, st_b_ref,
                  n_wih_ref, n_whh_ref, n_b_ref,
                  b_wih_ref, b_whh_ref, b_b_ref,
                  wh_wT_ref, wh_b_ref, wp_wT_ref, wp_b_ref,
                  o_ref,
                  nproj_ref, bproj_ref):
    """Entire SimilarityTreeLSTM forward for one document.

    news_ref : (MAX_NUM_SENT * np_pad, IN_DIM), row = t*np_pad + p (time-major,
               paragraphs batched on sublanes, padded with zeros past num_para).
    W_ih are pre-concatenated [fwd | bwd] -> (Din, 8H); W_hh are block-diagonal
    (2H, 8H) so one matmul per step drives both directions; biases are
    b_ih + b_hh, concatenated [fwd | bwd] -> (1, 8H).
    """
    H = MEM_DIM
    Ts = MAX_NUM_SENT
    Tp = MAX_NUM_PARA
    NP = np_pad

    # ---- headline: sentence_transform Linear -------------------------------
    l = (jnp.dot(rsent_ref[...], st_wT_ref[...], preferred_element_type=jnp.float32)
         + st_b_ref[...])                                                   # (1, 2H)

    # ---- news BiLSTM, batched over paragraphs -------------------------------
    # Precompute x @ W_ih for all timesteps & both directions in one matmul.
    nproj_ref[...] = (jnp.dot(news_ref[...], n_wih_ref[...],
                              preferred_element_type=jnp.float32)
                      + n_b_ref[...])                                       # (Ts*NP, 8H)

    whh_n = n_whh_ref[...]                                                  # (2H, 8H)
    h_cat = jnp.zeros((NP, 2 * H), jnp.float32)
    c_f = jnp.zeros((NP, H), jnp.float32)
    c_b = jnp.zeros((NP, H), jnp.float32)
    for t in range(Ts):                                 # static unroll, T=8
        rec = jnp.dot(h_cat, whh_n, preferred_element_type=jnp.float32)     # (NP, 8H)
        g_f = nproj_ref[t * NP:(t + 1) * NP, 0:4 * H] + rec[:, 0:4 * H]
        g_b = nproj_ref[(Ts - 1 - t) * NP:(Ts - t) * NP, 4 * H:8 * H] + rec[:, 4 * H:8 * H]
        h_f, c_f = _lstm_cell(g_f, c_f, H)
        h_b, c_b = _lstm_cell(g_b, c_b, H)
        h_cat = jnp.concatenate([h_f, h_b], axis=1)                         # (NP, 2H)

    # ---- assemble body_LSTM input: real paragraphs then para_pad rows -------
    n_valid = min(num_para, Tp)                          # Python/static
    row_ids = jax.lax.broadcasted_iota(jnp.int32, (Tp, 2 * H), 0)
    pad_rows = jnp.broadcast_to(para_pad_ref[...], (Tp, 2 * H))
    body_inp = jnp.where(row_ids < n_valid, h_cat[0:Tp, :], pad_rows)       # (Tp, 2H)

    # ---- body BiLSTM (batch = 1 document) -----------------------------------
    bproj_ref[...] = (jnp.dot(body_inp, b_wih_ref[...],
                              preferred_element_type=jnp.float32)
                      + b_b_ref[...])                                       # (Tp, 8H)
    whh_b = b_whh_ref[...]
    h2 = jnp.zeros((1, 2 * H), jnp.float32)
    cf2 = jnp.zeros((1, H), jnp.float32)
    cb2 = jnp.zeros((1, H), jnp.float32)
    for t in range(Tp):                                  # static unroll, T=4
        rec = jnp.dot(h2, whh_b, preferred_element_type=jnp.float32)        # (1, 8H)
        g_f = bproj_ref[t:t + 1, 0:4 * H] + rec[:, 0:4 * H]
        g_b = bproj_ref[Tp - 1 - t:Tp - t, 4 * H:8 * H] + rec[:, 4 * H:8 * H]
        hf, cf2 = _lstm_cell(g_f, cf2, H)
        hb, cb2 = _lstm_cell(g_b, cb2, H)
        h2 = jnp.concatenate([hf, hb], axis=1)                              # (1, 2H)
    r = h2

    # ---- similarity head -----------------------------------------------------
    entail = jnp.concatenate([l * r, jnp.abs(l - r), l, r], axis=1)         # (1, 8H=256)
    hidden = jax.nn.sigmoid(
        jnp.dot(entail, wh_wT_ref[...], preferred_element_type=jnp.float32)
        + wh_b_ref[...])                                                    # (1, HIDDEN)
    o_ref[...] = (jnp.dot(hidden, wp_wT_ref[...], preferred_element_type=jnp.float32)
                  + wp_b_ref[...])                                          # (1, 2)


# -------------------------------- wrappers ------------------------------------
def prepare_kernel_params(p):
    """Build fused-kernel weight layouts (fwd/bwd concat & block-diag W_hh)."""
    H = MEM_DIM

    def cat_lstm(lp):
        wih = jnp.concatenate([lp['wih_fT'], lp['wih_bT']], axis=1)          # (Din, 8H)
        whh = jnp.zeros((2 * H, 8 * H), jnp.float32)
        whh = whh.at[0:H, 0:4 * H].set(lp['whh_fT'])
        whh = whh.at[H:2 * H, 4 * H:8 * H].set(lp['whh_bT'])                 # block-diag
        b = jnp.concatenate([lp['b_f'], lp['b_b']], axis=1)                  # (1, 8H)
        return wih, whh, b

    kp = dict(p)
    kp['news_cat'] = cat_lstm(p['news'])
    kp['body_cat'] = cat_lstm(p['body'])
    return kp


def similarity_tree_lstm_forward(body, params):
    """Mirrors SimilarityTreeLSTM.forward / DocLSTM.forward control flow,
    with all tensor math in one fused Pallas kernel."""
    assert HIDDEN_DIM == MEM_DIM, "wh->wp chain requires hidden_dim == mem_dim"
    assert params['wh_wT'].shape == (8 * MEM_DIM, HIDDEN_DIM)

    rsent = body['headline']['rsent']                                        # (1, IN_DIM)

    # Per-paragraph sentence padding, exactly as DocLSTM.forward:
    # pad with (max_num_sent - 1) copies of sent_pad, truncate to max_num_sent.
    para_sent_mats = []
    for p_id in body['body_list']:
        sl = list(body['body_list'][p_id]) + [params['sent_pad']] * (MAX_NUM_SENT - 1)
        para_sent_mats.append(jnp.concatenate(sl[:MAX_NUM_SENT], axis=0))    # (Ts, IN_DIM)
    num_para = len(para_sent_mats)
    np_pad = max(8, ((num_para + 7) // 8) * 8)           # fill sublane tile for batching

    news = jnp.stack(para_sent_mats, axis=0)                                 # (P, Ts, IN_DIM)
    if np_pad > num_para:
        news = jnp.pad(news, ((0, np_pad - num_para), (0, 0), (0, 0)))
    # time-major flatten: row = t*np_pad + p -> contiguous per-timestep sublane slabs
    news_flat = jnp.transpose(news, (1, 0, 2)).reshape(MAX_NUM_SENT * np_pad, IN_DIM)

    n_wih, n_whh, n_b = params['news_cat']
    b_wih, b_whh, b_b = params['body_cat']

    kernel = functools.partial(_fused_kernel, num_para, np_pad)
    return pl.pallas_call(
        kernel,
        out_shape=jax.ShapeDtypeStruct((1, NUM_CLASSES), jnp.float32),
        in_specs=[_vmem()] * 15,
        out_specs=_vmem(),
        scratch_shapes=[
            pltpu.VMEM((MAX_NUM_SENT * np_pad, 8 * MEM_DIM), jnp.float32),   # news x-proj
            pltpu.VMEM((MAX_NUM_PARA, 8 * MEM_DIM), jnp.float32),            # body x-proj
        ],
    )(rsent, news_flat, params['para_pad'],
      params['st_wT'], params['st_b'],
      n_wih, n_whh, n_b,
      b_wih, b_whh, b_b,
      params['wh_wT'], params['wh_b'], params['wp_wT'], params['wp_b'])
    # TODO(synk): for many-document throughput, add a leading document axis as a
    # "parallel" grid dim (shards across v7x's 2 TCs) and emit a lane-dense output slab.


# --------------------------- deterministic params ------------------------------
def init_params(key):
    ks = list(jax.random.split(key, 16))

    def rnd(k, shape, scale=0.1):
        return scale * jax.random.normal(k, shape, jnp.float32)

    def lstm_params(k, din):
        kk = jax.random.split(k, 8)
        d = {}
        for i, direc in enumerate(['f', 'b']):
            d[f'wih_{direc}T'] = rnd(kk[4 * i + 0], (din, 4 * MEM_DIM))
            d[f'whh_{direc}T'] = rnd(kk[4 * i + 1], (MEM_DIM, 4 * MEM_DIM))
            # combined bias: b_ih + b_hh
            d[f'b_{direc}'] = (rnd(kk[4 * i + 2], (1, 4 * MEM_DIM))
                               + rnd(kk[4 * i + 3], (1, 4 * MEM_DIM)))
        return d

    p = {
        'st_wT': rnd(ks[0], (IN_DIM, 2 * MEM_DIM)),
        'st_b': rnd(ks[1], (1, 2 * MEM_DIM)),
        'news': lstm_params(ks[2], IN_DIM),
        'body': lstm_params(ks[3], 2 * MEM_DIM),
        'wh_wT': rnd(ks[4], (8 * MEM_DIM, HIDDEN_DIM)),
        'wh_b': rnd(ks[5], (1, HIDDEN_DIM)),
        'wp_wT': rnd(ks[6], (MEM_DIM, NUM_CLASSES)),
        'wp_b': rnd(ks[7], (1, NUM_CLASSES)),
        'sent_pad': rnd(ks[8], (1, IN_DIM), scale=1.0),
        'para_pad': rnd(ks[9], (1, 2 * MEM_DIM), scale=1.0),
    }
    return p


# ---------------------------- pure-JAX reference --------------------------------
def _ref_cell(x_t, h, c, wih, whh, b):
    H = MEM_DIM
    hp = jax.lax.Precision.HIGHEST
    gates = (jnp.dot(x_t, wih, precision=hp) + jnp.dot(h, whh, precision=hp) + b)
    i = jax.nn.sigmoid(gates[:, 0 * H:1 * H])
    f = jax.nn.sigmoid(gates[:, 1 * H:2 * H])
    g = jnp.tanh(gates[:, 2 * H:3 * H])
    o = jax.nn.sigmoid(gates[:, 3 * H:4 * H])
    c_new = f * c + i * g
    return o * jnp.tanh(c_new), c_new


def _ref_bilstm(x, lp):
    T = x.shape[0]
    z = jnp.zeros((1, MEM_DIM), jnp.float32)
    h_f, c_f, h_b, c_b = z, z, z, z
    for t in range(T):
        h_f, c_f = _ref_cell(x[t:t + 1], h_f, c_f, lp['wih_fT'], lp['whh_fT'], lp['b_f'])
        tb = T - 1 - t
        h_b, c_b = _ref_cell(x[tb:tb + 1], h_b, c_b, lp['wih_bT'], lp['whh_bT'], lp['b_b'])
    return jnp.concatenate([h_f, h_b], axis=1)


def ref_forward(body, p):
    hp = jax.lax.Precision.HIGHEST
    rsent = body['headline']['rsent']
    sent_encoded = jnp.dot(rsent, p['st_wT'], precision=hp) + p['st_b']
    para_enc = []
    for p_id in body['body_list']:
        sl = list(body['body_list'][p_id]) + [p['sent_pad']] * (MAX_NUM_SENT - 1)
        para_enc.append(_ref_bilstm(jnp.concatenate(sl[:MAX_NUM_SENT], 0), p['news']))
    para_enc += [p['para_pad']] * (MAX_NUM_PARA - 1)
    bi_body = _ref_bilstm(jnp.concatenate(para_enc[:MAX_NUM_PARA], 0), p['body'])

    l, r = sent_encoded, bi_body
    entail = jnp.concatenate([l * r, jnp.abs(l - r), l, r], axis=1)
    hidden = jax.nn.sigmoid(jnp.dot(entail, p['wh_wT'], precision=hp) + p['wh_b'])
    return jnp.dot(hidden, p['wp_wT'], precision=hp) + p['wp_b']


# ------------------------------------ main --------------------------------------
if __name__ == "__main__":
    key = jax.random.PRNGKey(0)
    params = init_params(key)
    params = prepare_kernel_params(params)

    # Synthetic "document": headline + 3 paragraphs with 2 / 3 / 1 sentences.
    dkeys = jax.random.split(jax.random.PRNGKey(1), 8)
    body = {
        'headline': {'rsent': jax.random.normal(dkeys[0], (1, IN_DIM), jnp.float32)},
        'body_list': {
            'p0': [jax.random.normal(dkeys[1], (1, IN_DIM), jnp.float32),
                   jax.random.normal(dkeys[2], (1, IN_DIM), jnp.float32)],
            'p1': [jax.random.normal(dkeys[3], (1, IN_DIM), jnp.float32),
                   jax.random.normal(dkeys[4], (1, IN_DIM), jnp.float32),
                   jax.random.normal(dkeys[5], (1, IN_DIM), jnp.float32)],
            'p2': [jax.random.normal(dkeys[6], (1, IN_DIM), jnp.float32)],
        },
    }

    out = similarity_tree_lstm_forward(body, params)
    out = jax.block_until_ready(out)

    ref = jax.block_until_ready(ref_forward(body, params))
    assert out.shape == (1, NUM_CLASSES), out.shape
    # NOTE: kernel matmuls use default TPU MXU precision; reference uses HIGHEST,
    # hence the 2e-3 tolerance (sizes here are tiny, gap is well below it).
    np.testing.assert_allclose(np.asarray(out), np.asarray(ref), atol=2e-3, rtol=2e-3)

    print("KERNEL_OK")
</pallas_src>

<mosaic_0001>
module attributes {stable_mosaic.version = 11 : i64} {
  func.func @_fused_kernel(%arg0: memref<1x64xf32, #tpu.memory_space<vmem>>, %arg1: memref<64x64xf32, #tpu.memory_space<vmem>>, %arg2: memref<1x64xf32, #tpu.memory_space<vmem>>, %arg3: memref<64x64xf32, #tpu.memory_space<vmem>>, %arg4: memref<1x64xf32, #tpu.memory_space<vmem>>, %arg5: memref<64x256xf32, #tpu.memory_space<vmem>>, %arg6: memref<64x256xf32, #tpu.memory_space<vmem>>, %arg7: memref<1x256xf32, #tpu.memory_space<vmem>>, %arg8: memref<64x256xf32, #tpu.memory_space<vmem>>, %arg9: memref<64x256xf32, #tpu.memory_space<vmem>>, %arg10: memref<1x256xf32, #tpu.memory_space<vmem>>, %arg11: memref<256x32xf32, #tpu.memory_space<vmem>>, %arg12: memref<1x32xf32, #tpu.memory_space<vmem>>, %arg13: memref<32x2xf32, #tpu.memory_space<vmem>>, %arg14: memref<1x2xf32, #tpu.memory_space<vmem>>, %arg15: memref<1x2xf32, #tpu.memory_space<vmem>>, %arg16: memref<64x256xf32, #tpu.memory_space<vmem>>, %arg17: memref<4x256xf32, #tpu.memory_space<vmem>>) attributes {dimension_semantics = [], scalar_prefetch = 0 : i64, scratch_operands = 2 : i64, tpu.core_type = #tpu.core_type<tc>} {
    %c0 = arith.constant 0 : index
    %c0_0 = arith.constant 0 : index
    %0 = vector.load %arg0[%c0, %c0_0] : memref<1x64xf32, #tpu.memory_space<vmem>>, vector<1x64xf32>
    %c0_1 = arith.constant 0 : index
    %c0_2 = arith.constant 0 : index
    %1 = vector.load %arg3[%c0_1, %c0_2] : memref<64x64xf32, #tpu.memory_space<vmem>>, vector<64x64xf32>
    %cst = arith.constant dense<0.000000e+00> : vector<1x64xf32>
    %2 = tpu.matmul %0, %1, %cst {dimension_numbers = #tpu.dot_dimension_numbers<[1], [0], [0], [1], [0, 0, 1, 1], [], []>} : vector<1x64xf32>, vector<64x64xf32>, vector<1x64xf32> -> vector<1x64xf32>
    %c0_3 = arith.constant 0 : index
    %c0_4 = arith.constant 0 : index
    %3 = vector.load %arg4[%c0_3, %c0_4] : memref<1x64xf32, #tpu.memory_space<vmem>>, vector<1x64xf32>
    %4 = arith.addf %2, %3 : vector<1x64xf32>
    %c0_5 = arith.constant 0 : index
    %c0_6 = arith.constant 0 : index
    %5 = vector.load %arg1[%c0_5, %c0_6] : memref<64x64xf32, #tpu.memory_space<vmem>>, vector<64x64xf32>
    %c0_7 = arith.constant 0 : index
    %c0_8 = arith.constant 0 : index
    %6 = vector.load %arg5[%c0_7, %c0_8] : memref<64x256xf32, #tpu.memory_space<vmem>>, vector<64x256xf32>
    %cst_9 = arith.constant dense<0.000000e+00> : vector<64x256xf32>
    %7 = tpu.matmul %5, %6, %cst_9 {dimension_numbers = #tpu.dot_dimension_numbers<[1], [0], [0], [1], [0, 0, 1, 1], [], []>} : vector<64x64xf32>, vector<64x256xf32>, vector<64x256xf32> -> vector<64x256xf32>
    %c0_10 = arith.constant 0 : index
    %c0_11 = arith.constant 0 : index
    %8 = vector.load %arg7[%c0_10, %c0_11] : memref<1x256xf32, #tpu.memory_space<vmem>>, vector<1x256xf32>
    %9 = vector.broadcast %8 : vector<1x256xf32> to vector<64x256xf32>
    %10 = arith.addf %7, %9 : vector<64x256xf32>
    %c0_12 = arith.constant 0 : index
    %c0_13 = arith.constant 0 : index
    %11 = vector.load %arg16[%c0_12, %c0_13] : memref<64x256xf32, #tpu.memory_space<vmem>>, vector<64x256xf32>
    tpu.vector_store %arg16[%c0_12, %c0_13], %10 {strides = array<i32>} : memref<64x256xf32, #tpu.memory_space<vmem>>, vector<64x256xf32>,
    %c0_14 = arith.constant 0 : index
    %c0_15 = arith.constant 0 : index
    %12 = vector.load %arg6[%c0_14, %c0_15] : memref<64x256xf32, #tpu.memory_space<vmem>>, vector<64x256xf32>
    %cst_16 = arith.constant 0.000000e+00 : f32
    %13 = vector.broadcast %cst_16 : f32 to vector<8x64xf32>
    %cst_17 = arith.constant 0.000000e+00 : f32
    %14 = vector.broadcast %cst_17 : f32 to vector<8x32xf32>
    %cst_18 = arith.constant 0.000000e+00 : f32
    %15 = vector.broadcast %cst_18 : f32 to vector<8x32xf32>
    %cst_19 = arith.constant dense<0.000000e+00> : vector<8x256xf32>
    %16 = tpu.matmul %13, %12, %cst_19 {dimension_numbers = #tpu.dot_dimension_numbers<[1], [0], [0], [1], [0, 0, 1, 1], [], []>} : vector<8x64xf32>, vector<64x256xf32>, vector<8x256xf32> -> vector<8x256xf32>
    %c0_20 = arith.constant 0 : index
    %c0_21 = arith.constant 0 : index
    %17 = vector.load %arg16[%c0_20, %c0_21] : memref<64x256xf32, #tpu.memory_space<vmem>>, vector<8x128xf32>
    %18 = vector.extract_strided_slice %16 {offsets = [0, 0], sizes = [8, 128], strides = [1, 1]} : vector<8x256xf32> to vector<8x128xf32>
    %19 = arith.addf %17, %18 : vector<8x128xf32>
    %c56 = arith.constant 56 : index
    %c128 = arith.constant 128 : index
    %20 = vector.load %arg16[%c56, %c128] : memref<64x256xf32, #tpu.memory_space<vmem>>, vector<8x128xf32>
    %21 = vector.extract_strided_slice %16 {offsets = [0, 128], sizes = [8, 128], strides = [1, 1]} : vector<8x256xf32> to vector<8x128xf32>
    %22 = arith.addf %20, %21 : vector<8x128xf32>
    %23 = vector.extract_strided_slice %19 {offsets = [0, 0], sizes = [8, 32], strides = [1, 1]} : vector<8x128xf32> to vector<8x32xf32>
    %24 = arith.negf %23 : vector<8x32xf32>
    %25 = math.exp %24 : vector<8x32xf32>
    %cst_22 = arith.constant 1.000000e+00 : f32
    %26 = vector.broadcast %cst_22 : f32 to vector<8x32xf32>
    %27 = arith.addf %26, %25 : vector<8x32xf32>
    %28 = arith.divf %26, %27 : vector<8x32xf32>
    %29 = vector.extract_strided_slice %19 {offsets = [0, 32], sizes = [8, 32], strides = [1, 1]} : vector<8x128xf32> to vector<8x32xf32>
    %30 = arith.negf %29 : vector<8x32xf32>
    %31 = math.exp %30 : vector<8x32xf32>
    %cst_23 = arith.constant 1.000000e+00 : f32
    %32 = vector.broadcast %cst_23 : f32 to vector<8x32xf32>
    %33 = arith.addf %32, %31 : vector<8x32xf32>
    %34 = arith.divf %32, %33 : vector<8x32xf32>
    %35 = vector.extract_strided_slice %19 {offsets = [0, 64], sizes = [8, 32], strides = [1, 1]} : vector<8x128xf32> to vector<8x32xf32>
    %36 = math.tanh %35 : vector<8x32xf32>
    %37 = vector.extract_strided_slice %19 {offsets = [0, 96], sizes = [8, 32], strides = [1, 1]} : vector<8x128xf32> to vector<8x32xf32>
    %38 = arith.negf %37 : vector<8x32xf32>
    %39 = math.exp %38 : vector<8x32xf32>
    %cst_24 = arith.constant 1.000000e+00 : f32
    %40 = vector.broadcast %cst_24 : f32 to vector<8x32xf32>
    %41 = arith.addf %40, %39 : vector<8x32xf32>
    %42 = arith.divf %40, %41 : vector<8x32xf32>
    %43 = arith.mulf %34, %14 : vector<8x32xf32>
    %44 = arith.mulf %28, %36 : vector<8x32xf32>
    %45 = arith.addf %43, %44 : vector<8x32xf32>
    %46 = math.tanh %45 : vector<8x32xf32>
    %47 = arith.mulf %42, %46 : vector<8x32xf32>
    %48 = vector.extract_strided_slice %22 {offsets = [0, 0], sizes = [8, 32], strides = [1, 1]} : vector<8x128xf32> to vector<8x32xf32>
    %49 = arith.negf %48 : vector<8x32xf32>
    %50 = math.exp %49 : vector<8x32xf32>
    %cst_25 = arith.constant 1.000000e+00 : f32
    %51 = vector.broadcast %cst_25 : f32 to vector<8x32xf32>
    %52 = arith.addf %51, %50 : vector<8x32xf32>
    %53 = arith.divf %51, %52 : vector<8x32xf32>
    %54 = vector.extract_strided_slice %22 {offsets = [0, 32], sizes = [8, 32], strides = [1, 1]} : vector<8x128xf32> to vector<8x32xf32>
    %55 = arith.negf %54 : vector<8x32xf32>
    %56 = math.exp %55 : vector<8x32xf32>
    %cst_26 = arith.constant 1.000000e+00 : f32
    %57 = vector.broadcast %cst_26 : f32 to vector<8x32xf32>
    %58 = arith.addf %57, %56 : vector<8x32xf32>
    %59 = arith.divf %57, %58 : vector<8x32xf32>
    %60 = vector.extract_strided_slice %22 {offsets = [0, 64], sizes = [8, 32], strides = [1, 1]} : vector<8x128xf32> to vector<8x32xf32>
    %61 = math.tanh %60 : vector<8x32xf32>
    %62 = vector.extract_strided_slice %22 {offsets = [0, 96], sizes = [8, 32], strides = [1, 1]} : vector<8x128xf32> to vector<8x32xf32>
    %63 = arith.negf %62 : vector<8x32xf32>
    %64 = math.exp %63 : vector<8x32xf32>
    %cst_27 = arith.constant 1.000000e+00 : f32
    %65 = vector.broadcast %cst_27 : f32 to vector<8x32xf32>
    %66 = arith.addf %65, %64 : vector<8x32xf32>
    %67 = arith.divf %65, %66 : vector<8x32xf32>
    %68 = arith.mulf %59, %15 : vector<8x32xf32>
    %69 = arith.mulf %53, %61 : vector<8x32xf32>
    %70 = arith.addf %68, %69 : vector<8x32xf32>
    %71 = math.tanh %70 : vector<8x32xf32>
    %72 = arith.mulf %67, %71 : vector<8x32xf32>
    %73 = tpu.concatenate %47, %72 in 1 : vector<8x32xf32>, vector<8x32xf32> -> vector<8x64xf32>
    %cst_28 = arith.constant dense<0.000000e+00> : vector<8x256xf32>
    %74 = tpu.matmul %73, %12, %cst_28 {dimension_numbers = #tpu.dot_dimension_numbers<[1], [0], [0], [1], [0, 0, 1, 1], [], []>} : vector<8x64xf32>, vector<64x256xf32>, vector<8x256xf32> -> vector<8x256xf32>
    %c8 = arith.constant 8 : index
    %c0_29 = arith.constant 0 : index
    %75 = vector.load %arg16[%c8, %c0_29] : memref<64x256xf32, #tpu.memory_space<vmem>>, vector<8x128xf32>
    %76 = vector.extract_strided_slice %74 {offsets = [0, 0], sizes = [8, 128], strides = [1, 1]} : vector<8x256xf32> to vector<8x128xf32>
    %77 = arith.addf %75, %76 : vector<8x128xf32>
    %c48 = arith.constant 48 : index
    %c128_30 = arith.constant 128 : index
    %78 = vector.load %arg16[%c48, %c128_30] : memref<64x256xf32, #tpu.memory_space<vmem>>, vector<8x128xf32>
    %79 = vector.extract_strided_slice %74 {offsets = [0, 128], sizes = [8, 128], strides = [1, 1]} : vector<8x256xf32> to vector<8x128xf32>
    %80 = arith.addf %78, %79 : vector<8x128xf32>
    %81 = vector.extract_strided_slice %77 {offsets = [0, 0], sizes = [8, 32], strides = [1, 1]} : vector<8x128xf32> to vector<8x32xf32>
    %82 = arith.negf %81 : vector<8x32xf32>
    %83 = math.exp %82 : vector<8x32xf32>
    %cst_31 = arith.constant 1.000000e+00 : f32
    %84 = vector.broadcast %cst_31 : f32 to vector<8x32xf32>
    %85 = arith.addf %84, %83 : vector<8x32xf32>
    %86 = arith.divf %84, %85 : vector<8x32xf32>
    %87 = vector.extract_strided_slice %77 {offsets = [0, 32], sizes = [8, 32], strides = [1, 1]} : vector<8x128xf32> to vector<8x32xf32>
    %88 = arith.negf %87 : vector<8x32xf32>
    %89 = math.exp %88 : vector<8x32xf32>
    %cst_32 = arith.constant 1.000000e+00 : f32
    %90 = vector.broadcast %cst_32 : f32 to vector<8x32xf32>
    %91 = arith.addf %90, %89 : vector<8x32xf32>
    %92 = arith.divf %90, %91 : vector<8x32xf32>
    %93 = vector.extract_strided_slice %77 {offsets = [0, 64], sizes = [8, 32], strides = [1, 1]} : vector<8x128xf32> to vector<8x32xf32>
    %94 = math.tanh %93 : vector<8x32xf32>
    %95 = vector.extract_strided_slice %77 {offsets = [0, 96], sizes = [8, 32], strides = [1, 1]} : vector<8x128xf32> to vector<8x32xf32>
    %96 = arith.negf %95 : vector<8x32xf32>
    %97 = math.exp %96 : vector<8x32xf32>
    %cst_33 = arith.constant 1.000000e+00 : f32
    %98 = vector.broadcast %cst_33 : f32 to vector<8x32xf32>
    %99 = arith.addf %98, %97 : vector<8x32xf32>
    %100 = arith.divf %98, %99 : vector<8x32xf32>
    %101 = arith.mulf %92, %45 : vector<8x32xf32>
    %102 = arith.mulf %86, %94 : vector<8x32xf32>
    %103 = arith.addf %101, %102 : vector<8x32xf32>
    %104 = math.tanh %103 : vector<8x32xf32>
    %105 = arith.mulf %100, %104 : vector<8x32xf32>
    %106 = vector.extract_strided_slice %80 {offsets = [0, 0], sizes = [8, 32], strides = [1, 1]} : vector<8x128xf32> to vector<8x32xf32>
    %107 = arith.negf %106 : vector<8x32xf32>
    %108 = math.exp %107 : vector<8x32xf32>
    %cst_34 = arith.constant 1.000000e+00 : f32
    %109 = vector.broadcast %cst_34 : f32 to vector<8x32xf32>
    %110 = arith.addf %109, %108 : vector<8x32xf32>
    %111 = arith.divf %109, %110 : vector<8x32xf32>
    %112 = vector.extract_strided_slice %80 {offsets = [0, 32], sizes = [8, 32], strides = [1, 1]} : vector<8x128xf32> to vector<8x32xf32>
    %113 = arith.negf %112 : vector<8x32xf32>
    %114 = math.exp %113 : vector<8x32xf32>
    %cst_35 = arith.constant 1.000000e+00 : f32
    %115 = vector.broadcast %cst_35 : f32 to vector<8x32xf32>
    %116 = arith.addf %115, %114 : vector<8x32xf32>
    %117 = arith.divf %115, %116 : vector<8x32xf32>
    %118 = vector.extract_strided_slice %80 {offsets = [0, 64], sizes = [8, 32], strides = [1, 1]} : vector<8x128xf32> to vector<8x32xf32>
    %119 = math.tanh %118 : vector<8x32xf32>
    %120 = vector.extract_strided_slice %80 {offsets = [0, 96], sizes = [8, 32], strides = [1, 1]} : vector<8x128xf32> to vector<8x32xf32>
    %121 = arith.negf %120 : vector<8x32xf32>
    %122 = math.exp %121 : vector<8x32xf32>
    %cst_36 = arith.constant 1.000000e+00 : f32
    %123 = vector.broadcast %cst_36 : f32 to vector<8x32xf32>
    %124 = arith.addf %123, %122 : vector<8x32xf32>
    %125 = arith.divf %123, %124 : vector<8x32xf32>
    %126 = arith.mulf %117, %70 : vector<8x32xf32>
    %127 = arith.mulf %111, %119 : vector<8x32xf32>
    %128 = arith.addf %126, %127 : vector<8x32xf32>
    %129 = math.tanh %128 : vector<8x32xf32>
    %130 = arith.mulf %125, %129 : vector<8x32xf32>
    %131 = tpu.concatenate %105, %130 in 1 : vector<8x32xf32>, vector<8x32xf32> -> vector<8x64xf32>
    %cst_37 = arith.constant dense<0.000000e+00> : vector<8x256xf32>
    %132 = tpu.matmul %131, %12, %cst_37 {dimension_numbers = #tpu.dot_dimension_numbers<[1], [0], [0], [1], [0, 0, 1, 1], [], []>} : vector<8x64xf32>, vector<64x256xf32>, vector<8x256xf32> -> vector<8x256xf32>
    %c16 = arith.constant 16 : index
    %c0_38 = arith.constant 0 : index
    %133 = vector.load %arg16[%c16, %c0_38] : memref<64x256xf32, #tpu.memory_space<vmem>>, vector<8x128xf32>
    %134 = vector.extract_strided_slice %132 {offsets = [0, 0], sizes = [8, 128], strides = [1, 1]} : vector<8x256xf32> to vector<8x128xf32>
    %135 = arith.addf %133, %134 : vector<8x128xf32>
    %c40 = arith.constant 40 : index
    %c128_39 = arith.constant 128 : index
    %136 = vector.load %arg16[%c40, %c128_39] : memref<64x256xf32, #tpu.memory_space<vmem>>, vector<8x128xf32>
    %137 = vector.extract_strided_slice %132 {offsets = [0, 128], sizes = [8, 128], strides = [1, 1]} : vector<8x256xf32> to vector<8x128xf32>
    %138 = arith.addf %136, %137 : vector<8x128xf32>
    %139 = vector.extract_strided_slice %135 {offsets = [0, 0], sizes = [8, 32], strides = [1, 1]} : vector<8x128xf32> to vector<8x32xf32>
    %140 = arith.negf %139 : vector<8x32xf32>
    %141 = math.exp %140 : vector<8x32xf32>
    %cst_40 = arith.constant 1.000000e+00 : f32
    %142 = vector.broadcast %cst_40 : f32 to vector<8x32xf32>
    %143 = arith.addf %142, %141 : vector<8x32xf32>
    %144 = arith.divf %142, %143 : vector<8x32xf32>
    %145 = vector.extract_strided_slice %135 {offsets = [0, 32], sizes = [8, 32], strides = [1, 1]} : vector<8x128xf32> to vector<8x32xf32>
    %146 = arith.negf %145 : vector<8x32xf32>
    %147 = math.exp %146 : vector<8x32xf32>
    %cst_41 = arith.constant 1.000000e+00 : f32
    %148 = vector.broadcast %cst_41 : f32 to vector<8x32xf32>
    %149 = arith.addf %148, %147 : vector<8x32xf32>
    %150 = arith.divf %148, %149 : vector<8x32xf32>
    %151 = vector.extract_strided_slice %135 {offsets = [0, 64], sizes = [8, 32], strides = [1, 1]} : vector<8x128xf32> to vector<8x32xf32>
    %152 = math.tanh %151 : vector<8x32xf32>
    %153 = vector.extract_strided_slice %135 {offsets = [0, 96], sizes = [8, 32], strides = [1, 1]} : vector<8x128xf32> to vector<8x32xf32>
    %154 = arith.negf %153 : vector<8x32xf32>
    %155 = math.exp %154 : vector<8x32xf32>
    %cst_42 = arith.constant 1.000000e+00 : f32
    %156 = vector.broadcast %cst_42 : f32 to vector<8x32xf32>
    %157 = arith.addf %156, %155 : vector<8x32xf32>
    %158 = arith.divf %156, %157 : vector<8x32xf32>
    %159 = arith.mulf %150, %103 : vector<8x32xf32>
    %160 = arith.mulf %144, %152 : vector<8x32xf32>
    %161 = arith.addf %159, %160 : vector<8x32xf32>
    %162 = math.tanh %161 : vector<8x32xf32>
    %163 = arith.mulf %158, %162 : vector<8x32xf32>
    %164 = vector.extract_strided_slice %138 {offsets = [0, 0], sizes = [8, 32], strides = [1, 1]} : vector<8x128xf32> to vector<8x32xf32>
    %165 = arith.negf %164 : vector<8x32xf32>
    %166 = math.exp %165 : vector<8x32xf32>
    %cst_43 = arith.constant 1.000000e+00 : f32
    %167 = vector.broadcast %cst_43 : f32 to vector<8x32xf32>
    %168 = arith.addf %167, %166 : vector<8x32xf32>
    %169 = arith.divf %167, %168 : vector<8x32xf32>
    %170 = vector.extract_strided_slice %138 {offsets = [0, 32], sizes = [8, 32], strides = [1, 1]} : vector<8x128xf32> to vector<8x32xf32>
    %171 = arith.negf %170 : vector<8x32xf32>
    %172 = math.exp %171 : vector<8x32xf32>
    %cst_44 = arith.constant 1.000000e+00 : f32
    %173 = vector.broadcast %cst_44 : f32 to vector<8x32xf32>
    %174 = arith.addf %173, %172 : vector<8x32xf32>
    %175 = arith.divf %173, %174 : vector<8x32xf32>
    %176 = vector.extract_strided_slice %138 {offsets = [0, 64], sizes = [8, 32], strides = [1, 1]} : vector<8x128xf32> to vector<8x32xf32>
    %177 = math.tanh %176 : vector<8x32xf32>
    %178 = vector.extract_strided_slice %138 {offsets = [0, 96], sizes = [8, 32], strides = [1, 1]} : vector<8x128xf32> to vector<8x32xf32>
    %179 = arith.negf %178 : vector<8x32xf32>
    %180 = math.exp %179 : vector<8x32xf32>
    %cst_45 = arith.constant 1.000000e+00 : f32
    %181 = vector.broadcast %cst_45 : f32 to vector<8x32xf32>
    %182 = arith.addf %181, %180 : vector<8x32xf32>
    %183 = arith.divf %181, %182 : vector<8x32xf32>
    %184 = arith.mulf %175, %128 : vector<8x32xf32>
    %185 = arith.mulf %169, %177 : vector<8x32xf32>
    %186 = arith.addf %184, %185 : vector<8x32xf32>
    %187 = math.tanh %186 : vector<8x32xf32>
    %188 = arith.mulf %183, %187 : vector<8x32xf32>
    %189 = tpu.concatenate %163, %188 in 1 : vector<8x32xf32>, vector<8x32xf32> -> vector<8x64xf32>
    %cst_46 = arith.constant dense<0.000000e+00> : vector<8x256xf32>
    %190 = tpu.matmul %189, %12, %cst_46 {dimension_numbers = #tpu.dot_dimension_numbers<[1], [0], [0], [1], [0, 0, 1, 1], [], []>} : vector<8x64xf32>, vector<64x256xf32>, vector<8x256xf32> -> vector<8x256xf32>
    %c24 = arith.constant 24 : index
    %c0_47 = arith.constant 0 : index
    %191 = vector.load %arg16[%c24, %c0_47] : memref<64x256xf32, #tpu.memory_space<vmem>>, vector<8x128xf32>
    %192 = vector.extract_strided_slice %190 {offsets = [0, 0], sizes = [8, 128], strides = [1, 1]} : vector<8x256xf32> to vector<8x128xf32>
    %193 = arith.addf %191, %192 : vector<8x128xf32>
    %c32 = arith.constant 32 : index
    %c128_48 = arith.constant 128 : index
    %194 = vector.load %arg16[%c32, %c128_48] : memref<64x256xf32, #tpu.memory_space<vmem>>, vector<8x128xf32>
    %195 = vector.extract_strided_slice %190 {offsets = [0, 128], sizes = [8, 128], strides = [1, 1]} : vector<8x256xf32> to vector<8x128xf32>
    %196 = arith.addf %194, %195 : vector<8x128xf32>
    %197 = vector.extract_strided_slice %193 {offsets = [0, 0], sizes = [8, 32], strides = [1, 1]} : vector<8x128xf32> to vector<8x32xf32>
    %198 = arith.negf %197 : vector<8x32xf32>
    %199 = math.exp %198 : vector<8x32xf32>
    %cst_49 = arith.constant 1.000000e+00 : f32
    %200 = vector.broadcast %cst_49 : f32 to vector<8x32xf32>
    %201 = arith.addf %200, %199 : vector<8x32xf32>
    %202 = arith.divf %200, %201 : vector<8x32xf32>
    %203 = vector.extract_strided_slice %193 {offsets = [0, 32], sizes = [8, 32], strides = [1, 1]} : vector<8x128xf32> to vector<8x32xf32>
    %204 = arith.negf %203 : vector<8x32xf32>
    %205 = math.exp %204 : vector<8x32xf32>
    %cst_50 = arith.constant 1.000000e+00 : f32
    %206 = vector.broadcast %cst_50 : f32 to vector<8x32xf32>
    %207 = arith.addf %206, %205 : vector<8x32xf32>
    %208 = arith.divf %206, %207 : vector<8x32xf32>
    %209 = vector.extract_strided_slice %193 {offsets = [0, 64], sizes = [8, 32], strides = [1, 1]} : vector<8x128xf32> to vector<8x32xf32>
    %210 = math.tanh %209 : vector<8x32xf32>
    %211 = vector.extract_strided_slice %193 {offsets = [0, 96], sizes = [8, 32], strides = [1, 1]} : vector<8x128xf32> to vector<8x32xf32>
    %212 = arith.negf %211 : vector<8x32xf32>
    %213 = math.exp %212 : vector<8x32xf32>
    %cst_51 = arith.constant 1.000000e+00 : f32
    %214 = vector.broadcast %cst_51 : f32 to vector<8x32xf32>
    %215 = arith.addf %214, %213 : vector<8x32xf32>
    %216 = arith.divf %214, %215 : vector<8x32xf32>
    %217 = arith.mulf %208, %161 : vector<8x32xf32>
    %218 = arith.mulf %202, %210 : vector<8x32xf32>
    %219 = arith.addf %217, %218 : vector<8x32xf32>
    %220 = math.tanh %219 : vector<8x32xf32>
    %221 = arith.mulf %216, %220 : vector<8x32xf32>
    %222 = vector.extract_strided_slice %196 {offsets = [0, 0], sizes = [8, 32], strides = [1, 1]} : vector<8x128xf32> to vector<8x32xf32>
    %223 = arith.negf %222 : vector<8x32xf32>
    %224 = math.exp %223 : vector<8x32xf32>
    %cst_52 = arith.constant 1.000000e+00 : f32
    %225 = vector.broadcast %cst_52 : f32 to vector<8x32xf32>
    %226 = arith.addf %225, %224 : vector<8x32xf32>
    %227 = arith.divf %225, %226 : vector<8x32xf32>
    %228 = vector.extract_strided_slice %196 {offsets = [0, 32], sizes = [8, 32], strides = [1, 1]} : vector<8x128xf32> to vector<8x32xf32>
    %229 = arith.negf %228 : vector<8x32xf32>
    %230 = math.exp %229 : vector<8x32xf32>
    %cst_53 = arith.constant 1.000000e+00 : f32
    %231 = vector.broadcast %cst_53 : f32 to vector<8x32xf32>
    %232 = arith.addf %231, %230 : vector<8x32xf32>
    %233 = arith.divf %231, %232 : vector<8x32xf32>
    %234 = vector.extract_strided_slice %196 {offsets = [0, 64], sizes = [8, 32], strides = [1, 1]} : vector<8x128xf32> to vector<8x32xf32>
    %235 = math.tanh %234 : vector<8x32xf32>
    %236 = vector.extract_strided_slice %196 {offsets = [0, 96], sizes = [8, 32], strides = [1, 1]} : vector<8x128xf32> to vector<8x32xf32>
    %237 = arith.negf %236 : vector<8x32xf32>
    %238 = math.exp %237 : vector<8x32xf32>
    %cst_54 = arith.constant 1.000000e+00 : f32
    %239 = vector.broadcast %cst_54 : f32 to vector<8x32xf32>
    %240 = arith.addf %239, %238 : vector<8x32xf32>
    %241 = arith.divf %239, %240 : vector<8x32xf32>
    %242 = arith.mulf %233, %186 : vector<8x32xf32>
    %243 = arith.mulf %227, %235 : vector<8x32xf32>
    %244 = arith.addf %242, %243 : vector<8x32xf32>
    %245 = math.tanh %244 : vector<8x32xf32>
    %246 = arith.mulf %241, %245 : vector<8x32xf32>
    %247 = tpu.concatenate %221, %246 in 1 : vector<8x32xf32>, vector<8x32xf32> -> vector<8x64xf32>
    %cst_55 = arith.constant dense<0.000000e+00> : vector<8x256xf32>
    %248 = tpu.matmul %247, %12, %cst_55 {dimension_numbers = #tpu.dot_dimension_numbers<[1], [0], [0], [1], [0, 0, 1, 1], [], []>} : vector<8x64xf32>, vector<64x256xf32>, vector<8x256xf32> -> vector<8x256xf32>
    %c32_56 = arith.constant 32 : index
    %c0_57 = arith.constant 0 : index
    %249 = vector.load %arg16[%c32_56, %c0_57] : memref<64x256xf32, #tpu.memory_space<vmem>>, vector<8x128xf32>
    %250 = vector.extract_strided_slice %248 {offsets = [0, 0], sizes = [8, 128], strides = [1, 1]} : vector<8x256xf32> to vector<8x128xf32>
    %251 = arith.addf %249, %250 : vector<8x128xf32>
    %c24_58 = arith.constant 24 : index
    %c128_59 = arith.constant 128 : index
    %252 = vector.load %arg16[%c24_58, %c128_59] : memref<64x256xf32, #tpu.memory_space<vmem>>, vector<8x128xf32>
    %253 = vector.extract_strided_slice %248 {offsets = [0, 128], sizes = [8, 128], strides = [1, 1]} : vector<8x256xf32> to vector<8x128xf32>
    %254 = arith.addf %252, %253 : vector<8x128xf32>
    %255 = vector.extract_strided_slice %251 {offsets = [0, 0], sizes = [8, 32], strides = [1, 1]} : vector<8x128xf32> to vector<8x32xf32>
    %256 = arith.negf %255 : vector<8x32xf32>
    %257 = math.exp %256 : vector<8x32xf32>
    %cst_60 = arith.constant 1.000000e+00 : f32
    %258 = vector.broadcast %cst_60 : f32 to vector<8x32xf32>
    %259 = arith.addf %258, %257 : vector<8x32xf32>
    %260 = arith.divf %258, %259 : vector<8x32xf32>
    %261 = vector.extract_strided_slice %251 {offsets = [0, 32], sizes = [8, 32], strides = [1, 1]} : vector<8x128xf32> to vector<8x32xf32>
    %262 = arith.negf %261 : vector<8x32xf32>
    %263 = math.exp %262 : vector<8x32xf32>
    %cst_61 = arith.constant 1.000000e+00 : f32
    %264 = vector.broadcast %cst_61 : f32 to vector<8x32xf32>
    %265 = arith.addf %264, %263 : vector<8x32xf32>
    %266 = arith.divf %264, %265 : vector<8x32xf32>
    %267 = vector.extract_strided_slice %251 {offsets = [0, 64], sizes = [8, 32], strides = [1, 1]} : vector<8x128xf32> to vector<8x32xf32>
    %268 = math.tanh %267 : vector<8x32xf32>
    %269 = vector.extract_strided_slice %251 {offsets = [0, 96], sizes = [8, 32], strides = [1, 1]} : vector<8x128xf32> to vector<8x32xf32>
    %270 = arith.negf %269 : vector<8x32xf32>
    %271 = math.exp %270 : vector<8x32xf32>
    %cst_62 = arith.constant 1.000000e+00 : f32
    %272 = vector.broadcast %cst_62 : f32 to vector<8x32xf32>
    %273 = arith.addf %272, %271 : vector<8x32xf32>
    %274 = arith.divf %272, %273 : vector<8x32xf32>
    %275 = arith.mulf %266, %219 : vector<8x32xf32>
    %276 = arith.mulf %260, %268 : vector<8x32xf32>
    %277 = arith.addf %275, %276 : vector<8x32xf32>
    %278 = math.tanh %277 : vector<8x32xf32>
    %279 = arith.mulf %274, %278 : vector<8x32xf32>
    %280 = vector.extract_strided_slice %254 {offsets = [0, 0], sizes = [8, 32], strides = [1, 1]} : vector<8x128xf32> to vector<8x32xf32>
    %281 = arith.negf %280 : vector<8x32xf32>
    %282 = math.exp %281 : vector<8x32xf32>
    %cst_63 = arith.constant 1.000000e+00 : f32
    %283 = vector.broadcast %cst_63 : f32 to vector<8x32xf32>
    %284 = arith.addf %283, %282 : vector<8x32xf32>
    %285 = arith.divf %283, %284 : vector<8x32xf32>
    %286 = vector.extract_strided_slice %254 {offsets = [0, 32], sizes = [8, 32], strides = [1, 1]} : vector<8x128xf32> to vector<8x32xf32>
    %287 = arith.negf %286 : vector<8x32xf32>
    %288 = math.exp %287 : vector<8x32xf32>
    %cst_64 = arith.constant 1.000000e+00 : f32
    %289 = vector.broadcast %cst_64 : f32 to vector<8x32xf32>
    %290 = arith.addf %289, %288 : vector<8x32xf32>
    %291 = arith.divf %289, %290 : vector<8x32xf32>
    %292 = vector.extract_strided_slice %254 {offsets = [0, 64], sizes = [8, 32], strides = [1, 1]} : vector<8x128xf32> to vector<8x32xf32>
    %293 = math.tanh %292 : vector<8x32xf32>
    %294 = vector.extract_strided_slice %254 {offsets = [0, 96], sizes = [8, 32], strides = [1, 1]} : vector<8x128xf32> to vector<8x32xf32>
    %295 = arith.negf %294 : vector<8x32xf32>
    %296 = math.exp %295 : vector<8x32xf32>
    %cst_65 = arith.constant 1.000000e+00 : f32
    %297 = vector.broadcast %cst_65 : f32 to vector<8x32xf32>
    %298 = arith.addf %297, %296 : vector<8x32xf32>
    %299 = arith.divf %297, %298 : vector<8x32xf32>
    %300 = arith.mulf %291, %244 : vector<8x32xf32>
    %301 = arith.mulf %285, %293 : vector<8x32xf32>
    %302 = arith.addf %300, %301 : vector<8x32xf32>
    %303 = math.tanh %302 : vector<8x32xf32>
    %304 = arith.mulf %299, %303 : vector<8x32xf32>
    %305 = tpu.concatenate %279, %304 in 1 : vector<8x32xf32>, vector<8x32xf32> -> vector<8x64xf32>
    %cst_66 = arith.constant dense<0.000000e+00> : vector<8x256xf32>
    %306 = tpu.matmul %305, %12, %cst_66 {dimension_numbers = #tpu.dot_dimension_numbers<[1], [0], [0], [1], [0, 0, 1, 1], [], []>} : vector<8x64xf32>, vector<64x256xf32>, vector<8x256xf32> -> vector<8x256xf32>
    %c40_67 = arith.constant 40 : index
    %c0_68 = arith.constant 0 : index
    %307 = vector.load %arg16[%c40_67, %c0_68] : memref<64x256xf32, #tpu.memory_space<vmem>>, vector<8x128xf32>
    %308 = vector.extract_strided_slice %306 {offsets = [0, 0], sizes = [8, 128], strides = [1, 1]} : vector<8x256xf32> to vector<8x128xf32>
    %309 = arith.addf %307, %308 : vector<8x128xf32>
    %c16_69 = arith.constant 16 : index
    %c128_70 = arith.constant 128 : index
    %310 = vector.load %arg16[%c16_69, %c128_70] : memref<64x256xf32, #tpu.memory_space<vmem>>, vector<8x128xf32>
    %311 = vector.extract_strided_slice %306 {offsets = [0, 128], sizes = [8, 128], strides = [1, 1]} : vector<8x256xf32> to vector<8x128xf32>
    %312 = arith.addf %310, %311 : vector<8x128xf32>
    %313 = vector.extract_strided_slice %309 {offsets = [0, 0], sizes = [8, 32], strides = [1, 1]} : vector<8x128xf32> to vector<8x32xf32>
    %314 = arith.negf %313 : vector<8x32xf32>
    %315 = math.exp %314 : vector<8x32xf32>
    %cst_71 = arith.constant 1.000000e+00 : f32
    %316 = vector.broadcast %cst_71 : f32 to vector<8x32xf32>
    %317 = arith.addf %316, %315 : vector<8x32xf32>
    %318 = arith.divf %316, %317 : vector<8x32xf32>
    %319 = vector.extract_strided_slice %309 {offsets = [0, 32], sizes = [8, 32], strides = [1, 1]} : vector<8x128xf32> to vector<8x32xf32>
    %320 = arith.negf %319 : vector<8x32xf32>
    %321 = math.exp %320 : vector<8x32xf32>
    %cst_72 = arith.constant 1.000000e+00 : f32
    %322 = vector.broadcast %cst_72 : f32 to vector<8x32xf32>
    %323 = arith.addf %322, %321 : vector<8x32xf32>
    %324 = arith.divf %322, %323 : vector<8x32xf32>
    %325 = vector.extract_strided_slice %309 {offsets = [0, 64], sizes = [8, 32], strides = [1, 1]} : vector<8x128xf32> to vector<8x32xf32>
    %326 = math.tanh %325 : vector<8x32xf32>
    %327 = vector.extract_strided_slice %309 {offsets = [0, 96], sizes = [8, 32], strides = [1, 1]} : vector<8x128xf32> to vector<8x32xf32>
    %328 = arith.negf %327 : vector<8x32xf32>
    %329 = math.exp %328 : vector<8x32xf32>
    %cst_73 = arith.constant 1.000000e+00 : f32
    %330 = vector.broadcast %cst_73 : f32 to vector<8x32xf32>
    %331 = arith.addf %330, %329 : vector<8x32xf32>
    %332 = arith.divf %330, %331 : vector<8x32xf32>
    %333 = arith.mulf %324, %277 : vector<8x32xf32>
    %334 = arith.mulf %318, %326 : vector<8x32xf32>
    %335 = arith.addf %333, %334 : vector<8x32xf32>
    %336 = math.tanh %335 : vector<8x32xf32>
    %337 = arith.mulf %332, %336 : vector<8x32xf32>
    %338 = vector.extract_strided_slice %312 {offsets = [0, 0], sizes = [8, 32], strides = [1, 1]} : vector<8x128xf32> to vector<8x32xf32>
    %339 = arith.negf %338 : vector<8x32xf32>
    %340 = math.exp %339 : vector<8x32xf32>
    %cst_74 = arith.constant 1.000000e+00 : f32
    %341 = vector.broadcast %cst_74 : f32 to vector<8x32xf32>
    %342 = arith.addf %341, %340 : vector<8x32xf32>
    %343 = arith.divf %341, %342 : vector<8x32xf32>
    %344 = vector.extract_strided_slice %312 {offsets = [0, 32], sizes = [8, 32], strides = [1, 1]} : vector<8x128xf32> to vector<8x32xf32>
    %345 = arith.negf %344 : vector<8x32xf32>
    %346 = math.exp %345 : vector<8x32xf32>
    %cst_75 = arith.constant 1.000000e+00 : f32
    %347 = vector.broadcast %cst_75 : f32 to vector<8x32xf32>
    %348 = arith.addf %347, %346 : vector<8x32xf32>
    %349 = arith.divf %347, %348 : vector<8x32xf32>
    %350 = vector.extract_strided_slice %312 {offsets = [0, 64], sizes = [8, 32], strides = [1, 1]} : vector<8x128xf32> to vector<8x32xf32>
    %351 = math.tanh %350 : vector<8x32xf32>
    %352 = vector.extract_strided_slice %312 {offsets = [0, 96], sizes = [8, 32], strides = [1, 1]} : vector<8x128xf32> to vector<8x32xf32>
    %353 = arith.negf %352 : vector<8x32xf32>
    %354 = math.exp %353 : vector<8x32xf32>
    %cst_76 = arith.constant 1.000000e+00 : f32
    %355 = vector.broadcast %cst_76 : f32 to vector<8x32xf32>
    %356 = arith.addf %355, %354 : vector<8x32xf32>
    %357 = arith.divf %355, %356 : vector<8x32xf32>
    %358 = arith.mulf %349, %302 : vector<8x32xf32>
    %359 = arith.mulf %343, %351 : vector<8x32xf32>
    %360 = arith.addf %358, %359 : vector<8x32xf32>
    %361 = math.tanh %360 : vector<8x32xf32>
    %362 = arith.mulf %357, %361 : vector<8x32xf32>
    %363 = tpu.concatenate %337, %362 in 1 : vector<8x32xf32>, vector<8x32xf32> -> vector<8x64xf32>
    %cst_77 = arith.constant dense<0.000000e+00> : vector<8x256xf32>
    %364 = tpu.matmul %363, %12, %cst_77 {dimension_numbers = #tpu.dot_dimension_numbers<[1], [0], [0], [1], [0, 0, 1, 1], [], []>} : vector<8x64xf32>, vector<64x256xf32>, vector<8x256xf32> -> vector<8x256xf32>
    %c48_78 = arith.constant 48 : index
    %c0_79 = arith.constant 0 : index
    %365 = vector.load %arg16[%c48_78, %c0_79] : memref<64x256xf32, #tpu.memory_space<vmem>>, vector<8x128xf32>
    %366 = vector.extract_strided_slice %364 {offsets = [0, 0], sizes = [8, 128], strides = [1, 1]} : vector<8x256xf32> to vector<8x128xf32>
    %367 = arith.addf %365, %366 : vector<8x128xf32>
    %c8_80 = arith.constant 8 : index
    %c128_81 = arith.constant 128 : index
    %368 = vector.load %arg16[%c8_80, %c128_81] : memref<64x256xf32, #tpu.memory_space<vmem>>, vector<8x128xf32>
    %369 = vector.extract_strided_slice %364 {offsets = [0, 128], sizes = [8, 128], strides = [1, 1]} : vector<8x256xf32> to vector<8x128xf32>
    %370 = arith.addf %368, %369 : vector<8x128xf32>
    %371 = vector.extract_strided_slice %367 {offsets = [0, 0], sizes = [8, 32], strides = [1, 1]} : vector<8x128xf32> to vector<8x32xf32>
    %372 = arith.negf %371 : vector<8x32xf32>
    %373 = math.exp %372 : vector<8x32xf32>
    %cst_82 = arith.constant 1.000000e+00 : f32
    %374 = vector.broadcast %cst_82 : f32 to vector<8x32xf32>
    %375 = arith.addf %374, %373 : vector<8x32xf32>
    %376 = arith.divf %374, %375 : vector<8x32xf32>
    %377 = vector.extract_strided_slice %367 {offsets = [0, 32], sizes = [8, 32], strides = [1, 1]} : vector<8x128xf32> to vector<8x32xf32>
    %378 = arith.negf %377 : vector<8x32xf32>
    %379 = math.exp %378 : vector<8x32xf32>
    %cst_83 = arith.constant 1.000000e+00 : f32
    %380 = vector.broadcast %cst_83 : f32 to vector<8x32xf32>
    %381 = arith.addf %380, %379 : vector<8x32xf32>
    %382 = arith.divf %380, %381 : vector<8x32xf32>
    %383 = vector.extract_strided_slice %367 {offsets = [0, 64], sizes = [8, 32], strides = [1, 1]} : vector<8x128xf32> to vector<8x32xf32>
    %384 = math.tanh %383 : vector<8x32xf32>
    %385 = vector.extract_strided_slice %367 {offsets = [0, 96], sizes = [8, 32], strides = [1, 1]} : vector<8x128xf32> to vector<8x32xf32>
    %386 = arith.negf %385 : vector<8x32xf32>
    %387 = math.exp %386 : vector<8x32xf32>
    %cst_84 = arith.constant 1.000000e+00 : f32
    %388 = vector.broadcast %cst_84 : f32 to vector<8x32xf32>
    %389 = arith.addf %388, %387 : vector<8x32xf32>
    %390 = arith.divf %388, %389 : vector<8x32xf32>
    %391 = arith.mulf %382, %335 : vector<8x32xf32>
    %392 = arith.mulf %376, %384 : vector<8x32xf32>
    %393 = arith.addf %391, %392 : vector<8x32xf32>
    %394 = math.tanh %393 : vector<8x32xf32>
    %395 = arith.mulf %390, %394 : vector<8x32xf32>
    %396 = vector.extract_strided_slice %370 {offsets = [0, 0], sizes = [8, 32], strides = [1, 1]} : vector<8x128xf32> to vector<8x32xf32>
    %397 = arith.negf %396 : vector<8x32xf32>
    %398 = math.exp %397 : vector<8x32xf32>
    %cst_85 = arith.constant 1.000000e+00 : f32
    %399 = vector.broadcast %cst_85 : f32 to vector<8x32xf32>
    %400 = arith.addf %399, %398 : vector<8x32xf32>
    %401 = arith.divf %399, %400 : vector<8x32xf32>
    %402 = vector.extract_strided_slice %370 {offsets = [0, 32], sizes = [8, 32], strides = [1, 1]} : vector<8x128xf32> to vector<8x32xf32>
    %403 = arith.negf %402 : vector<8x32xf32>
    %404 = math.exp %403 : vector<8x32xf32>
    %cst_86 = arith.constant 1.000000e+00 : f32
    %405 = vector.broadcast %cst_86 : f32 to vector<8x32xf32>
    %406 = arith.addf %405, %404 : vector<8x32xf32>
    %407 = arith.divf %405, %406 : vector<8x32xf32>
    %408 = vector.extract_strided_slice %370 {offsets = [0, 64], sizes = [8, 32], strides = [1, 1]} : vector<8x128xf32> to vector<8x32xf32>
    %409 = math.tanh %408 : vector<8x32xf32>
    %410 = vector.extract_strided_slice %370 {offsets = [0, 96], sizes = [8, 32], strides = [1, 1]} : vector<8x128xf32> to vector<8x32xf32>
    %411 = arith.negf %410 : vector<8x32xf32>
    %412 = math.exp %411 : vector<8x32xf32>
    %cst_87 = arith.constant 1.000000e+00 : f32
    %413 = vector.broadcast %cst_87 : f32 to vector<8x32xf32>
    %414 = arith.addf %413, %412 : vector<8x32xf32>
    %415 = arith.divf %413, %414 : vector<8x32xf32>
    %416 = arith.mulf %407, %360 : vector<8x32xf32>
    %417 = arith.mulf %401, %409 : vector<8x32xf32>
    %418 = arith.addf %416, %417 : vector<8x32xf32>
    %419 = math.tanh %418 : vector<8x32xf32>
    %420 = arith.mulf %415, %419 : vector<8x32xf32>
    %421 = tpu.concatenate %395, %420 in 1 : vector<8x32xf32>, vector<8x32xf32> -> vector<8x64xf32>
    %cst_88 = arith.constant dense<0.000000e+00> : vector<8x256xf32>
    %422 = tpu.matmul %421, %12, %cst_88 {dimension_numbers = #tpu.dot_dimension_numbers<[1], [0], [0], [1], [0, 0, 1, 1], [], []>} : vector<8x64xf32>, vector<64x256xf32>, vector<8x256xf32> -> vector<8x256xf32>
    %c56_89 = arith.constant 56 : index
    %c0_90 = arith.constant 0 : index
    %423 = vector.load %arg16[%c56_89, %c0_90] : memref<64x256xf32, #tpu.memory_space<vmem>>, vector<8x128xf32>
    %424 = vector.extract_strided_slice %422 {offsets = [0, 0], sizes = [8, 128], strides = [1, 1]} : vector<8x256xf32> to vector<8x128xf32>
    %425 = arith.addf %423, %424 : vector<8x128xf32>
    %c0_91 = arith.constant 0 : index
    %c128_92 = arith.constant 128 : index
    %426 = vector.load %arg16[%c0_91, %c128_92] : memref<64x256xf32, #tpu.memory_space<vmem>>, vector<8x128xf32>
    %427 = vector.extract_strided_slice %422 {offsets = [0, 128], sizes = [8, 128], strides = [1, 1]} : vector<8x256xf32> to vector<8x128xf32>
    %428 = arith.addf %426, %427 : vector<8x128xf32>
    %429 = vector.extract_strided_slice %425 {offsets = [0, 0], sizes = [8, 32], strides = [1, 1]} : vector<8x128xf32> to vector<8x32xf32>
    %430 = arith.negf %429 : vector<8x32xf32>
    %431 = math.exp %430 : vector<8x32xf32>
    %cst_93 = arith.constant 1.000000e+00 : f32
    %432 = vector.broadcast %cst_93 : f32 to vector<8x32xf32>
    %433 = arith.addf %432, %431 : vector<8x32xf32>
    %434 = arith.divf %432, %433 : vector<8x32xf32>
    %435 = vector.extract_strided_slice %425 {offsets = [0, 32], sizes = [8, 32], strides = [1, 1]} : vector<8x128xf32> to vector<8x32xf32>
    %436 = arith.negf %435 : vector<8x32xf32>
    %437 = math.exp %436 : vector<8x32xf32>
    %cst_94 = arith.constant 1.000000e+00 : f32
    %438 = vector.broadcast %cst_94 : f32 to vector<8x32xf32>
    %439 = arith.addf %438, %437 : vector<8x32xf32>
    %440 = arith.divf %438, %439 : vector<8x32xf32>
    %441 = vector.extract_strided_slice %425 {offsets = [0, 64], sizes = [8, 32], strides = [1, 1]} : vector<8x128xf32> to vector<8x32xf32>
    %442 = math.tanh %441 : vector<8x32xf32>
    %443 = vector.extract_strided_slice %425 {offsets = [0, 96], sizes = [8, 32], strides = [1, 1]} : vector<8x128xf32> to vector<8x32xf32>
    %444 = arith.negf %443 : vector<8x32xf32>
    %445 = math.exp %444 : vector<8x32xf32>
    %cst_95 = arith.constant 1.000000e+00 : f32
    %446 = vector.broadcast %cst_95 : f32 to vector<8x32xf32>
    %447 = arith.addf %446, %445 : vector<8x32xf32>
    %448 = arith.divf %446, %447 : vector<8x32xf32>
    %449 = arith.mulf %440, %393 : vector<8x32xf32>
    %450 = arith.mulf %434, %442 : vector<8x32xf32>
    %451 = arith.addf %449, %450 : vector<8x32xf32>
    %452 = math.tanh %451 : vector<8x32xf32>
    %453 = arith.mulf %448, %452 : vector<8x32xf32>
    %454 = vector.extract_strided_slice %428 {offsets = [0, 0], sizes = [8, 32], strides = [1, 1]} : vector<8x128xf32> to vector<8x32xf32>
    %455 = arith.negf %454 : vector<8x32xf32>
    %456 = math.exp %455 : vector<8x32xf32>
    %cst_96 = arith.constant 1.000000e+00 : f32
    %457 = vector.broadcast %cst_96 : f32 to vector<8x32xf32>
    %458 = arith.addf %457, %456 : vector<8x32xf32>
    %459 = arith.divf %457, %458 : vector<8x32xf32>
    %460 = vector.extract_strided_slice %428 {offsets = [0, 32], sizes = [8, 32], strides = [1, 1]} : vector<8x128xf32> to vector<8x32xf32>
    %461 = arith.negf %460 : vector<8x32xf32>
    %462 = math.exp %461 : vector<8x32xf32>
    %cst_97 = arith.constant 1.000000e+00 : f32
    %463 = vector.broadcast %cst_97 : f32 to vector<8x32xf32>
    %464 = arith.addf %463, %462 : vector<8x32xf32>
    %465 = arith.divf %463, %464 : vector<8x32xf32>
    %466 = vector.extract_strided_slice %428 {offsets = [0, 64], sizes = [8, 32], strides = [1, 1]} : vector<8x128xf32> to vector<8x32xf32>
    %467 = math.tanh %466 : vector<8x32xf32>
    %468 = vector.extract_strided_slice %428 {offsets = [0, 96], sizes = [8, 32], strides = [1, 1]} : vector<8x128xf32> to vector<8x32xf32>
    %469 = arith.negf %468 : vector<8x32xf32>
    %470 = math.exp %469 : vector<8x32xf32>
    %cst_98 = arith.constant 1.000000e+00 : f32
    %471 = vector.broadcast %cst_98 : f32 to vector<8x32xf32>
    %472 = arith.addf %471, %470 : vector<8x32xf32>
    %473 = arith.divf %471, %472 : vector<8x32xf32>
    %474 = arith.mulf %465, %418 : vector<8x32xf32>
    %475 = arith.mulf %459, %467 : vector<8x32xf32>
    %476 = arith.addf %474, %475 : vector<8x32xf32>
    %477 = math.tanh %476 : vector<8x32xf32>
    %478 = arith.mulf %473, %477 : vector<8x32xf32>
    %479 = tpu.concatenate %453, %478 in 1 : vector<8x32xf32>, vector<8x32xf32> -> vector<8x64xf32>
    %480 = tpu.iota {dimensions = array<i32: 0>} : vector<4x64xi32>
    %c0_99 = arith.constant 0 : index
    %c0_100 = arith.constant 0 : index
    %481 = vector.load %arg2[%c0_99, %c0_100] : memref<1x64xf32, #tpu.memory_space<vmem>>, vector<1x64xf32>
    %482 = vector.shape_cast %481 : vector<1x64xf32> to vector<1x64xf32>
    %483 = vector.broadcast %482 : vector<1x64xf32> to vector<4x64xf32>
    %c3_i32 = arith.constant 3 : i32
    %484 = vector.broadcast %c3_i32 : i32 to vector<4x64xi32>
    %485 = arith.cmpi slt, %480, %484 : vector<4x64xi32>
    %486 = vector.extract_strided_slice %479 {offsets = [0, 0], sizes = [4, 64], strides = [1, 1]} : vector<8x64xf32> to vector<4x64xf32>
    %487 = arith.select %485, %486, %483 : vector<4x64xi1>, vector<4x64xf32>
    %c0_101 = arith.constant 0 : index
    %c0_102 = arith.constant 0 : index
    %488 = vector.load %arg8[%c0_101, %c0_102] : memref<64x256xf32, #tpu.memory_space<vmem>>, vector<64x256xf32>
    %cst_103 = arith.constant dense<0.000000e+00> : vector<4x256xf32>
    %489 = tpu.matmul %487, %488, %cst_103 {dimension_numbers = #tpu.dot_dimension_numbers<[1], [0], [0], [1], [0, 0, 1, 1], [], []>} : vector<4x64xf32>, vector<64x256xf32>, vector<4x256xf32> -> vector<4x256xf32>
    %c0_104 = arith.constant 0 : index
    %c0_105 = arith.constant 0 : index
    %490 = vector.load %arg10[%c0_104, %c0_105] : memref<1x256xf32, #tpu.memory_space<vmem>>, vector<1x256xf32>
    %491 = vector.broadcast %490 : vector<1x256xf32> to vector<4x256xf32>
    %492 = arith.addf %489, %491 : vector<4x256xf32>
    %c0_106 = arith.constant 0 : index
    %c0_107 = arith.constant 0 : index
    %493 = vector.load %arg17[%c0_106, %c0_107] : memref<4x256xf32, #tpu.memory_space<vmem>>, vector<4x256xf32>
    tpu.vector_store %arg17[%c0_106, %c0_107], %492 {strides = array<i32>} : memref<4x256xf32, #tpu.memory_space<vmem>>, vector<4x256xf32>,
    %c0_108 = arith.constant 0 : index
    %c0_109 = arith.constant 0 : index
    %494 = vector.load %arg9[%c0_108, %c0_109] : memref<64x256xf32, #tpu.memory_space<vmem>>, vector<64x256xf32>
    %cst_110 = arith.constant 0.000000e+00 : f32
    %495 = vector.broadcast %cst_110 : f32 to vector<1x64xf32>
    %cst_111 = arith.constant 0.000000e+00 : f32
    %496 = vector.broadcast %cst_111 : f32 to vector<1x32xf32>
    %cst_112 = arith.constant 0.000000e+00 : f32
    %497 = vector.broadcast %cst_112 : f32 to vector<1x32xf32>
    %cst_113 = arith.constant dense<0.000000e+00> : vector<1x256xf32>
    %498 = tpu.matmul %495, %494, %cst_113 {dimension_numbers = #tpu.dot_dimension_numbers<[1], [0], [0], [1], [0, 0, 1, 1], [], []>} : vector<1x64xf32>, vector<64x256xf32>, vector<1x256xf32> -> vector<1x256xf32>
    %c0_114 = arith.constant 0 : index
    %c0_115 = arith.constant 0 : index
    %499 = vector.load %arg17[%c0_114, %c0_115] : memref<4x256xf32, #tpu.memory_space<vmem>>, vector<1x128xf32>
    %500 = vector.extract_strided_slice %498 {offsets = [0, 0], sizes = [1, 128], strides = [1, 1]} : vector<1x256xf32> to vector<1x128xf32>
    %501 = arith.addf %499, %500 : vector<1x128xf32>
    %c3 = arith.constant 3 : index
    %c128_116 = arith.constant 128 : index
    %502 = vector.load %arg17[%c3, %c128_116] : memref<4x256xf32, #tpu.memory_space<vmem>>, vector<1x128xf32>
    %503 = vector.extract_strided_slice %498 {offsets = [0, 128], sizes = [1, 128], strides = [1, 1]} : vector<1x256xf32> to vector<1x128xf32>
    %504 = arith.addf %502, %503 : vector<1x128xf32>
    %505 = vector.extract_strided_slice %501 {offsets = [0, 0], sizes = [1, 32], strides = [1, 1]} : vector<1x128xf32> to vector<1x32xf32>
    %506 = arith.negf %505 : vector<1x32xf32>
    %507 = math.exp %506 : vector<1x32xf32>
    %cst_117 = arith.constant 1.000000e+00 : f32
    %508 = vector.broadcast %cst_117 : f32 to vector<1x32xf32>
    %509 = arith.addf %508, %507 : vector<1x32xf32>
    %510 = arith.divf %508, %509 : vector<1x32xf32>
    %511 = vector.extract_strided_slice %501 {offsets = [0, 32], sizes = [1, 32], strides = [1, 1]} : vector<1x128xf32> to vector<1x32xf32>
    %512 = arith.negf %511 : vector<1x32xf32>
    %513 = math.exp %512 : vector<1x32xf32>
    %cst_118 = arith.constant 1.000000e+00 : f32
    %514 = vector.broadcast %cst_118 : f32 to vector<1x32xf32>
    %515 = arith.addf %514, %513 : vector<1x32xf32>
    %516 = arith.divf %514, %515 : vector<1x32xf32>
    %517 = vector.extract_strided_slice %501 {offsets = [0, 64], sizes = [1, 32], strides = [1, 1]} : vector<1x128xf32> to vector<1x32xf32>
    %518 = math.tanh %517 : vector<1x32xf32>
    %519 = vector.extract_strided_slice %501 {offsets = [0, 96], sizes = [1, 32], strides = [1, 1]} : vector<1x128xf32> to vector<1x32xf32>
    %520 = arith.negf %519 : vector<1x32xf32>
    %521 = math.exp %520 : vector<1x32xf32>
    %cst_119 = arith.constant 1.000000e+00 : f32
    %522 = vector.broadcast %cst_119 : f32 to vector<1x32xf32>
    %523 = arith.addf %522, %521 : vector<1x32xf32>
    %524 = arith.divf %522, %523 : vector<1x32xf32>
    %525 = arith.mulf %516, %496 : vector<1x32xf32>
    %526 = arith.mulf %510, %518 : vector<1x32xf32>
    %527 = arith.addf %525, %526 : vector<1x32xf32>
    %528 = math.tanh %527 : vector<1x32xf32>
    %529 = arith.mulf %524, %528 : vector<1x32xf32>
    %530 = vector.extract_strided_slice %504 {offsets = [0, 0], sizes = [1, 32], strides = [1, 1]} : vector<1x128xf32> to vector<1x32xf32>
    %531 = arith.negf %530 : vector<1x32xf32>
    %532 = math.exp %531 : vector<1x32xf32>
    %cst_120 = arith.constant 1.000000e+00 : f32
    %533 = vector.broadcast %cst_120 : f32 to vector<1x32xf32>
    %534 = arith.addf %533, %532 : vector<1x32xf32>
    %535 = arith.divf %533, %534 : vector<1x32xf32>
    %536 = vector.extract_strided_slice %504 {offsets = [0, 32], sizes = [1, 32], strides = [1, 1]} : vector<1x128xf32> to vector<1x32xf32>
    %537 = arith.negf %536 : vector<1x32xf32>
    %538 = math.exp %537 : vector<1x32xf32>
    %cst_121 = arith.constant 1.000000e+00 : f32
    %539 = vector.broadcast %cst_121 : f32 to vector<1x32xf32>
    %540 = arith.addf %539, %538 : vector<1x32xf32>
    %541 = arith.divf %539, %540 : vector<1x32xf32>
    %542 = vector.extract_strided_slice %504 {offsets = [0, 64], sizes = [1, 32], strides = [1, 1]} : vector<1x128xf32> to vector<1x32xf32>
    %543 = math.tanh %542 : vector<1x32xf32>
    %544 = vector.extract_strided_slice %504 {offsets = [0, 96], sizes = [1, 32], strides = [1, 1]} : vector<1x128xf32> to vector<1x32xf32>
    %545 = arith.negf %544 : vector<1x32xf32>
    %546 = math.exp %545 : vector<1x32xf32>
    %cst_122 = arith.constant 1.000000e+00 : f32
    %547 = vector.broadcast %cst_122 : f32 to vector<1x32xf32>
    %548 = arith.addf %547, %546 : vector<1x32xf32>
    %549 = arith.divf %547, %548 : vector<1x32xf32>
    %550 = arith.mulf %541, %497 : vector<1x32xf32>
    %551 = arith.mulf %535, %543 : vector<1x32xf32>
    %552 = arith.addf %550, %551 : vector<1x32xf32>
    %553 = math.tanh %552 : vector<1x32xf32>
    %554 = arith.mulf %549, %553 : vector<1x32xf32>
    %555 = tpu.concatenate %529, %554 in 1 : vector<1x32xf32>, vector<1x32xf32> -> vector<1x64xf32>
    %cst_123 = arith.constant dense<0.000000e+00> : vector<1x256xf32>
    %556 = tpu.matmul %555, %494, %cst_123 {dimension_numbers = #tpu.dot_dimension_numbers<[1], [0], [0], [1], [0, 0, 1, 1], [], []>} : vector<1x64xf32>, vector<64x256xf32>, vector<1x256xf32> -> vector<1x256xf32>
    %c1 = arith.constant 1 : index
    %c0_124 = arith.constant 0 : index
    %557 = vector.load %arg17[%c1, %c0_124] : memref<4x256xf32, #tpu.memory_space<vmem>>, vector<1x128xf32>
    %558 = vector.extract_strided_slice %556 {offsets = [0, 0], sizes = [1, 128], strides = [1, 1]} : vector<1x256xf32> to vector<1x128xf32>
    %559 = arith.addf %557, %558 : vector<1x128xf32>
    %c2 = arith.constant 2 : index
    %c128_125 = arith.constant 128 : index
    %560 = vector.load %arg17[%c2, %c128_125] : memref<4x256xf32, #tpu.memory_space<vmem>>, vector<1x128xf32>
    %561 = vector.extract_strided_slice %556 {offsets = [0, 128], sizes = [1, 128], strides = [1, 1]} : vector<1x256xf32> to vector<1x128xf32>
    %562 = arith.addf %560, %561 : vector<1x128xf32>
    %563 = vector.extract_strided_slice %559 {offsets = [0, 0], sizes = [1, 32], strides = [1, 1]} : vector<1x128xf32> to vector<1x32xf32>
    %564 = arith.negf %563 : vector<1x32xf32>
    %565 = math.exp %564 : vector<1x32xf32>
    %cst_126 = arith.constant 1.000000e+00 : f32
    %566 = vector.broadcast %cst_126 : f32 to vector<1x32xf32>
    %567 = arith.addf %566, %565 : vector<1x32xf32>
    %568 = arith.divf %566, %567 : vector<1x32xf32>
    %569 = vector.extract_strided_slice %559 {offsets = [0, 32], sizes = [1, 32], strides = [1, 1]} : vector<1x128xf32> to vector<1x32xf32>
    %570 = arith.negf %569 : vector<1x32xf32>
    %571 = math.exp %570 : vector<1x32xf32>
    %cst_127 = arith.constant 1.000000e+00 : f32
    %572 = vector.broadcast %cst_127 : f32 to vector<1x32xf32>
    %573 = arith.addf %572, %571 : vector<1x32xf32>
    %574 = arith.divf %572, %573 : vector<1x32xf32>
    %575 = vector.extract_strided_slice %559 {offsets = [0, 64], sizes = [1, 32], strides = [1, 1]} : vector<1x128xf32> to vector<1x32xf32>
    %576 = math.tanh %575 : vector<1x32xf32>
    %577 = vector.extract_strided_slice %559 {offsets = [0, 96], sizes = [1, 32], strides = [1, 1]} : vector<1x128xf32> to vector<1x32xf32>
    %578 = arith.negf %577 : vector<1x32xf32>
    %579 = math.exp %578 : vector<1x32xf32>
    %cst_128 = arith.constant 1.000000e+00 : f32
    %580 = vector.broadcast %cst_128 : f32 to vector<1x32xf32>
    %581 = arith.addf %580, %579 : vector<1x32xf32>
    %582 = arith.divf %580, %581 : vector<1x32xf32>
    %583 = arith.mulf %574, %527 : vector<1x32xf32>
    %584 = arith.mulf %568, %576 : vector<1x32xf32>
    %585 = arith.addf %583, %584 : vector<1x32xf32>
    %586 = math.tanh %585 : vector<1x32xf32>
    %587 = arith.mulf %582, %586 : vector<1x32xf32>
    %588 = vector.extract_strided_slice %562 {offsets = [0, 0], sizes = [1, 32], strides = [1, 1]} : vector<1x128xf32> to vector<1x32xf32>
    %589 = arith.negf %588 : vector<1x32xf32>
    %590 = math.exp %589 : vector<1x32xf32>
    %cst_129 = arith.constant 1.000000e+00 : f32
    %591 = vector.broadcast %cst_129 : f32 to vector<1x32xf32>
    %592 = arith.addf %591, %590 : vector<1x32xf32>
    %593 = arith.divf %591, %592 : vector<1x32xf32>
    %594 = vector.extract_strided_slice %562 {offsets = [0, 32], sizes = [1, 32], strides = [1, 1]} : vector<1x128xf32> to vector<1x32xf32>
    %595 = arith.negf %594 : vector<1x32xf32>
    %596 = math.exp %595 : vector<1x32xf32>
    %cst_130 = arith.constant 1.000000e+00 : f32
    %597 = vector.broadcast %cst_130 : f32 to vector<1x32xf32>
    %598 = arith.addf %597, %596 : vector<1x32xf32>
    %599 = arith.divf %597, %598 : vector<1x32xf32>
    %600 = vector.extract_strided_slice %562 {offsets = [0, 64], sizes = [1, 32], strides = [1, 1]} : vector<1x128xf32> to vector<1x32xf32>
    %601 = math.tanh %600 : vector<1x32xf32>
    %602 = vector.extract_strided_slice %562 {offsets = [0, 96], sizes = [1, 32], strides = [1, 1]} : vector<1x128xf32> to vector<1x32xf32>
    %603 = arith.negf %602 : vector<1x32xf32>
    %604 = math.exp %603 : vector<1x32xf32>
    %cst_131 = arith.constant 1.000000e+00 : f32
    %605 = vector.broadcast %cst_131 : f32 to vector<1x32xf32>
    %606 = arith.addf %605, %604 : vector<1x32xf32>
    %607 = arith.divf %605, %606 : vector<1x32xf32>
    %608 = arith.mulf %599, %552 : vector<1x32xf32>
    %609 = arith.mulf %593, %601 : vector<1x32xf32>
    %610 = arith.addf %608, %609 : vector<1x32xf32>
    %611 = math.tanh %610 : vector<1x32xf32>
    %612 = arith.mulf %607, %611 : vector<1x32xf32>
    %613 = tpu.concatenate %587, %612 in 1 : vector<1x32xf32>, vector<1x32xf32> -> vector<1x64xf32>
    %cst_132 = arith.constant dense<0.000000e+00> : vector<1x256xf32>
    %614 = tpu.matmul %613, %494, %cst_132 {dimension_numbers = #tpu.dot_dimension_numbers<[1], [0], [0], [1], [0, 0, 1, 1], [], []>} : vector<1x64xf32>, vector<64x256xf32>, vector<1x256xf32> -> vector<1x256xf32>
    %c2_133 = arith.constant 2 : index
    %c0_134 = arith.constant 0 : index
    %615 = vector.load %arg17[%c2_133, %c0_134] : memref<4x256xf32, #tpu.memory_space<vmem>>, vector<1x128xf32>
    %616 = vector.extract_strided_slice %614 {offsets = [0, 0], sizes = [1, 128], strides = [1, 1]} : vector<1x256xf32> to vector<1x128xf32>
    %617 = arith.addf %615, %616 : vector<1x128xf32>
    %c1_135 = arith.constant 1 : index
    %c128_136 = arith.constant 128 : index
    %618 = vector.load %arg17[%c1_135, %c128_136] : memref<4x256xf32, #tpu.memory_space<vmem>>, vector<1x128xf32>
    %619 = vector.extract_strided_slice %614 {offsets = [0, 128], sizes = [1, 128], strides = [1, 1]} : vector<1x256xf32> to vector<1x128xf32>
    %620 = arith.addf %618, %619 : vector<1x128xf32>
    %621 = vector.extract_strided_slice %617 {offsets = [0, 0], sizes = [1, 32], strides = [1, 1]} : vector<1x128xf32> to vector<1x32xf32>
    %622 = arith.negf %621 : vector<1x32xf32>
    %623 = math.exp %622 : vector<1x32xf32>
    %cst_137 = arith.constant 1.000000e+00 : f32
    %624 = vector.broadcast %cst_137 : f32 to vector<1x32xf32>
    %625 = arith.addf %624, %623 : vector<1x32xf32>
    %626 = arith.divf %624, %625 : vector<1x32xf32>
    %627 = vector.extract_strided_slice %617 {offsets = [0, 32], sizes = [1, 32], strides = [1, 1]} : vector<1x128xf32> to vector<1x32xf32>
    %628 = arith.negf %627 : vector<1x32xf32>
    %629 = math.exp %628 : vector<1x32xf32>
    %cst_138 = arith.constant 1.000000e+00 : f32
    %630 = vector.broadcast %cst_138 : f32 to vector<1x32xf32>
    %631 = arith.addf %630, %629 : vector<1x32xf32>
    %632 = arith.divf %630, %631 : vector<1x32xf32>
    %633 = vector.extract_strided_slice %617 {offsets = [0, 64], sizes = [1, 32], strides = [1, 1]} : vector<1x128xf32> to vector<1x32xf32>
    %634 = math.tanh %633 : vector<1x32xf32>
    %635 = vector.extract_strided_slice %617 {offsets = [0, 96], sizes = [1, 32], strides = [1, 1]} : vector<1x128xf32> to vector<1x32xf32>
    %636 = arith.negf %635 : vector<1x32xf32>
    %637 = math.exp %636 : vector<1x32xf32>
    %cst_139 = arith.constant 1.000000e+00 : f32
    %638 = vector.broadcast %cst_139 : f32 to vector<1x32xf32>
    %639 = arith.addf %638, %637 : vector<1x32xf32>
    %640 = arith.divf %638, %639 : vector<1x32xf32>
    %641 = arith.mulf %632, %585 : vector<1x32xf32>
    %642 = arith.mulf %626, %634 : vector<1x32xf32>
    %643 = arith.addf %641, %642 : vector<1x32xf32>
    %644 = math.tanh %643 : vector<1x32xf32>
    %645 = arith.mulf %640, %644 : vector<1x32xf32>
    %646 = vector.extract_strided_slice %620 {offsets = [0, 0], sizes = [1, 32], strides = [1, 1]} : vector<1x128xf32> to vector<1x32xf32>
    %647 = arith.negf %646 : vector<1x32xf32>
    %648 = math.exp %647 : vector<1x32xf32>
    %cst_140 = arith.constant 1.000000e+00 : f32
    %649 = vector.broadcast %cst_140 : f32 to vector<1x32xf32>
    %650 = arith.addf %649, %648 : vector<1x32xf32>
    %651 = arith.divf %649, %650 : vector<1x32xf32>
    %652 = vector.extract_strided_slice %620 {offsets = [0, 32], sizes = [1, 32], strides = [1, 1]} : vector<1x128xf32> to vector<1x32xf32>
    %653 = arith.negf %652 : vector<1x32xf32>
    %654 = math.exp %653 : vector<1x32xf32>
    %cst_141 = arith.constant 1.000000e+00 : f32
    %655 = vector.broadcast %cst_141 : f32 to vector<1x32xf32>
    %656 = arith.addf %655, %654 : vector<1x32xf32>
    %657 = arith.divf %655, %656 : vector<1x32xf32>
    %658 = vector.extract_strided_slice %620 {offsets = [0, 64], sizes = [1, 32], strides = [1, 1]} : vector<1x128xf32> to vector<1x32xf32>
    %659 = math.tanh %658 : vector<1x32xf32>
    %660 = vector.extract_strided_slice %620 {offsets = [0, 96], sizes = [1, 32], strides = [1, 1]} : vector<1x128xf32> to vector<1x32xf32>
    %661 = arith.negf %660 : vector<1x32xf32>
    %662 = math.exp %661 : vector<1x32xf32>
    %cst_142 = arith.constant 1.000000e+00 : f32
    %663 = vector.broadcast %cst_142 : f32 to vector<1x32xf32>
    %664 = arith.addf %663, %662 : vector<1x32xf32>
    %665 = arith.divf %663, %664 : vector<1x32xf32>
    %666 = arith.mulf %657, %610 : vector<1x32xf32>
    %667 = arith.mulf %651, %659 : vector<1x32xf32>
    %668 = arith.addf %666, %667 : vector<1x32xf32>
    %669 = math.tanh %668 : vector<1x32xf32>
    %670 = arith.mulf %665, %669 : vector<1x32xf32>
    %671 = tpu.concatenate %645, %670 in 1 : vector<1x32xf32>, vector<1x32xf32> -> vector<1x64xf32>
    %cst_143 = arith.constant dense<0.000000e+00> : vector<1x256xf32>
    %672 = tpu.matmul %671, %494, %cst_143 {dimension_numbers = #tpu.dot_dimension_numbers<[1], [0], [0], [1], [0, 0, 1, 1], [], []>} : vector<1x64xf32>, vector<64x256xf32>, vector<1x256xf32> -> vector<1x256xf32>
    %c3_144 = arith.constant 3 : index
    %c0_145 = arith.constant 0 : index
    %673 = vector.load %arg17[%c3_144, %c0_145] : memref<4x256xf32, #tpu.memory_space<vmem>>, vector<1x128xf32>
    %674 = vector.extract_strided_slice %672 {offsets = [0, 0], sizes = [1, 128], strides = [1, 1]} : vector<1x256xf32> to vector<1x128xf32>
    %675 = arith.addf %673, %674 : vector<1x128xf32>
    %c0_146 = arith.constant 0 : index
    %c128_147 = arith.constant 128 : index
    %676 = vector.load %arg17[%c0_146, %c128_147] : memref<4x256xf32, #tpu.memory_space<vmem>>, vector<1x128xf32>
    %677 = vector.extract_strided_slice %672 {offsets = [0, 128], sizes = [1, 128], strides = [1, 1]} : vector<1x256xf32> to vector<1x128xf32>
    %678 = arith.addf %676, %677 : vector<1x128xf32>
    %679 = vector.extract_strided_slice %675 {offsets = [0, 0], sizes = [1, 32], strides = [1, 1]} : vector<1x128xf32> to vector<1x32xf32>
    %680 = arith.negf %679 : vector<1x32xf32>
    %681 = math.exp %680 : vector<1x32xf32>
    %cst_148 = arith.constant 1.000000e+00 : f32
    %682 = vector.broadcast %cst_148 : f32 to vector<1x32xf32>
    %683 = arith.addf %682, %681 : vector<1x32xf32>
    %684 = arith.divf %682, %683 : vector<1x32xf32>
    %685 = vector.extract_strided_slice %675 {offsets = [0, 32], sizes = [1, 32], strides = [1, 1]} : vector<1x128xf32> to vector<1x32xf32>
    %686 = arith.negf %685 : vector<1x32xf32>
    %687 = math.exp %686 : vector<1x32xf32>
    %cst_149 = arith.constant 1.000000e+00 : f32
    %688 = vector.broadcast %cst_149 : f32 to vector<1x32xf32>
    %689 = arith.addf %688, %687 : vector<1x32xf32>
    %690 = arith.divf %688, %689 : vector<1x32xf32>
    %691 = vector.extract_strided_slice %675 {offsets = [0, 64], sizes = [1, 32], strides = [1, 1]} : vector<1x128xf32> to vector<1x32xf32>
    %692 = math.tanh %691 : vector<1x32xf32>
    %693 = vector.extract_strided_slice %675 {offsets = [0, 96], sizes = [1, 32], strides = [1, 1]} : vector<1x128xf32> to vector<1x32xf32>
    %694 = arith.negf %693 : vector<1x32xf32>
    %695 = math.exp %694 : vector<1x32xf32>
    %cst_150 = arith.constant 1.000000e+00 : f32
    %696 = vector.broadcast %cst_150 : f32 to vector<1x32xf32>
    %697 = arith.addf %696, %695 : vector<1x32xf32>
    %698 = arith.divf %696, %697 : vector<1x32xf32>
    %699 = arith.mulf %690, %643 : vector<1x32xf32>
    %700 = arith.mulf %684, %692 : vector<1x32xf32>
    %701 = arith.addf %699, %700 : vector<1x32xf32>
    %702 = math.tanh %701 : vector<1x32xf32>
    %703 = arith.mulf %698, %702 : vector<1x32xf32>
    %704 = vector.extract_strided_slice %678 {offsets = [0, 0], sizes = [1, 32], strides = [1, 1]} : vector<1x128xf32> to vector<1x32xf32>
    %705 = arith.negf %704 : vector<1x32xf32>
    %706 = math.exp %705 : vector<1x32xf32>
    %cst_151 = arith.constant 1.000000e+00 : f32
    %707 = vector.broadcast %cst_151 : f32 to vector<1x32xf32>
    %708 = arith.addf %707, %706 : vector<1x32xf32>
    %709 = arith.divf %707, %708 : vector<1x32xf32>
    %710 = vector.extract_strided_slice %678 {offsets = [0, 32], sizes = [1, 32], strides = [1, 1]} : vector<1x128xf32> to vector<1x32xf32>
    %711 = arith.negf %710 : vector<1x32xf32>
    %712 = math.exp %711 : vector<1x32xf32>
    %cst_152 = arith.constant 1.000000e+00 : f32
    %713 = vector.broadcast %cst_152 : f32 to vector<1x32xf32>
    %714 = arith.addf %713, %712 : vector<1x32xf32>
    %715 = arith.divf %713, %714 : vector<1x32xf32>
    %716 = vector.extract_strided_slice %678 {offsets = [0, 64], sizes = [1, 32], strides = [1, 1]} : vector<1x128xf32> to vector<1x32xf32>
    %717 = math.tanh %716 : vector<1x32xf32>
    %718 = vector.extract_strided_slice %678 {offsets = [0, 96], sizes = [1, 32], strides = [1, 1]} : vector<1x128xf32> to vector<1x32xf32>
    %719 = arith.negf %718 : vector<1x32xf32>
    %720 = math.exp %719 : vector<1x32xf32>
    %cst_153 = arith.constant 1.000000e+00 : f32
    %721 = vector.broadcast %cst_153 : f32 to vector<1x32xf32>
    %722 = arith.addf %721, %720 : vector<1x32xf32>
    %723 = arith.divf %721, %722 : vector<1x32xf32>
    %724 = arith.mulf %715, %668 : vector<1x32xf32>
    %725 = arith.mulf %709, %717 : vector<1x32xf32>
    %726 = arith.addf %724, %725 : vector<1x32xf32>
    %727 = math.tanh %726 : vector<1x32xf32>
    %728 = arith.mulf %723, %727 : vector<1x32xf32>
    %729 = tpu.concatenate %703, %728 in 1 : vector<1x32xf32>, vector<1x32xf32> -> vector<1x64xf32>
    %730 = arith.mulf %4, %729 : vector<1x64xf32>
    %731 = arith.subf %4, %729 : vector<1x64xf32>
    %732 = math.absf %731 : vector<1x64xf32>
    %733 = tpu.concatenate %730, %732, %4, %729 in 1 : vector<1x64xf32>, vector<1x64xf32>, vector<1x64xf32>, vector<1x64xf32> -> vector<1x256xf32>
    %c0_154 = arith.constant 0 : index
    %c0_155 = arith.constant 0 : index
    %734 = vector.load %arg11[%c0_154, %c0_155] : memref<256x32xf32, #tpu.memory_space<vmem>>, vector<256x32xf32>
    %cst_156 = arith.constant dense<0.000000e+00> : vector<1x32xf32>
    %735 = tpu.matmul %733, %734, %cst_156 {dimension_numbers = #tpu.dot_dimension_numbers<[1], [0], [0], [1], [0, 0, 1, 1], [], []>} : vector<1x256xf32>, vector<256x32xf32>, vector<1x32xf32> -> vector<1x32xf32>
    %c0_157 = arith.constant 0 : index
    %c0_158 = arith.constant 0 : index
    %736 = vector.load %arg12[%c0_157, %c0_158] : memref<1x32xf32, #tpu.memory_space<vmem>>, vector<1x32xf32>
    %737 = arith.addf %735, %736 : vector<1x32xf32>
    %738 = arith.negf %737 : vector<1x32xf32>
    %739 = math.exp %738 : vector<1x32xf32>
    %cst_159 = arith.constant 1.000000e+00 : f32
    %740 = vector.broadcast %cst_159 : f32 to vector<1x32xf32>
    %741 = arith.addf %740, %739 : vector<1x32xf32>
    %742 = arith.divf %740, %741 : vector<1x32xf32>
    %c0_160 = arith.constant 0 : index
    %c0_161 = arith.constant 0 : index
    %743 = vector.load %arg13[%c0_160, %c0_161] : memref<32x2xf32, #tpu.memory_space<vmem>>, vector<32x2xf32>
    %cst_162 = arith.constant dense<0.000000e+00> : vector<1x2xf32>
    %744 = tpu.matmul %742, %743, %cst_162 {dimension_numbers = #tpu.dot_dimension_numbers<[1], [0], [0], [1], [0, 0, 1, 1], [], []>} : vector<1x32xf32>, vector<32x2xf32>, vector<1x2xf32> -> vector<1x2xf32>
    %c0_163 = arith.constant 0 : index
    %c0_164 = arith.constant 0 : index
    %745 = vector.load %arg14[%c0_163, %c0_164] : memref<1x2xf32, #tpu.memory_space<vmem>>, vector<1x2xf32>
    %746 = arith.addf %744, %745 : vector<1x2xf32>
    %c0_165 = arith.constant 0 : index
    %c0_166 = arith.constant 0 : index
    %747 = vector.load %arg15[%c0_165, %c0_166] : memref<1x2xf32, #tpu.memory_space<vmem>>, vector<1x2xf32>
    tpu.vector_store %arg15[%c0_165, %c0_166], %746 {strides = array<i32>} : memref<1x2xf32, #tpu.memory_space<vmem>>, vector<1x2xf32>,
    return
  }
}

</mosaic_0001>

<llo_original>
// kernel: tpu_custom_call.1
$region0: #{tpu_custom_call.1}
  #allocation0 [shape = 'u32[]', space=smem, size = 0x4, offset = 0x4, fixed_abs, tag = 'smem constant byte address 0x4 - core index']
  #allocation1 [shape = 'u32[144,128]{1,0:T(1,128)}', space=vmem, size = 0x12000, scoped, tag = 'internal scratch']
  #allocation2 [shape = 'f32[64,256]{1,0:T(8,128)}', space=vmem, size = 0x10000, scoped, tag = 'scratch operand']
  #allocation3 [shape = 'f32[4,256]{1,0:T(4,128)}', space=vmem, size = 0x1000, scoped, tag = 'scratch operand']
  %s0 = inlined_call_operand.hbm [shape: f32[1,64], index: 0, kind: input, shape index: {}]
  %s1 = inlined_call_operand.hbm [shape: f32[64,64], index: 1, kind: input, shape index: {}]
  %s2 = inlined_call_operand.hbm [shape: f32[1,64], index: 2, kind: input, shape index: {}]
  %s3 = inlined_call_operand.hbm [shape: f32[64,64], index: 3, kind: input, shape index: {}]
  %s4 = inlined_call_operand.hbm [shape: f32[1,64], index: 4, kind: input, shape index: {}]
  %s5 = inlined_call_operand.vmem [shape: f32[64,256], index: 5, kind: input, shape index: {}]
  %s6 = inlined_call_operand.vmem [shape: f32[64,256], index: 6, kind: input, shape index: {}]
  %s7 = inlined_call_operand.hbm [shape: f32[1,256], index: 7, kind: input, shape index: {}]
  %s8 = inlined_call_operand.vmem [shape: f32[64,256], index: 8, kind: input, shape index: {}]
  %s9 = inlined_call_operand.hbm [shape: f32[64,256], index: 9, kind: input, shape index: {}]
  %s10 = inlined_call_operand.vmem [shape: f32[1,256], index: 10, kind: input, shape index: {}]
  %s11 = inlined_call_operand.vmem [shape: f32[256,32], index: 11, kind: input, shape index: {}]
  %s12 = inlined_call_operand.vmem [shape: f32[1,32], index: 12, kind: input, shape index: {}]
  %s13 = inlined_call_operand.vmem [shape: f32[32,2], index: 13, kind: input, shape index: {}]
  %s14 = inlined_call_operand.vmem [shape: f32[1,2], index: 14, kind: input, shape index: {}]
  %s15 = inlined_call_operand.hbm [shape: f32[1,2], index: 15, kind: output, shape index: {}]
  %s16 = sld [smem:[#allocation0]]
  $region98: #{tpu_custom_call.1} parent=0
    _
  %s18 = ssub.s32 1, %s16
  %s19 = scalar_select 0, %s18, %s16
  $region1: #{tpu_custom_call.1} parent=0
    #allocation4 [shape = 'u8[512]{0}', space=vmem, size = 0x400, scoped, tag = 'input window, operand 0, single buffered']
    #allocation5 [shape = 's32[1]{0}', space=sflag, size = 0x4, scoped, tag = 'scoped memory for tpu_custom_call.1']
    #allocation6 [shape = 's32[1]{0}', space=sflag, size = 0x4, scoped, tag = 'scoped memory for tpu_custom_call.1']
    #allocation7 [shape = 'u8[32768]{0}', space=vmem, size = 0x8000, scoped, tag = 'input window, operand 1, single buffered']
    #allocation8 [shape = 's32[1]{0}', space=sflag, size = 0x4, scoped, tag = 'scoped memory for tpu_custom_call.1']
    #allocation9 [shape = 'u8[512]{0}', space=vmem, size = 0x400, scoped, tag = 'input window, operand 2, single buffered']
    #allocation10 [shape = 'u8[32768]{0}', space=vmem, size = 0x8000, scoped, tag = 'input window, operand 3, single buffered']
    #allocation11 [shape = 's32[1]{0}', space=sflag, size = 0x4, scoped, tag = 'scoped memory for tpu_custom_call.1']
    #allocation12 [shape = 'u8[512]{0}', space=vmem, size = 0x400, scoped, tag = 'input window, operand 4, single buffered']
    #allocation13 [shape = 'u8[1024]{0}', space=vmem, size = 0x400, scoped, tag = 'input window, operand 7, single buffered']
    #allocation14 [shape = 's32[1]{0}', space=sflag, size = 0x4, scoped, tag = 'scoped memory for tpu_custom_call.1']
    #allocation15 [shape = 'u8[65536]{0}', space=vmem, size = 0x10000, scoped, tag = 'input window, operand 9, single buffered']
    #allocation16 [shape = 'u8[512]{0}', space=vmem, size = 0x400, scoped, tag = 'output window, operand 0, single buffered']
    %20 = vsyncpa [#allocation5], 0
    %21 = vsyncpa [#allocation8], 0
    %22 = vsyncpa [#allocation11], 0
    %23 = vsyncpa [#allocation14], 0
    %24 = vsyncpa [#allocation6], 0
    // Predicated region
    $region2: #{tpu_custom_call.1} parent=1 // pred_check
      _
    $region3: #{tpu_custom_call.1} parent=1 // pred_check_branch
      %26 = sbr.rel (0) target = $region5
    $region4: #{tpu_custom_call.1} parent=1 // pred_region
      %s28 = ssub.s32 16, 16
      %29 = vsyncadd [#allocation5], %s28
      %s31 = sshll.u32 [#allocation4], 4
      %s32 = int_to_ptr.vmem [resolvable:$true] %s31
      %34 = dma.hbm_to_vmem [thread:$0]  %s0, 16, %s32, [#allocation5]
    $region5: #{tpu_custom_call.1} parent=1 // pred_fallthru
      _
    // Predicated region
    $region6: #{tpu_custom_call.1} parent=1 // pred_check
      _
    $region7: #{tpu_custom_call.1} parent=1 // pred_check_branch
      %36 = sbr.rel (0) target = $region9
    $region8: #{tpu_custom_call.1} parent=1 // pred_region
      %s38 = ssub.s32 1024, 1024
      %39 = vsyncadd [#allocation8], %s38
      %s40 = sshll.u32 [#allocation7], 4
      %s41 = int_to_ptr.vmem [resolvable:$true] %s40
      %46 = dma.hbm_to_vmem [thread:$0]  %s1, 1024, %s41, [#allocation8], 128, 128, 8
    $region9: #{tpu_custom_call.1} parent=1 // pred_fallthru
      _
    // Predicated region
    $region10: #{tpu_custom_call.1} parent=1 // pred_check
      _
    $region11: #{tpu_custom_call.1} parent=1 // pred_check_branch
      %48 = sbr.rel (0) target = $region13
    $region12: #{tpu_custom_call.1} parent=1 // pred_region
      %s50 = ssub.s32 16, 16
      %51 = vsyncadd [#allocation8], %s50
      %s53 = sshll.u32 [#allocation9], 4
      %s54 = int_to_ptr.vmem [resolvable:$true] %s53
      %56 = dma.hbm_to_vmem [thread:$0]  %s2, 16, %s54, [#allocation8]
    $region13: #{tpu_custom_call.1} parent=1 // pred_fallthru
      _
    // Predicated region
    $region14: #{tpu_custom_call.1} parent=1 // pred_check
      _
    $region15: #{tpu_custom_call.1} parent=1 // pred_check_branch
      %58 = sbr.rel (0) target = $region17
    $region16: #{tpu_custom_call.1} parent=1 // pred_region
      %s60 = ssub.s32 1024, 1024
      %61 = vsyncadd [#allocation11], %s60
      %s62 = sshll.u32 [#allocation10], 4
      %s63 = int_to_ptr.vmem [resolvable:$true] %s62
      %68 = dma.hbm_to_vmem [thread:$0]  %s3, 1024, %s63, [#allocation11], 128, 128, 8
    $region17: #{tpu_custom_call.1} parent=1 // pred_fallthru
      _
    // Predicated region
    $region18: #{tpu_custom_call.1} parent=1 // pred_check
      _
    $region19: #{tpu_custom_call.1} parent=1 // pred_check_branch
      %70 = sbr.rel (0) target = $region21
    $region20: #{tpu_custom_call.1} parent=1 // pred_region
      %s72 = ssub.s32 16, 16
      %73 = vsyncadd [#allocation11], %s72
      %s75 = sshll.u32 [#allocation12], 4
      %s76 = int_to_ptr.vmem [resolvable:$true] %s75
      %78 = dma.hbm_to_vmem [thread:$0]  %s4, 16, %s76, [#allocation11]
    $region21: #{tpu_custom_call.1} parent=1 // pred_fallthru
      _
    // Predicated region
    $region22: #{tpu_custom_call.1} parent=1 // pred_check
      _
    $region23: #{tpu_custom_call.1} parent=1 // pred_check_branch
      %80 = sbr.rel (0) target = $region25
    $region24: #{tpu_custom_call.1} parent=1 // pred_region
      _
    $region25: #{tpu_custom_call.1} parent=1 // pred_fallthru
      _
    // Predicated region
    $region26: #{tpu_custom_call.1} parent=1 // pred_check
      _
    $region27: #{tpu_custom_call.1} parent=1 // pred_check_branch
      %82 = sbr.rel (0) target = $region29
    $region28: #{tpu_custom_call.1} parent=1 // pred_region
      _
    $region29: #{tpu_custom_call.1} parent=1 // pred_fallthru
      _
    // Predicated region
    $region30: #{tpu_custom_call.1} parent=1 // pred_check
      _
    $region31: #{tpu_custom_call.1} parent=1 // pred_check_branch
      %84 = sbr.rel (0) target = $region33
    $region32: #{tpu_custom_call.1} parent=1 // pred_region
      %s86 = ssub.s32 32, 32
      %87 = vsyncadd [#allocation14], %s86
      %s89 = sshll.u32 [#allocation13], 4
      %s90 = int_to_ptr.vmem [resolvable:$true] %s89
      %92 = dma.hbm_to_vmem [thread:$0]  %s7, 32, %s90, [#allocation14]
    $region33: #{tpu_custom_call.1} parent=1 // pred_fallthru
      _
    // Predicated region
    $region34: #{tpu_custom_call.1} parent=1 // pred_check
      _
    $region35: #{tpu_custom_call.1} parent=1 // pred_check_branch
      %94 = sbr.rel (0) target = $region37
    $region36: #{tpu_custom_call.1} parent=1 // pred_region
      _
    $region37: #{tpu_custom_call.1} parent=1 // pred_fallthru
      _
    // Predicated region
    $region38: #{tpu_custom_call.1} parent=1 // pred_check
      _
    $region39: #{tpu_custom_call.1} parent=1 // pred_check_branch
      %96 = sbr.rel (0) target = $region41
    $region40: #{tpu_custom_call.1} parent=1 // pred_region
      %s98 = ssub.s32 2048, 2048
      %99 = vsyncadd [#allocation14], %s98
      %s100 = sshll.u32 [#allocation15], 4
      %s101 = int_to_ptr.vmem [resolvable:$true] %s100
      %106 = dma.hbm_to_vmem [thread:$0]  %s9, 2048, %s101, [#allocation14], 256, 256, 16
    $region41: #{tpu_custom_call.1} parent=1 // pred_fallthru
      _
    // Predicated region
    $region42: #{tpu_custom_call.1} parent=1 // pred_check
      _
    $region43: #{tpu_custom_call.1} parent=1 // pred_check_branch
      %108 = sbr.rel (0) target = $region45
    $region44: #{tpu_custom_call.1} parent=1 // pred_region
      _
    $region45: #{tpu_custom_call.1} parent=1 // pred_fallthru
      _
    // Predicated region
    $region46: #{tpu_custom_call.1} parent=1 // pred_check
      _
    $region47: #{tpu_custom_call.1} parent=1 // pred_check_branch
      %110 = sbr.rel (0) target = $region49
    $region48: #{tpu_custom_call.1} parent=1 // pred_region
      _
    $region49: #{tpu_custom_call.1} parent=1 // pred_fallthru
      _
    // Predicated region
    $region50: #{tpu_custom_call.1} parent=1 // pred_check
      _
    $region51: #{tpu_custom_call.1} parent=1 // pred_check_branch
      %112 = sbr.rel (0) target = $region53
    $region52: #{tpu_custom_call.1} parent=1 // pred_region
      _
    $region53: #{tpu_custom_call.1} parent=1 // pred_fallthru
      _
    // Predicated region
    $region54: #{tpu_custom_call.1} parent=1 // pred_check
      _
    $region55: #{tpu_custom_call.1} parent=1 // pred_check_branch
      %114 = sbr.rel (0) target = $region57
    $region56: #{tpu_custom_call.1} parent=1 // pred_region
      _
    $region57: #{tpu_custom_call.1} parent=1 // pred_fallthru
      _
    // Predicated region
    $region58: #{tpu_custom_call.1} parent=1 // pred_check
      _
    $region59: #{tpu_custom_call.1} parent=1 // pred_check_branch
      %116 = sbr.rel (0) target = $region61
    $region60: #{tpu_custom_call.1} parent=1 // pred_region
      _
    $region61: #{tpu_custom_call.1} parent=1 // pred_fallthru
      _
    // Predicated region
    $region62: #{tpu_custom_call.1} parent=1 // pred_check
      _
    $region63: #{tpu_custom_call.1} parent=1 // pred_check_branch
      %118 = sbr.rel (0) target = $region65
    $region64: #{tpu_custom_call.1} parent=1 // pred_region
      %119 = dma.done [#allocation5], 16
    $region65: #{tpu_custom_call.1} parent=1 // pred_fallthru
      _
    // Predicated region
    $region66: #{tpu_custom_call.1} parent=1 // pred_check
      _
    $region67: #{tpu_custom_call.1} parent=1 // pred_check_branch
      %121 = sbr.rel (0) target = $region69
    $region68: #{tpu_custom_call.1} parent=1 // pred_region
      %122 = dma.done [#allocation8], 1024
    $region69: #{tpu_custom_call.1} parent=1 // pred_fallthru
      _
    // Predicated region
    $region70: #{tpu_custom_call.1} parent=1 // pred_check
      _
    $region71: #{tpu_custom_call.1} parent=1 // pred_check_branch
      %124 = sbr.rel (0) target = $region73
    $region72: #{tpu_custom_call.1} parent=1 // pred_region
      %125 = dma.done [#allocation8], 16
    $region73: #{tpu_custom_call.1} parent=1 // pred_fallthru
      _
    // Predicated region
    $region74: #{tpu_custom_call.1} parent=1 // pred_check
      _
    $region75: #{tpu_custom_call.1} parent=1 // pred_check_branch
      %127 = sbr.rel (0) target = $region77
    $region76: #{tpu_custom_call.1} parent=1 // pred_region
      %128 = dma.done [#allocation11], 1024
    $region77: #{tpu_custom_call.1} parent=1 // pred_fallthru
      _
    // Predicated region
    $region78: #{tpu_custom_call.1} parent=1 // pred_check
      _
    $region79: #{tpu_custom_call.1} parent=1 // pred_check_branch
      %130 = sbr.rel (0) target = $region81
    $region80: #{tpu_custom_call.1} parent=1 // pred_region
      %131 = dma.done [#allocation11], 16
    $region81: #{tpu_custom_call.1} parent=1 // pred_fallthru
      _
    // Predicated region
    $region82: #{tpu_custom_call.1} parent=1 // pred_check
      _
    $region83: #{tpu_custom_call.1} parent=1 // pred_check_branch
      %133 = sbr.rel (0) target = $region85
    $region84: #{tpu_custom_call.1} parent=1 // pred_region
      %134 = dma.done [#allocation14], 32
    $region85: #{tpu_custom_call.1} parent=1 // pred_fallthru
      _
    // Predicated region
    $region86: #{tpu_custom_call.1} parent=1 // pred_check
      _
    $region87: #{tpu_custom_call.1} parent=1 // pred_check_branch
      %136 = sbr.rel (0) target = $region89
    $region88: #{tpu_custom_call.1} parent=1 // pred_region
      %137 = dma.done [#allocation14], 2048
    $region89: #{tpu_custom_call.1} parent=1 // pred_fallthru
      _
    %v138 = vld [vmem:[#allocation4] sm:$0x1]
    %v139 = vld [vmem:[#allocation10] sm:$0xff]
    %v140 = vld [vmem:[#allocation10 + $0x8] sm:$0xff]
    %v141 = vld [vmem:[#allocation10 + $0x10] sm:$0xff]
    %v142 = vld [vmem:[#allocation10 + $0x18] sm:$0xff]
    %v143 = vld [vmem:[#allocation10 + $0x20] sm:$0xff]
    %v144 = vld [vmem:[#allocation10 + $0x28] sm:$0xff]
    %v145 = vld [vmem:[#allocation10 + $0x30] sm:$0xff]
    %v146 = vld [vmem:[#allocation10 + $0x38] sm:$0xff]
    %v147 = vld [vmem:[#allocation12] sm:$0x1]
    %vm148 = vcmask 523264
    %v150 = vsel %vm148, %v138, 0
    %152 = vmatprep.subr.mxu0 0.0
    %153 = vmatpush1.msra.mxu0 %v139
    %154 = vmatprep.subr.mxu0 0.0
    %155 = vmatpush1.msra.mxu0 %v140
    %156 = vmatprep.subr.mxu0 0.0
    %157 = vmatpush1.msra.mxu0 %v141
    %158 = vmatprep.subr.mxu0 0.0
    %159 = vmatpush1.msra.mxu0 %v142
    %160 = vmatprep.subr.mxu0 0.0
    %161 = vmatpush1.msra.mxu0 %v143
    %162 = vmatprep.subr.mxu0 0.0
    %163 = vmatpush1.msra.mxu0 %v144
    %164 = vmatprep.subr.mxu0 0.0
    %165 = vmatpush1.msra.mxu0 %v145
    %166 = vmatprep.subr.mxu0 0.0
    %167 = vmatpush1.msra.mxu0 %v146
    %168 = vmatprep.subr.mxu0 0.0
    %169 = vmatpush1.msra.mxu0 0.0
    %170 = vmatprep.subr.mxu0 0.0
    %171 = vmatpush1.msra.mxu0 0.0
    %172 = vmatprep.subr.mxu0 0.0
    %173 = vmatpush1.msra.mxu0 0.0
    %174 = vmatprep.subr.mxu0 0.0
    %175 = vmatpush1.msra.mxu0 0.0
    %176 = vmatprep.subr.mxu0 0.0
    %177 = vmatpush1.msra.mxu0 0.0
    %178 = vmatprep.subr.mxu0 0.0
    %179 = vmatpush1.msra.mxu0 0.0
    %180 = vmatprep.subr.mxu0 0.0
    %181 = vmatpush1.msra.mxu0 0.0
    %182 = vmatprep.subr.mxu0 0.0
    %183 = vmatpush1.msra.mxu0 0.0
    %184 = vmatprep.subr.mxu0 0.0
    %185 = vmatpush1.msra.mxu0 0.0
    %186 = vmatprep.subr.mxu0 0.0
    %187 = vmatpush1.msra.mxu0 0.0
    %188 = vmatprep.subr.mxu0 0.0
    %189 = vmatpush1.msra.mxu0 0.0
    %190 = vmatprep.subr.mxu0 0.0
    %191 = vmatpush1.msra.mxu0 0.0
    %192 = vmatprep.subr.mxu0 0.0
    %193 = vmatpush1.msra.mxu0 0.0
    %194 = vmatprep.subr.mxu0 0.0
    %195 = vmatpush1.msra.mxu0 0.0
    %196 = vmatprep.subr.mxu0 0.0
    %197 = vmatpush1.msra.mxu0 0.0
    %198 = vmatprep.subr.mxu0 0.0
    %199 = vmatpush1.msra.mxu0 0.0
    %200 = vmatprep.subr.mxu0 0.0
    %201 = vmatpush1.msra.mxu0 0.0
    %202 = vmatprep.subr.mxu0 0.0
    %203 = vmatpush1.msra.mxu0 0.0
    %204 = vmatprep.subr.mxu0 0.0
    %205 = vmatpush1.msra.mxu0 0.0
    %206 = vmatprep.subr.mxu0 0.0
    %207 = vmatpush1.msra.mxu0 0.0
    %208 = vmatprep.subr.mxu0 0.0
    %209 = vmatpush1.msra.mxu0 0.0
    %210 = vmatprep.subr.mxu0 0.0
    %211 = vmatpush1.msra.mxu0 0.0
    %212 = vmatprep.subr.mxu0 0.0
    %213 = vmatpush1.msra.mxu0 0.0
    %214 = vmatprep.subr.mxu0 0.0
    %215 = vmatpush1.msra.mxu0 0.0
    %216 = vmatprep.mubr.f32.mxu0 0.0
    %217 = vmatmul.mubr.f32.gmra.mrb[0].mxu0 %v150
    %v218 = vpop.f32.mrb[0].mxu0
    %v219 = vadd.f32 %v147, %v218
    %v220 = vpop.f32.mrb[0].mxu0
    %221 = vdwg.mxu0
    %v222 = vld [vmem:[#allocation7] sm:$0xff]
    %v223 = vld [vmem:[#allocation7 + $0x8] sm:$0xff]
    %v224 = vld [vmem:[#allocation7 + $0x10] sm:$0xff]
    %v225 = vld [vmem:[#allocation7 + $0x18] sm:$0xff]
    %v226 = vld [vmem:[#allocation7 + $0x20] sm:$0xff]
    %v227 = vld [vmem:[#allocation7 + $0x28] sm:$0xff]
    %v228 = vld [vmem:[#allocation7 + $0x30] sm:$0xff]
    %v229 = vld [vmem:[#allocation7 + $0x38] sm:$0xff]
    %v230 = vld [vmem:[%s5] sm:$0xff]
    %v231 = vld [vmem:[%s5 + $0x8] sm:$0xff]
    %v232 = vld [vmem:[%s5 + $0x10] sm:$0xff]
    %v233 = vld [vmem:[%s5 + $0x18] sm:$0xff]
    %v234 = vld [vmem:[%s5 + $0x20] sm:$0xff]
    %v235 = vld [vmem:[%s5 + $0x28] sm:$0xff]
    %v236 = vld [vmem:[%s5 + $0x30] sm:$0xff]
    %v237 = vld [vmem:[%s5 + $0x38] sm:$0xff]
    %v238 = vld [vmem:[%s5 + $0x40] sm:$0xff]
    %v239 = vld [vmem:[%s5 + $0x48] sm:$0xff]
    %v240 = vld [vmem:[%s5 + $0x50] sm:$0xff]
    %v241 = vld [vmem:[%s5 + $0x58] sm:$0xff]
    %v242 = vld [vmem:[%s5 + $0x60] sm:$0xff]
    %v243 = vld [vmem:[%s5 + $0x68] sm:$0xff]
    %v244 = vld [vmem:[%s5 + $0x70] sm:$0xff]
    %v245 = vld [vmem:[%s5 + $0x78] sm:$0xff]
    %v246 = vld [vmem:[#allocation13] sm:$0x3]
    %v248 = vlaneseq
    %v249 = vshrl.u32 %v248, 7
    %v250 = vsub.s32 0, %v249
    %v251 = vrot.slane %v246, %v250
    %v252 = vlaneseq
    %v253 = vshrl.u32 %v252, 7
    %v254 = vsub.s32 1, %v253
    %v255 = vrot.slane %v246, %v254
    %v259 = vsel %vm148, %v222, 0
    %v262 = vsel %vm148, %v223, 0
    %v265 = vsel %vm148, %v224, 0
    %v268 = vsel %vm148, %v225, 0
    %v271 = vsel %vm148, %v226, 0
    %v274 = vsel %vm148, %v227, 0
    %v277 = vsel %vm148, %v228, 0
    %v280 = vsel %vm148, %v229, 0
    %282 = vmatprep.subr.mxu0 %v231
    %283 = vmatpush1.msra.mxu0 %v230
    %284 = vmatprep.subr.mxu0 %v233
    %285 = vmatpush1.msra.mxu0 %v232
    %286 = vmatprep.subr.mxu0 %v235
    %287 = vmatpush1.msra.mxu0 %v234
    %288 = vmatprep.subr.mxu0 %v237
    %289 = vmatpush1.msra.mxu0 %v236
    %290 = vmatprep.subr.mxu0 %v239
    %291 = vmatpush1.msra.mxu0 %v238
    %292 = vmatprep.subr.mxu0 %v241
    %293 = vmatpush1.msra.mxu0 %v240
    %294 = vmatprep.subr.mxu0 %v243
    %295 = vmatpush1.msra.mxu0 %v242
    %296 = vmatprep.subr.mxu0 %v245
    %297 = vmatpush1.msra.mxu0 %v244
    %298 = vmatprep.subr.mxu0 0.0
    %299 = vmatpush1.msra.mxu0 0.0
    %300 = vmatprep.subr.mxu0 0.0
    %301 = vmatpush1.msra.mxu0 0.0
    %302 = vmatprep.subr.mxu0 0.0
    %303 = vmatpush1.msra.mxu0 0.0
    %304 = vmatprep.subr.mxu0 0.0
    %305 = vmatpush1.msra.mxu0 0.0
    %306 = vmatprep.subr.mxu0 0.0
    %307 = vmatpush1.msra.mxu0 0.0
    %308 = vmatprep.subr.mxu0 0.0
    %309 = vmatpush1.msra.mxu0 0.0
    %310 = vmatprep.subr.mxu0 0.0
    %311 = vmatpush1.msra.mxu0 0.0
    %312 = vmatprep.subr.mxu0 0.0
    %313 = vmatpush1.msra.mxu0 0.0
    %314 = vmatprep.subr.mxu0 0.0
    %315 = vmatpush1.msra.mxu0 0.0
    %316 = vmatprep.subr.mxu0 0.0
    %317 = vmatpush1.msra.mxu0 0.0
    %318 = vmatprep.subr.mxu0 0.0
    %319 = vmatpush1.msra.mxu0 0.0
    %320 = vmatprep.subr.mxu0 0.0
    %321 = vmatpush1.msra.mxu0 0.0
    %322 = vmatprep.subr.mxu0 0.0
    %323 = vmatpush1.msra.mxu0 0.0
    %324 = vmatprep.subr.mxu0 0.0
    %325 = vmatpush1.msra.mxu0 0.0
    %326 = vmatprep.subr.mxu0 0.0
    %327 = vmatpush1.msra.mxu0 0.0
    %328 = vmatprep.subr.mxu0 0.0
    %329 = vmatpush1.msra.mxu0 0.0
    %330 = vmatprep.subr.mxu0 0.0
    %331 = vmatpush1.msra.mxu0 0.0
    %332 = vmatprep.subr.mxu0 0.0
    %333 = vmatpush1.msra.mxu0 0.0
    %334 = vmatprep.subr.mxu0 0.0
    %335 = vmatpush1.msra.mxu0 0.0
    %336 = vmatprep.subr.mxu0 0.0
    %337 = vmatpush1.msra.mxu0 0.0
    %338 = vmatprep.subr.mxu0 0.0
    %339 = vmatpush1.msra.mxu0 0.0
    %340 = vmatprep.subr.mxu0 0.0
    %341 = vmatpush1.msra.mxu0 0.0
    %342 = vmatprep.subr.mxu0 0.0
    %343 = vmatpush1.msra.mxu0 0.0
    %344 = vmatprep.subr.mxu0 0.0
    %345 = vmatpush1.msra.mxu0 0.0
    %346 = vmatprep.mubr.f32.mxu0 0.0
    %347 = vmatmul.mubr.f32.gmra.mrb[0].mxu0 %v259
    %v348 = vpop.f32.mrb[0].mxu0
    %v349 = vadd.f32 %v251, %v348
    %v350 = vpop.f32.mrb[0].mxu0
    %v351 = vadd.f32 %v255, %v350
    %352 = vmatprep.mubr.f32.mxu0 0.0
    %353 = vmatmul.mubr.f32.gmra.mrb[0].mxu0 %v262
    %v354 = vpop.f32.mrb[0].mxu0
    %v355 = vadd.f32 %v251, %v354
    %v356 = vpop.f32.mrb[0].mxu0
    %v357 = vadd.f32 %v255, %v356
    %358 = vmatprep.mubr.f32.mxu0 0.0
    %359 = vmatmul.mubr.f32.gmra.mrb[0].mxu0 %v265
    %v360 = vpop.f32.mrb[0].mxu0
    %v361 = vadd.f32 %v251, %v360
    %v362 = vpop.f32.mrb[0].mxu0
    %v363 = vadd.f32 %v255, %v362
    %364 = vmatprep.mubr.f32.mxu0 0.0
    %365 = vmatmul.mubr.f32.gmra.mrb[0].mxu0 %v268
    %v366 = vpop.f32.mrb[0].mxu0
    %v367 = vadd.f32 %v251, %v366
    %v368 = vpop.f32.mrb[0].mxu0
    %v369 = vadd.f32 %v255, %v368
    %370 = vmatprep.mubr.f32.mxu0 0.0
    %371 = vmatmul.mubr.f32.gmra.mrb[0].mxu0 %v271
    %v372 = vpop.f32.mrb[0].mxu0
    %v373 = vadd.f32 %v251, %v372
    %v374 = vpop.f32.mrb[0].mxu0
    %v375 = vadd.f32 %v255, %v374
    %376 = vmatprep.mubr.f32.mxu0 0.0
    %377 = vmatmul.mubr.f32.gmra.mrb[0].mxu0 %v274
    %v378 = vpop.f32.mrb[0].mxu0
    %v379 = vadd.f32 %v251, %v378
    %v380 = vpop.f32.mrb[0].mxu0
    %v381 = vadd.f32 %v255, %v380
    %382 = vmatprep.mubr.f32.mxu0 0.0
    %383 = vmatmul.mubr.f32.gmra.mrb[0].mxu0 %v277
    %v384 = vpop.f32.mrb[0].mxu0
    %v385 = vadd.f32 %v251, %v384
    %v386 = vpop.f32.mrb[0].mxu0
    %v387 = vadd.f32 %v255, %v386
    %388 = vmatprep.mubr.f32.mxu0 0.0
    %389 = vmatmul.mubr.f32.gmra.mrb[0].mxu0 %v280
    %v390 = vpop.f32.mrb[0].mxu0
    %v391 = vadd.f32 %v251, %v390
    %v392 = vpop.f32.mrb[0].mxu0
    %v393 = vadd.f32 %v255, %v392
    %394 = vdwg.mxu0
    %395 = vst [vmem:[#allocation2] sm:$0xff] %v349
    %396 = vst [vmem:[#allocation2 + $0x8] sm:$0xff] %v351
    %397 = vst [vmem:[#allocation2 + $0x10] sm:$0xff] %v355
    %398 = vst [vmem:[#allocation2 + $0x18] sm:$0xff] %v357
    %399 = vst [vmem:[#allocation2 + $0x20] sm:$0xff] %v361
    %400 = vst [vmem:[#allocation2 + $0x28] sm:$0xff] %v363
    %401 = vst [vmem:[#allocation2 + $0x30] sm:$0xff] %v367
    %402 = vst [vmem:[#allocation2 + $0x38] sm:$0xff] %v369
    %403 = vst [vmem:[#allocation2 + $0x40] sm:$0xff] %v373
    %404 = vst [vmem:[#allocation2 + $0x48] sm:$0xff] %v375
    %405 = vst [vmem:[#allocation2 + $0x50] sm:$0xff] %v379
    %406 = vst [vmem:[#allocation2 + $0x58] sm:$0xff] %v381
    %407 = vst [vmem:[#allocation2 + $0x60] sm:$0xff] %v385
    %408 = vst [vmem:[#allocation2 + $0x68] sm:$0xff] %v387
    %409 = vst [vmem:[#allocation2 + $0x70] sm:$0xff] %v391
    %410 = vst [vmem:[#allocation2 + $0x78] sm:$0xff] %v393
    %v411 = vld [vmem:[%s6] sm:$0xff]
    %v412 = vld [vmem:[%s6 + $0x8] sm:$0xff]
    %v413 = vld [vmem:[%s6 + $0x10] sm:$0xff]
    %v414 = vld [vmem:[%s6 + $0x18] sm:$0xff]
    %v415 = vld [vmem:[%s6 + $0x20] sm:$0xff]
    %v416 = vld [vmem:[%s6 + $0x28] sm:$0xff]
    %v417 = vld [vmem:[%s6 + $0x30] sm:$0xff]
    %v418 = vld [vmem:[%s6 + $0x38] sm:$0xff]
    %v419 = vld [vmem:[%s6 + $0x40] sm:$0xff]
    %v420 = vld [vmem:[%s6 + $0x48] sm:$0xff]
    %v421 = vld [vmem:[%s6 + $0x50] sm:$0xff]
    %v422 = vld [vmem:[%s6 + $0x58] sm:$0xff]
    %v423 = vld [vmem:[%s6 + $0x60] sm:$0xff]
    %v424 = vld [vmem:[%s6 + $0x68] sm:$0xff]
    %v425 = vld [vmem:[%s6 + $0x70] sm:$0xff]
    %v426 = vld [vmem:[%s6 + $0x78] sm:$0xff]
    %v428 = vsel %vm148, 0.0, 0
    %430 = vmatprep.subr.mxu0 %v412
    %431 = vmatpush1.msra.mxu0 %v411
    %432 = vmatprep.subr.mxu0 %v414
    %433 = vmatpush1.msra.mxu0 %v413
    %434 = vmatprep.subr.mxu0 %v416
    %435 = vmatpush1.msra.mxu0 %v415
    %436 = vmatprep.subr.mxu0 %v418
    %437 = vmatpush1.msra.mxu0 %v417
    %438 = vmatprep.subr.mxu0 %v420
    %439 = vmatpush1.msra.mxu0 %v419
    %440 = vmatprep.subr.mxu0 %v422
    %441 = vmatpush1.msra.mxu0 %v421
    %442 = vmatprep.subr.mxu0 %v424
    %443 = vmatpush1.msra.mxu0 %v423
    %444 = vmatprep.subr.mxu0 %v426
    %445 = vmatpush1.msra.mxu0 %v425
    %446 = vmatprep.subr.mxu0 0.0
    %447 = vmatpush1.msra.mxu0 0.0
    %448 = vmatprep.subr.mxu0 0.0
    %449 = vmatpush1.msra.mxu0 0.0
    %450 = vmatprep.subr.mxu0 0.0
    %451 = vmatpush1.msra.mxu0 0.0
    %452 = vmatprep.subr.mxu0 0.0
    %453 = vmatpush1.msra.mxu0 0.0
    %454 = vmatprep.subr.mxu0 0.0
    %455 = vmatpush1.msra.mxu0 0.0
    %456 = vmatprep.subr.mxu0 0.0
    %457 = vmatpush1.msra.mxu0 0.0
    %458 = vmatprep.subr.mxu0 0.0
    %459 = vmatpush1.msra.mxu0 0.0
    %460 = vmatprep.subr.mxu0 0.0
    %461 = vmatpush1.msra.mxu0 0.0
    %462 = vmatprep.subr.mxu0 0.0
    %463 = vmatpush1.msra.mxu0 0.0
    %464 = vmatprep.subr.mxu0 0.0
    %465 = vmatpush1.msra.mxu0 0.0
    %466 = vmatprep.subr.mxu0 0.0
    %467 = vmatpush1.msra.mxu0 0.0
    %468 = vmatprep.subr.mxu0 0.0
    %469 = vmatpush1.msra.mxu0 0.0
    %470 = vmatprep.subr.mxu0 0.0
    %471 = vmatpush1.msra.mxu0 0.0
    %472 = vmatprep.subr.mxu0 0.0
    %473 = vmatpush1.msra.mxu0 0.0
    %474 = vmatprep.subr.mxu0 0.0
    %475 = vmatpush1.msra.mxu0 0.0
    %476 = vmatprep.subr.mxu0 0.0
    %477 = vmatpush1.msra.mxu0 0.0
    %478 = vmatprep.subr.mxu0 0.0
    %479 = vmatpush1.msra.mxu0 0.0
    %480 = vmatprep.subr.mxu0 0.0
    %481 = vmatpush1.msra.mxu0 0.0
    %482 = vmatprep.subr.mxu0 0.0
    %483 = vmatpush1.msra.mxu0 0.0
    %484 = vmatprep.subr.mxu0 0.0
    %485 = vmatpush1.msra.mxu0 0.0
    %486 = vmatprep.subr.mxu0 0.0
    %487 = vmatpush1.msra.mxu0 0.0
    %488 = vmatprep.subr.mxu0 0.0
    %489 = vmatpush1.msra.mxu0 0.0
    %490 = vmatprep.subr.mxu0 0.0
    %491 = vmatpush1.msra.mxu0 0.0
    %492 = vmatprep.subr.mxu0 0.0
    %493 = vmatpush1.msra.mxu0 0.0
    %494 = vmatprep.mubr.f32.mxu0 0.0
    %495 = vmatmul.mubr.f32.gmra.mrb[0].mxu0 %v428
    %v496 = vpop.f32.mrb[0].mxu0
    %v497 = vadd.f32 0.0, %v496
    %v498 = vpop.f32.mrb[0].mxu0
    %v499 = vadd.f32 0.0, %v498
    %500 = vdwg.mxu0
    %v501 = vld [vmem:[#allocation2] sm:$0xff]
    %v502 = vadd.f32 %v501, %v497
    %v503 = vld [vmem:[#allocation2 + $0x78] sm:$0xff]
    %v504 = vadd.f32 %v503, %v499
    %v505 = vxor.u32 %v502, 2147483648
    %v506 = vmul.f32 %v505, 1.442695
    %v507 = vpow.pop %v506
    %v508 = vadd.f32 %v507, 1.0
    %v509 = vrcp.pop %v508
    %v510 = vmul.f32 1.0, %v509
    %v511 = vtanh.pop %v502
    %v512 = vmul.f32 %v510, 0.0
    %514 = vrot.lane.b32.xlu0 %v511, 64
    %v515 = vpop.permute.xlu0 %514
    %v517 = vmul.f32 %v510, %v515
    %519 = vrot.lane.b32.xlu0 %v517, 32
    %v520 = vpop.permute.xlu0 %519
    %v522 = vadd.f32 %v512, %v520
    %v523 = vtanh.pop %v522
    %525 = vrot.lane.b32.xlu0 %v523, 64
    %v526 = vpop.permute.xlu0 %525
    %v528 = vmul.f32 %v510, %v526
    %v529 = vxor.u32 %v504, 2147483648
    %v530 = vmul.f32 %v529, 1.442695
    %v531 = vpow.pop %v530
    %v532 = vadd.f32 %v531, 1.0
    %v533 = vrcp.pop %v532
    %v534 = vmul.f32 1.0, %v533
    %v535 = vtanh.pop %v504
    %v536 = vmul.f32 %v534, 0.0
    %538 = vrot.lane.b32.xlu0 %v535, 64
    %v539 = vpop.permute.xlu0 %538
    %v541 = vmul.f32 %v534, %v539
    %543 = vrot.lane.b32.xlu0 %v541, 32
    %v544 = vpop.permute.xlu0 %543
    %v546 = vadd.f32 %v536, %v544
    %v547 = vtanh.pop %v546
    %549 = vrot.lane.b32.xlu0 %v547, 64
    %v550 = vpop.permute.xlu0 %549
    %v552 = vmul.f32 %v534, %v550
    %554 = vrot.lane.b32.xlu0 %v528, 32
    %v555 = vpop.permute.xlu0 %554
    %558 = vrot.lane.b32.xlu0 %v552, 64
    %v559 = vpop.permute.xlu0 %558
    %vm561 = vcmask 261120
    %v562 = vsel %vm561, %v555, %v559
    %v564 = vsel %vm148, %v562, 0
    %566 = vmatprep.subr.mxu0 %v412
    %567 = vmatpush1.msra.mxu0 %v411
    %568 = vmatprep.subr.mxu0 %v414
    %569 = vmatpush1.msra.mxu0 %v413
    %570 = vmatprep.subr.mxu0 %v416
    %571 = vmatpush1.msra.mxu0 %v415
    %572 = vmatprep.subr.mxu0 %v418
    %573 = vmatpush1.msra.mxu0 %v417
    %574 = vmatprep.subr.mxu0 %v420
    %575 = vmatpush1.msra.mxu0 %v419
    %576 = vmatprep.subr.mxu0 %v422
    %577 = vmatpush1.msra.mxu0 %v421
    %578 = vmatprep.subr.mxu0 %v424
    %579 = vmatpush1.msra.mxu0 %v423
    %580 = vmatprep.subr.mxu0 %v426
    %581 = vmatpush1.msra.mxu0 %v425
    %582 = vmatprep.subr.mxu0 0.0
    %583 = vmatpush1.msra.mxu0 0.0
    %584 = vmatprep.subr.mxu0 0.0
    %585 = vmatpush1.msra.mxu0 0.0
    %586 = vmatprep.subr.mxu0 0.0
    %587 = vmatpush1.msra.mxu0 0.0
    %588 = vmatprep.subr.mxu0 0.0
    %589 = vmatpush1.msra.mxu0 0.0
    %590 = vmatprep.subr.mxu0 0.0
    %591 = vmatpush1.msra.mxu0 0.0
    %592 = vmatprep.subr.mxu0 0.0
    %593 = vmatpush1.msra.mxu0 0.0
    %594 = vmatprep.subr.mxu0 0.0
    %595 = vmatpush1.msra.mxu0 0.0
    %596 = vmatprep.subr.mxu0 0.0
    %597 = vmatpush1.msra.mxu0 0.0
    %598 = vmatprep.subr.mxu0 0.0
    %599 = vmatpush1.msra.mxu0 0.0
    %600 = vmatprep.subr.mxu0 0.0
    %601 = vmatpush1.msra.mxu0 0.0
    %602 = vmatprep.subr.mxu0 0.0
    %603 = vmatpush1.msra.mxu0 0.0
    %604 = vmatprep.subr.mxu0 0.0
    %605 = vmatpush1.msra.mxu0 0.0
    %606 = vmatprep.subr.mxu0 0.0
    %607 = vmatpush1.msra.mxu0 0.0
    %608 = vmatprep.subr.mxu0 0.0
    %609 = vmatpush1.msra.mxu0 0.0
    %610 = vmatprep.subr.mxu0 0.0
    %611 = vmatpush1.msra.mxu0 0.0
    %612 = vmatprep.subr.mxu0 0.0
    %613 = vmatpush1.msra.mxu0 0.0
    %614 = vmatprep.subr.mxu0 0.0
    %615 = vmatpush1.msra.mxu0 0.0
    %616 = vmatprep.subr.mxu0 0.0
    %617 = vmatpush1.msra.mxu0 0.0
    %618 = vmatprep.subr.mxu0 0.0
    %619 = vmatpush1.msra.mxu0 0.0
    %620 = vmatprep.subr.mxu0 0.0
    %621 = vmatpush1.msra.mxu0 0.0
    %622 = vmatprep.subr.mxu0 0.0
    %623 = vmatpush1.msra.mxu0 0.0
    %624 = vmatprep.subr.mxu0 0.0
    %625 = vmatpush1.msra.mxu0 0.0
    %626 = vmatprep.subr.mxu0 0.0
    %627 = vmatpush1.msra.mxu0 0.0
    %628 = vmatprep.subr.mxu0 0.0
    %629 = vmatpush1.msra.mxu0 0.0
    %630 = vmatprep.mubr.f32.mxu0 0.0
    %631 = vmatmul.mubr.f32.gmra.mrb[0].mxu0 %v564
    %v632 = vpop.f32.mrb[0].mxu0
    %v633 = vadd.f32 0.0, %v632
    %v634 = vpop.f32.mrb[0].mxu0
    %v635 = vadd.f32 0.0, %v634
    %636 = vdwg.mxu0
    %v637 = vld [vmem:[#allocation2 + $0x10] sm:$0xff]
    %v638 = vadd.f32 %v637, %v633
    %v639 = vld [vmem:[#allocation2 + $0x68] sm:$0xff]
    %v640 = vadd.f32 %v639, %v635
    %v641 = vxor.u32 %v638, 2147483648
    %v642 = vmul.f32 %v641, 1.442695
    %v643 = vpow.pop %v642
    %v644 = vadd.f32 %v643, 1.0
    %v645 = vrcp.pop %v644
    %v646 = vmul.f32 1.0, %v645
    %v647 = vtanh.pop %v638
    %v648 = vmul.f32 %v646, %v522
    %650 = vrot.lane.b32.xlu0 %v647, 64
    %v651 = vpop.permute.xlu0 %650
    %v653 = vmul.f32 %v646, %v651
    %655 = vrot.lane.b32.xlu0 %v653, 32
    %v656 = vpop.permute.xlu0 %655
    %v658 = vadd.f32 %v648, %v656
    %v659 = vtanh.pop %v658
    %661 = vrot.lane.b32.xlu0 %v659, 64
    %v662 = vpop.permute.xlu0 %661
    %v664 = vmul.f32 %v646, %v662
    %v665 = vxor.u32 %v640, 2147483648
    %v666 = vmul.f32 %v665, 1.442695
    %v667 = vpow.pop %v666
    %v668 = vadd.f32 %v667, 1.0
    %v669 = vrcp.pop %v668
    %v670 = vmul.f32 1.0, %v669
    %v671 = vtanh.pop %v640
    %v672 = vmul.f32 %v670, %v546
    %674 = vrot.lane.b32.xlu0 %v671, 64
    %v675 = vpop.permute.xlu0 %674
    %v677 = vmul.f32 %v670, %v675
    %679 = vrot.lane.b32.xlu0 %v677, 32
    %v680 = vpop.permute.xlu0 %679
    %v682 = vadd.f32 %v672, %v680
    %v683 = vtanh.pop %v682
    %685 = vrot.lane.b32.xlu0 %v683, 64
    %v686 = vpop.permute.xlu0 %685
    %v688 = vmul.f32 %v670, %v686
    %690 = vrot.lane.b32.xlu0 %v664, 32
    %v691 = vpop.permute.xlu0 %690
    %694 = vrot.lane.b32.xlu0 %v688, 64
    %v695 = vpop.permute.xlu0 %694
    %v697 = vsel %vm561, %v691, %v695
    %v699 = vsel %vm148, %v697, 0
    %701 = vmatprep.subr.mxu0 %v412
    %702 = vmatpush1.msra.mxu0 %v411
    %703 = vmatprep.subr.mxu0 %v414
    %704 = vmatpush1.msra.mxu0 %v413
    %705 = vmatprep.subr.mxu0 %v416
    %706 = vmatpush1.msra.mxu0 %v415
    %707 = vmatprep.subr.mxu0 %v418
    %708 = vmatpush1.msra.mxu0 %v417
    %709 = vmatprep.subr.mxu0 %v420
    %710 = vmatpush1.msra.mxu0 %v419
    %711 = vmatprep.subr.mxu0 %v422
    %712 = vmatpush1.msra.mxu0 %v421
    %713 = vmatprep.subr.mxu0 %v424
    %714 = vmatpush1.msra.mxu0 %v423
    %715 = vmatprep.subr.mxu0 %v426
    %716 = vmatpush1.msra.mxu0 %v425
    %717 = vmatprep.subr.mxu0 0.0
    %718 = vmatpush1.msra.mxu0 0.0
    %719 = vmatprep.subr.mxu0 0.0
    %720 = vmatpush1.msra.mxu0 0.0
    %721 = vmatprep.subr.mxu0 0.0
    %722 = vmatpush1.msra.mxu0 0.0
    %723 = vmatprep.subr.mxu0 0.0
    %724 = vmatpush1.msra.mxu0 0.0
    %725 = vmatprep.subr.mxu0 0.0
    %726 = vmatpush1.msra.mxu0 0.0
    %727 = vmatprep.subr.mxu0 0.0
    %728 = vmatpush1.msra.mxu0 0.0
    %729 = vmatprep.subr.mxu0 0.0
    %730 = vmatpush1.msra.mxu0 0.0
    %731 = vmatprep.subr.mxu0 0.0
    %732 = vmatpush1.msra.mxu0 0.0
    %733 = vmatprep.subr.mxu0 0.0
    %734 = vmatpush1.msra.mxu0 0.0
    %735 = vmatprep.subr.mxu0 0.0
    %736 = vmatpush1.msra.mxu0 0.0
    %737 = vmatprep.subr.mxu0 0.0
    %738 = vmatpush1.msra.mxu0 0.0
    %739 = vmatprep.subr.mxu0 0.0
    %740 = vmatpush1.msra.mxu0 0.0
    %741 = vmatprep.subr.mxu0 0.0
    %742 = vmatpush1.msra.mxu0 0.0
    %743 = vmatprep.subr.mxu0 0.0
    %744 = vmatpush1.msra.mxu0 0.0
    %745 = vmatprep.subr.mxu0 0.0
    %746 = vmatpush1.msra.mxu0 0.0
    %747 = vmatprep.subr.mxu0 0.0
    %748 = vmatpush1.msra.mxu0 0.0
    %749 = vmatprep.subr.mxu0 0.0
    %750 = vmatpush1.msra.mxu0 0.0
    %751 = vmatprep.subr.mxu0 0.0
    %752 = vmatpush1.msra.mxu0 0.0
    %753 = vmatprep.subr.mxu0 0.0
    %754 = vmatpush1.msra.mxu0 0.0
    %755 = vmatprep.subr.mxu0 0.0
    %756 = vmatpush1.msra.mxu0 0.0
    %757 = vmatprep.subr.mxu0 0.0
    %758 = vmatpush1.msra.mxu0 0.0
    %759 = vmatprep.subr.mxu0 0.0
    %760 = vmatpush1.msra.mxu0 0.0
    %761 = vmatprep.subr.mxu0 0.0
    %762 = vmatpush1.msra.mxu0 0.0
    %763 = vmatprep.subr.mxu0 0.0
    %764 = vmatpush1.msra.mxu0 0.0
    %765 = vmatprep.mubr.f32.mxu0 0.0
    %766 = vmatmul.mubr.f32.gmra.mrb[0].mxu0 %v699
    %v767 = vpop.f32.mrb[0].mxu0
    %v768 = vadd.f32 0.0, %v767
    %v769 = vpop.f32.mrb[0].mxu0
    %v770 = vadd.f32 0.0, %v769
    %771 = vdwg.mxu0
    %v772 = vld [vmem:[#allocation2 + $0x20] sm:$0xff]
    %v773 = vadd.f32 %v772, %v768
    %v774 = vld [vmem:[#allocation2 + $0x58] sm:$0xff]
    %v775 = vadd.f32 %v774, %v770
    %v776 = vxor.u32 %v773, 2147483648
    %v777 = vmul.f32 %v776, 1.442695
    %v778 = vpow.pop %v777
    %v779 = vadd.f32 %v778, 1.0
    %v780 = vrcp.pop %v779
    %v781 = vmul.f32 1.0, %v780
    %v782 = vtanh.pop %v773
    %v783 = vmul.f32 %v781, %v658
    %785 = vrot.lane.b32.xlu0 %v782, 64
    %v786 = vpop.permute.xlu0 %785
    %v788 = vmul.f32 %v781, %v786
    %790 = vrot.lane.b32.xlu0 %v788, 32
    %v791 = vpop.permute.xlu0 %790
    %v793 = vadd.f32 %v783, %v791
    %v794 = vtanh.pop %v793
    %796 = vrot.lane.b32.xlu0 %v794, 64
    %v797 = vpop.permute.xlu0 %796
    %v799 = vmul.f32 %v781, %v797
    %v800 = vxor.u32 %v775, 2147483648
    %v801 = vmul.f32 %v800, 1.442695
    %v802 = vpow.pop %v801
    %v803 = vadd.f32 %v802, 1.0
    %v804 = vrcp.pop %v803
    %v805 = vmul.f32 1.0, %v804
    %v806 = vtanh.pop %v775
    %v807 = vmul.f32 %v805, %v682
    %809 = vrot.lane.b32.xlu0 %v806, 64
    %v810 = vpop.permute.xlu0 %809
    %v812 = vmul.f32 %v805, %v810
    %814 = vrot.lane.b32.xlu0 %v812, 32
    %v815 = vpop.permute.xlu0 %814
    %v817 = vadd.f32 %v807, %v815
    %v818 = vtanh.pop %v817
    %820 = vrot.lane.b32.xlu0 %v818, 64
    %v821 = vpop.permute.xlu0 %820
    %v823 = vmul.f32 %v805, %v821
    %825 = vrot.lane.b32.xlu0 %v799, 32
    %v826 = vpop.permute.xlu0 %825
    %829 = vrot.lane.b32.xlu0 %v823, 64
    %v830 = vpop.permute.xlu0 %829
    %v832 = vsel %vm561, %v826, %v830
    %v834 = vsel %vm148, %v832, 0
    %836 = vmatprep.subr.mxu0 %v412
    %837 = vmatpush1.msra.mxu0 %v411
    %838 = vmatprep.subr.mxu0 %v414
    %839 = vmatpush1.msra.mxu0 %v413
    %840 = vmatprep.subr.mxu0 %v416
    %841 = vmatpush1.msra.mxu0 %v415
    %842 = vmatprep.subr.mxu0 %v418
    %843 = vmatpush1.msra.mxu0 %v417
    %844 = vmatprep.subr.mxu0 %v420
    %845 = vmatpush1.msra.mxu0 %v419
    %846 = vmatprep.subr.mxu0 %v422
    %847 = vmatpush1.msra.mxu0 %v421
    %848 = vmatprep.subr.mxu0 %v424
    %849 = vmatpush1.msra.mxu0 %v423
    %850 = vmatprep.subr.mxu0 %v426
    %851 = vmatpush1.msra.mxu0 %v425
    %852 = vmatprep.subr.mxu0 0.0
    %853 = vmatpush1.msra.mxu0 0.0
    %854 = vmatprep.subr.mxu0 0.0
    %855 = vmatpush1.msra.mxu0 0.0
    %856 = vmatprep.subr.mxu0 0.0
    %857 = vmatpush1.msra.mxu0 0.0
    %858 = vmatprep.subr.mxu0 0.0
    %859 = vmatpush1.msra.mxu0 0.0
    %860 = vmatprep.subr.mxu0 0.0
    %861 = vmatpush1.msra.mxu0 0.0
    %862 = vmatprep.subr.mxu0 0.0
    %863 = vmatpush1.msra.mxu0 0.0
    %864 = vmatprep.subr.mxu0 0.0
    %865 = vmatpush1.msra.mxu0 0.0
    %866 = vmatprep.subr.mxu0 0.0
    %867 = vmatpush1.msra.mxu0 0.0
    %868 = vmatprep.subr.mxu0 0.0
    %869 = vmatpush1.msra.mxu0 0.0
    %870 = vmatprep.subr.mxu0 0.0
    %871 = vmatpush1.msra.mxu0 0.0
    %872 = vmatprep.subr.mxu0 0.0
    %873 = vmatpush1.msra.mxu0 0.0
    %874 = vmatprep.subr.mxu0 0.0
    %875 = vmatpush1.msra.mxu0 0.0
    %876 = vmatprep.subr.mxu0 0.0
    %877 = vmatpush1.msra.mxu0 0.0
    %878 = vmatprep.subr.mxu0 0.0
    %879 = vmatpush1.msra.mxu0 0.0
    %880 = vmatprep.subr.mxu0 0.0
    %881 = vmatpush1.msra.mxu0 0.0
    %882 = vmatprep.subr.mxu0 0.0
    %883 = vmatpush1.msra.mxu0 0.0
    %884 = vmatprep.subr.mxu0 0.0
    %885 = vmatpush1.msra.mxu0 0.0
    %886 = vmatprep.subr.mxu0 0.0
    %887 = vmatpush1.msra.mxu0 0.0
    %888 = vmatprep.subr.mxu0 0.0
    %889 = vmatpush1.msra.mxu0 0.0
    %890 = vmatprep.subr.mxu0 0.0
    %891 = vmatpush1.msra.mxu0 0.0
    %892 = vmatprep.subr.mxu0 0.0
    %893 = vmatpush1.msra.mxu0 0.0
    %894 = vmatprep.subr.mxu0 0.0
    %895 = vmatpush1.msra.mxu0 0.0
    %896 = vmatprep.subr.mxu0 0.0
    %897 = vmatpush1.msra.mxu0 0.0
    %898 = vmatprep.subr.mxu0 0.0
    %899 = vmatpush1.msra.mxu0 0.0
    %900 = vmatprep.mubr.f32.mxu0 0.0
    %901 = vmatmul.mubr.f32.gmra.mrb[0].mxu0 %v834
    %v902 = vpop.f32.mrb[0].mxu0
    %v903 = vadd.f32 0.0, %v902
    %v904 = vpop.f32.mrb[0].mxu0
    %v905 = vadd.f32 0.0, %v904
    %906 = vdwg.mxu0
    %v907 = vld [vmem:[#allocation2 + $0x30] sm:$0xff]
    %v908 = vadd.f32 %v907, %v903
    %v909 = vld [vmem:[#allocation2 + $0x48] sm:$0xff]
    %v910 = vadd.f32 %v909, %v905
    %v911 = vxor.u32 %v908, 2147483648
    %v912 = vmul.f32 %v911, 1.442695
    %v913 = vpow.pop %v912
    %v914 = vadd.f32 %v913, 1.0
    %v915 = vrcp.pop %v914
    %v916 = vmul.f32 1.0, %v915
    %v917 = vtanh.pop %v908
    %v918 = vmul.f32 %v916, %v793
    %920 = vrot.lane.b32.xlu0 %v917, 64
    %v921 = vpop.permute.xlu0 %920
    %v923 = vmul.f32 %v916, %v921
    %925 = vrot.lane.b32.xlu0 %v923, 32
    %v926 = vpop.permute.xlu0 %925
    %v928 = vadd.f32 %v918, %v926
    %v929 = vtanh.pop %v928
    %931 = vrot.lane.b32.xlu0 %v929, 64
    %v932 = vpop.permute.xlu0 %931
    %v934 = vmul.f32 %v916, %v932
    %v935 = vxor.u32 %v910, 2147483648
    %v936 = vmul.f32 %v935, 1.442695
    %v937 = vpow.pop %v936
    %v938 = vadd.f32 %v937, 1.0
    %v939 = vrcp.pop %v938
    %v940 = vmul.f32 1.0, %v939
    %v941 = vtanh.pop %v910
    %v942 = vmul.f32 %v940, %v817
    %944 = vrot.lane.b32.xlu0 %v941, 64
    %v945 = vpop.permute.xlu0 %944
    %v947 = vmul.f32 %v940, %v945
    %949 = vrot.lane.b32.xlu0 %v947, 32
    %v950 = vpop.permute.xlu0 %949
    %v952 = vadd.f32 %v942, %v950
    %v953 = vtanh.pop %v952
    %955 = vrot.lane.b32.xlu0 %v953, 64
    %v956 = vpop.permute.xlu0 %955
    %v958 = vmul.f32 %v940, %v956
    %960 = vrot.lane.b32.xlu0 %v934, 32
    %v961 = vpop.permute.xlu0 %960
    %964 = vrot.lane.b32.xlu0 %v958, 64
    %v965 = vpop.permute.xlu0 %964
    %v967 = vsel %vm561, %v961, %v965
    %v969 = vsel %vm148, %v967, 0
    %971 = vmatprep.subr.mxu0 %v412
    %972 = vmatpush1.msra.mxu0 %v411
    %973 = vmatprep.subr.mxu0 %v414
    %974 = vmatpush1.msra.mxu0 %v413
    %975 = vmatprep.subr.mxu0 %v416
    %976 = vmatpush1.msra.mxu0 %v415
    %977 = vmatprep.subr.mxu0 %v418
    %978 = vmatpush1.msra.mxu0 %v417
    %979 = vmatprep.subr.mxu0 %v420
    %980 = vmatpush1.msra.mxu0 %v419
    %981 = vmatprep.subr.mxu0 %v422
    %982 = vmatpush1.msra.mxu0 %v421
    %983 = vmatprep.subr.mxu0 %v424
    %984 = vmatpush1.msra.mxu0 %v423
    %985 = vmatprep.subr.mxu0 %v426
    %986 = vmatpush1.msra.mxu0 %v425
    %987 = vmatprep.subr.mxu0 0.0
    %988 = vmatpush1.msra.mxu0 0.0
    %989 = vmatprep.subr.mxu0 0.0
    %990 = vmatpush1.msra.mxu0 0.0
    %991 = vmatprep.subr.mxu0 0.0
    %992 = vmatpush1.msra.mxu0 0.0
    %993 = vmatprep.subr.mxu0 0.0
    %994 = vmatpush1.msra.mxu0 0.0
    %995 = vmatprep.subr.mxu0 0.0
    %996 = vmatpush1.msra.mxu0 0.0
    %997 = vmatprep.subr.mxu0 0.0
    %998 = vmatpush1.msra.mxu0 0.0
    %999 = vmatprep.subr.mxu0 0.0
    %1000 = vmatpush1.msra.mxu0 0.0
    %1001 = vmatprep.subr.mxu0 0.0
    %1002 = vmatpush1.msra.mxu0 0.0
    %1003 = vmatprep.subr.mxu0 0.0
    %1004 = vmatpush1.msra.mxu0 0.0
    %1005 = vmatprep.subr.mxu0 0.0
    %1006 = vmatpush1.msra.mxu0 0.0
    %1007 = vmatprep.subr.mxu0 0.0
    %1008 = vmatpush1.msra.mxu0 0.0
    %1009 = vmatprep.subr.mxu0 0.0
    %1010 = vmatpush1.msra.mxu0 0.0
    %1011 = vmatprep.subr.mxu0 0.0
    %1012 = vmatpush1.msra.mxu0 0.0
    %1013 = vmatprep.subr.mxu0 0.0
    %1014 = vmatpush1.msra.mxu0 0.0
    %1015 = vmatprep.subr.mxu0 0.0
    %1016 = vmatpush1.msra.mxu0 0.0
    %1017 = vmatprep.subr.mxu0 0.0
    %1018 = vmatpush1.msra.mxu0 0.0
    %1019 = vmatprep.subr.mxu0 0.0
    %1020 = vmatpush1.msra.mxu0 0.0
    %1021 = vmatprep.subr.mxu0 0.0
    %1022 = vmatpush1.msra.mxu0 0.0
    %1023 = vmatprep.subr.mxu0 0.0
    %1024 = vmatpush1.msra.mxu0 0.0
    %1025 = vmatprep.subr.mxu0 0.0
    %1026 = vmatpush1.msra.mxu0 0.0
    %1027 = vmatprep.subr.mxu0 0.0
    %1028 = vmatpush1.msra.mxu0 0.0
    %1029 = vmatprep.subr.mxu0 0.0
    %1030 = vmatpush1.msra.mxu0 0.0
    %1031 = vmatprep.subr.mxu0 0.0
    %1032 = vmatpush1.msra.mxu0 0.0
    %1033 = vmatprep.subr.mxu0 0.0
    %1034 = vmatpush1.msra.mxu0 0.0
    %1035 = vmatprep.mubr.f32.mxu0 0.0
    %1036 = vmatmul.mubr.f32.gmra.mrb[0].mxu0 %v969
    %v1037 = vpop.f32.mrb[0].mxu0
    %v1038 = vadd.f32 0.0, %v1037
    %v1039 = vpop.f32.mrb[0].mxu0
    %v1040 = vadd.f32 0.0, %v1039
    %1041 = vdwg.mxu0
    %v1042 = vld [vmem:[#allocation2 + $0x40] sm:$0xff]
    %v1043 = vadd.f32 %v1042, %v1038
    %v1044 = vld [vmem:[#allocation2 + $0x38] sm:$0xff]
    %v1045 = vadd.f32 %v1044, %v1040
    %v1046 = vxor.u32 %v1043, 2147483648
    %v1047 = vmul.f32 %v1046, 1.442695
    %v1048 = vpow.pop %v1047
    %v1049 = vadd.f32 %v1048, 1.0
    %v1050 = vrcp.pop %v1049
    %v1051 = vmul.f32 1.0, %v1050
    %v1052 = vtanh.pop %v1043
    %v1053 = vmul.f32 %v1051, %v928
    %1055 = vrot.lane.b32.xlu0 %v1052, 64
    %v1056 = vpop.permute.xlu0 %1055
    %v1058 = vmul.f32 %v1051, %v1056
    %1060 = vrot.lane.b32.xlu0 %v1058, 32
    %v1061 = vpop.permute.xlu0 %1060
    %v1063 = vadd.f32 %v1053, %v1061
    %v1064 = vtanh.pop %v1063
    %1066 = vrot.lane.b32.xlu0 %v1064, 64
    %v1067 = vpop.permute.xlu0 %1066
    %v1069 = vmul.f32 %v1051, %v1067
    %v1070 = vxor.u32 %v1045, 2147483648
    %v1071 = vmul.f32 %v1070, 1.442695
    %v1072 = vpow.pop %v1071
    %v1073 = vadd.f32 %v1072, 1.0
    %v1074 = vrcp.pop %v1073
    %v1075 = vmul.f32 1.0, %v1074
    %v1076 = vtanh.pop %v1045
    %v1077 = vmul.f32 %v1075, %v952
    %1079 = vrot.lane.b32.xlu0 %v1076, 64
    %v1080 = vpop.permute.xlu0 %1079
    %v1082 = vmul.f32 %v1075, %v1080
    %1084 = vrot.lane.b32.xlu0 %v1082, 32
    %v1085 = vpop.permute.xlu0 %1084
    %v1087 = vadd.f32 %v1077, %v1085
    %v1088 = vtanh.pop %v1087
    %1090 = vrot.lane.b32.xlu0 %v1088, 64
    %v1091 = vpop.permute.xlu0 %1090
    %v1093 = vmul.f32 %v1075, %v1091
    %1095 = vrot.lane.b32.xlu0 %v1069, 32
    %v1096 = vpop.permute.xlu0 %1095
    %1099 = vrot.lane.b32.xlu0 %v1093, 64
    %v1100 = vpop.permute.xlu0 %1099
    %v1102 = vsel %vm561, %v1096, %v1100
    %v1104 = vsel %vm148, %v1102, 0
    %1106 = vmatprep.subr.mxu0 %v412
    %1107 = vmatpush1.msra.mxu0 %v411
    %1108 = vmatprep.subr.mxu0 %v414
    %1109 = vmatpush1.msra.mxu0 %v413
    %1110 = vmatprep.subr.mxu0 %v416
    %1111 = vmatpush1.msra.mxu0 %v415
    %1112 = vmatprep.subr.mxu0 %v418
    %1113 = vmatpush1.msra.mxu0 %v417
    %1114 = vmatprep.subr.mxu0 %v420
    %1115 = vmatpush1.msra.mxu0 %v419
    %1116 = vmatprep.subr.mxu0 %v422
    %1117 = vmatpush1.msra.mxu0 %v421
    %1118 = vmatprep.subr.mxu0 %v424
    %1119 = vmatpush1.msra.mxu0 %v423
    %1120 = vmatprep.subr.mxu0 %v426
    %1121 = vmatpush1.msra.mxu0 %v425
    %1122 = vmatprep.subr.mxu0 0.0
    %1123 = vmatpush1.msra.mxu0 0.0
    %1124 = vmatprep.subr.mxu0 0.0
    %1125 = vmatpush1.msra.mxu0 0.0
    %1126 = vmatprep.subr.mxu0 0.0
    %1127 = vmatpush1.msra.mxu0 0.0
    %1128 = vmatprep.subr.mxu0 0.0
    %1129 = vmatpush1.msra.mxu0 0.0
    %1130 = vmatprep.subr.mxu0 0.0
    %1131 = vmatpush1.msra.mxu0 0.0
    %1132 = vmatprep.subr.mxu0 0.0
    %1133 = vmatpush1.msra.mxu0 0.0
    %1134 = vmatprep.subr.mxu0 0.0
    %1135 = vmatpush1.msra.mxu0 0.0
    %1136 = vmatprep.subr.mxu0 0.0
    %1137 = vmatpush1.msra.mxu0 0.0
    %1138 = vmatprep.subr.mxu0 0.0
    %1139 = vmatpush1.msra.mxu0 0.0
    %1140 = vmatprep.subr.mxu0 0.0
    %1141 = vmatpush1.msra.mxu0 0.0
    %1142 = vmatprep.subr.mxu0 0.0
    %1143 = vmatpush1.msra.mxu0 0.0
    %1144 = vmatprep.subr.mxu0 0.0
    %1145 = vmatpush1.msra.mxu0 0.0
    %1146 = vmatprep.subr.mxu0 0.0
    %1147 = vmatpush1.msra.mxu0 0.0
    %1148 = vmatprep.subr.mxu0 0.0
    %1149 = vmatpush1.msra.mxu0 0.0
    %1150 = vmatprep.subr.mxu0 0.0
    %1151 = vmatpush1.msra.mxu0 0.0
    %1152 = vmatprep.subr.mxu0 0.0
    %1153 = vmatpush1.msra.mxu0 0.0
    %1154 = vmatprep.subr.mxu0 0.0
    %1155 = vmatpush1.msra.mxu0 0.0
    %1156 = vmatprep.subr.mxu0 0.0
    %1157 = vmatpush1.msra.mxu0 0.0
    %1158 = vmatprep.subr.mxu0 0.0
    %1159 = vmatpush1.msra.mxu0 0.0
    %1160 = vmatprep.subr.mxu0 0.0
    %1161 = vmatpush1.msra.mxu0 0.0
    %1162 = vmatprep.subr.mxu0 0.0
    %1163 = vmatpush1.msra.mxu0 0.0
    %1164 = vmatprep.subr.mxu0 0.0
    %1165 = vmatpush1.msra.mxu0 0.0
    %1166 = vmatprep.subr.mxu0 0.0
    %1167 = vmatpush1.msra.mxu0 0.0
    %1168 = vmatprep.subr.mxu0 0.0
    %1169 = vmatpush1.msra.mxu0 0.0
    %1170 = vmatprep.mubr.f32.mxu0 0.0
    %1171 = vmatmul.mubr.f32.gmra.mrb[0].mxu0 %v1104
    %v1172 = vpop.f32.mrb[0].mxu0
    %v1173 = vadd.f32 0.0, %v1172
    %v1174 = vpop.f32.mrb[0].mxu0
    %v1175 = vadd.f32 0.0, %v1174
    %1176 = vdwg.mxu0
    %v1177 = vld [vmem:[#allocation2 + $0x50] sm:$0xff]
    %v1178 = vadd.f32 %v1177, %v1173
    %v1179 = vld [vmem:[#allocation2 + $0x28] sm:$0xff]
    %v1180 = vadd.f32 %v1179, %v1175
    %v1181 = vxor.u32 %v1178, 2147483648
    %v1182 = vmul.f32 %v1181, 1.442695
    %v1183 = vpow.pop %v1182
    %v1184 = vadd.f32 %v1183, 1.0
    %v1185 = vrcp.pop %v1184
    %v1186 = vmul.f32 1.0, %v1185
    %v1187 = vtanh.pop %v1178
    %v1188 = vmul.f32 %v1186, %v1063
    %1190 = vrot.lane.b32.xlu0 %v1187, 64
    %v1191 = vpop.permute.xlu0 %1190
    %v1193 = vmul.f32 %v1186, %v1191
    %1195 = vrot.lane.b32.xlu0 %v1193, 32
    %v1196 = vpop.permute.xlu0 %1195
    %v1198 = vadd.f32 %v1188, %v1196
    %v1199 = vtanh.pop %v1198
    %1201 = vrot.lane.b32.xlu0 %v1199, 64
    %v1202 = vpop.permute.xlu0 %1201
    %v1204 = vmul.f32 %v1186, %v1202
    %v1205 = vxor.u32 %v1180, 2147483648
    %v1206 = vmul.f32 %v1205, 1.442695
    %v1207 = vpow.pop %v1206
    %v1208 = vadd.f32 %v1207, 1.0
    %v1209 = vrcp.pop %v1208
    %v1210 = vmul.f32 1.0, %v1209
    %v1211 = vtanh.pop %v1180
    %v1212 = vmul.f32 %v1210, %v1087
    %1214 = vrot.lane.b32.xlu0 %v1211, 64
    %v1215 = vpop.permute.xlu0 %1214
    %v1217 = vmul.f32 %v1210, %v1215
    %1219 = vrot.lane.b32.xlu0 %v1217, 32
    %v1220 = vpop.permute.xlu0 %1219
    %v1222 = vadd.f32 %v1212, %v1220
    %v1223 = vtanh.pop %v1222
    %1225 = vrot.lane.b32.xlu0 %v1223, 64
    %v1226 = vpop.permute.xlu0 %1225
    %v1228 = vmul.f32 %v1210, %v1226
    %1230 = vrot.lane.b32.xlu0 %v1204, 32
    %v1231 = vpop.permute.xlu0 %1230
    %1234 = vrot.lane.b32.xlu0 %v1228, 64
    %v1235 = vpop.permute.xlu0 %1234
    %v1237 = vsel %vm561, %v1231, %v1235
    %v1239 = vsel %vm148, %v1237, 0
    %1241 = vmatprep.subr.mxu0 %v412
    %1242 = vmatpush1.msra.mxu0 %v411
    %1243 = vmatprep.subr.mxu0 %v414
    %1244 = vmatpush1.msra.mxu0 %v413
    %1245 = vmatprep.subr.mxu0 %v416
    %1246 = vmatpush1.msra.mxu0 %v415
    %1247 = vmatprep.subr.mxu0 %v418
    %1248 = vmatpush1.msra.mxu0 %v417
    %1249 = vmatprep.subr.mxu0 %v420
    %1250 = vmatpush1.msra.mxu0 %v419
    %1251 = vmatprep.subr.mxu0 %v422
    %1252 = vmatpush1.msra.mxu0 %v421
    %1253 = vmatprep.subr.mxu0 %v424
    %1254 = vmatpush1.msra.mxu0 %v423
    %1255 = vmatprep.subr.mxu0 %v426
    %1256 = vmatpush1.msra.mxu0 %v425
    %1257 = vmatprep.subr.mxu0 0.0
    %1258 = vmatpush1.msra.mxu0 0.0
    %1259 = vmatprep.subr.mxu0 0.0
    %1260 = vmatpush1.msra.mxu0 0.0
    %1261 = vmatprep.subr.mxu0 0.0
    %1262 = vmatpush1.msra.mxu0 0.0
    %1263 = vmatprep.subr.mxu0 0.0
    %1264 = vmatpush1.msra.mxu0 0.0
    %1265 = vmatprep.subr.mxu0 0.0
    %1266 = vmatpush1.msra.mxu0 0.0
    %1267 = vmatprep.subr.mxu0 0.0
    %1268 = vmatpush1.msra.mxu0 0.0
    %1269 = vmatprep.subr.mxu0 0.0
    %1270 = vmatpush1.msra.mxu0 0.0
    %1271 = vmatprep.subr.mxu0 0.0
    %1272 = vmatpush1.msra.mxu0 0.0
    %1273 = vmatprep.subr.mxu0 0.0
    %1274 = vmatpush1.msra.mxu0 0.0
    %1275 = vmatprep.subr.mxu0 0.0
    %1276 = vmatpush1.msra.mxu0 0.0
    %1277 = vmatprep.subr.mxu0 0.0
    %1278 = vmatpush1.msra.mxu0 0.0
    %1279 = vmatprep.subr.mxu0 0.0
    %1280 = vmatpush1.msra.mxu0 0.0
    %1281 = vmatprep.subr.mxu0 0.0
    %1282 = vmatpush1.msra.mxu0 0.0
    %1283 = vmatprep.subr.mxu0 0.0
    %1284 = vmatpush1.msra.mxu0 0.0
    %1285 = vmatprep.subr.mxu0 0.0
    %1286 = vmatpush1.msra.mxu0 0.0
    %1287 = vmatprep.subr.mxu0 0.0
    %1288 = vmatpush1.msra.mxu0 0.0
    %1289 = vmatprep.subr.mxu0 0.0
    %1290 = vmatpush1.msra.mxu0 0.0
    %1291 = vmatprep.subr.mxu0 0.0
    %1292 = vmatpush1.msra.mxu0 0.0
    %1293 = vmatprep.subr.mxu0 0.0
    %1294 = vmatpush1.msra.mxu0 0.0
    %1295 = vmatprep.subr.mxu0 0.0
    %1296 = vmatpush1.msra.mxu0 0.0
    %1297 = vmatprep.subr.mxu0 0.0
    %1298 = vmatpush1.msra.mxu0 0.0
    %1299 = vmatprep.subr.mxu0 0.0
    %1300 = vmatpush1.msra.mxu0 0.0
    %1301 = vmatprep.subr.mxu0 0.0
    %1302 = vmatpush1.msra.mxu0 0.0
    %1303 = vmatprep.subr.mxu0 0.0
    %1304 = vmatpush1.msra.mxu0 0.0
    %1305 = vmatprep.mubr.f32.mxu0 0.0
    %1306 = vmatmul.mubr.f32.gmra.mrb[0].mxu0 %v1239
    %v1307 = vpop.f32.mrb[0].mxu0
    %v1308 = vadd.f32 0.0, %v1307
    %v1309 = vpop.f32.mrb[0].mxu0
    %v1310 = vadd.f32 0.0, %v1309
    %1311 = vdwg.mxu0
    %v1312 = vld [vmem:[#allocation2 + $0x60] sm:$0xff]
    %v1313 = vadd.f32 %v1312, %v1308
    %v1314 = vld [vmem:[#allocation2 + $0x18] sm:$0xff]
    %v1315 = vadd.f32 %v1314, %v1310
    %v1316 = vxor.u32 %v1313, 2147483648
    %v1317 = vmul.f32 %v1316, 1.442695
    %v1318 = vpow.pop %v1317
    %v1319 = vadd.f32 %v1318, 1.0
    %v1320 = vrcp.pop %v1319
    %v1321 = vmul.f32 1.0, %v1320
    %v1322 = vtanh.pop %v1313
    %v1323 = vmul.f32 %v1321, %v1198
    %1325 = vrot.lane.b32.xlu0 %v1322, 64
    %v1326 = vpop.permute.xlu0 %1325
    %v1328 = vmul.f32 %v1321, %v1326
    %1330 = vrot.lane.b32.xlu0 %v1328, 32
    %v1331 = vpop.permute.xlu0 %1330
    %v1333 = vadd.f32 %v1323, %v1331
    %v1334 = vtanh.pop %v1333
    %1336 = vrot.lane.b32.xlu0 %v1334, 64
    %v1337 = vpop.permute.xlu0 %1336
    %v1339 = vmul.f32 %v1321, %v1337
    %v1340 = vxor.u32 %v1315, 2147483648
    %v1341 = vmul.f32 %v1340, 1.442695
    %v1342 = vpow.pop %v1341
    %v1343 = vadd.f32 %v1342, 1.0
    %v1344 = vrcp.pop %v1343
    %v1345 = vmul.f32 1.0, %v1344
    %v1346 = vtanh.pop %v1315
    %v1347 = vmul.f32 %v1345, %v1222
    %1349 = vrot.lane.b32.xlu0 %v1346, 64
    %v1350 = vpop.permute.xlu0 %1349
    %v1352 = vmul.f32 %v1345, %v1350
    %1354 = vrot.lane.b32.xlu0 %v1352, 32
    %v1355 = vpop.permute.xlu0 %1354
    %v1357 = vadd.f32 %v1347, %v1355
    %v1358 = vtanh.pop %v1357
    %1360 = vrot.lane.b32.xlu0 %v1358, 64
    %v1361 = vpop.permute.xlu0 %1360
    %v1363 = vmul.f32 %v1345, %v1361
    %1365 = vrot.lane.b32.xlu0 %v1339, 32
    %v1366 = vpop.permute.xlu0 %1365
    %1369 = vrot.lane.b32.xlu0 %v1363, 64
    %v1370 = vpop.permute.xlu0 %1369
    %v1372 = vsel %vm561, %v1366, %v1370
    %v1374 = vsel %vm148, %v1372, 0
    %1376 = vmatprep.subr.mxu0 %v412
    %1377 = vmatpush1.msra.mxu0 %v411
    %1378 = vmatprep.subr.mxu0 %v414
    %1379 = vmatpush1.msra.mxu0 %v413
    %1380 = vmatprep.subr.mxu0 %v416
    %1381 = vmatpush1.msra.mxu0 %v415
    %1382 = vmatprep.subr.mxu0 %v418
    %1383 = vmatpush1.msra.mxu0 %v417
    %1384 = vmatprep.subr.mxu0 %v420
    %1385 = vmatpush1.msra.mxu0 %v419
    %1386 = vmatprep.subr.mxu0 %v422
    %1387 = vmatpush1.msra.mxu0 %v421
    %1388 = vmatprep.subr.mxu0 %v424
    %1389 = vmatpush1.msra.mxu0 %v423
    %1390 = vmatprep.subr.mxu0 %v426
    %1391 = vmatpush1.msra.mxu0 %v425
    %1392 = vmatprep.subr.mxu0 0.0
    %1393 = vmatpush1.msra.mxu0 0.0
    %1394 = vmatprep.subr.mxu0 0.0
    %1395 = vmatpush1.msra.mxu0 0.0
    %1396 = vmatprep.subr.mxu0 0.0
    %1397 = vmatpush1.msra.mxu0 0.0
    %1398 = vmatprep.subr.mxu0 0.0
    %1399 = vmatpush1.msra.mxu0 0.0
    %1400 = vmatprep.subr.mxu0 0.0
    %1401 = vmatpush1.msra.mxu0 0.0
    %1402 = vmatprep.subr.mxu0 0.0
    %1403 = vmatpush1.msra.mxu0 0.0
    %1404 = vmatprep.subr.mxu0 0.0
    %1405 = vmatpush1.msra.mxu0 0.0
    %1406 = vmatprep.subr.mxu0 0.0
    %1407 = vmatpush1.msra.mxu0 0.0
    %1408 = vmatprep.subr.mxu0 0.0
    %1409 = vmatpush1.msra.mxu0 0.0
    %1410 = vmatprep.subr.mxu0 0.0
    %1411 = vmatpush1.msra.mxu0 0.0
    %1412 = vmatprep.subr.mxu0 0.0
    %1413 = vmatpush1.msra.mxu0 0.0
    %1414 = vmatprep.subr.mxu0 0.0
    %1415 = vmatpush1.msra.mxu0 0.0
    %1416 = vmatprep.subr.mxu0 0.0
    %1417 = vmatpush1.msra.mxu0 0.0
    %1418 = vmatprep.subr.mxu0 0.0
    %1419 = vmatpush1.msra.mxu0 0.0
    %1420 = vmatprep.subr.mxu0 0.0
    %1421 = vmatpush1.msra.mxu0 0.0
    %1422 = vmatprep.subr.mxu0 0.0
    %1423 = vmatpush1.msra.mxu0 0.0
    %1424 = vmatprep.subr.mxu0 0.0
    %1425 = vmatpush1.msra.mxu0 0.0
    %1426 = vmatprep.subr.mxu0 0.0
    %1427 = vmatpush1.msra.mxu0 0.0
    %1428 = vmatprep.subr.mxu0 0.0
    %1429 = vmatpush1.msra.mxu0 0.0
    %1430 = vmatprep.subr.mxu0 0.0
    %1431 = vmatpush1.msra.mxu0 0.0
    %1432 = vmatprep.subr.mxu0 0.0
    %1433 = vmatpush1.msra.mxu0 0.0
    %1434 = vmatprep.subr.mxu0 0.0
    %1435 = vmatpush1.msra.mxu0 0.0
    %1436 = vmatprep.subr.mxu0 0.0
    %1437 = vmatpush1.msra.mxu0 0.0
    %1438 = vmatprep.subr.mxu0 0.0
    %1439 = vmatpush1.msra.mxu0 0.0
    %1440 = vmatprep.mubr.f32.mxu0 0.0
    %1441 = vmatmul.mubr.f32.gmra.mrb[0].mxu0 %v1374
    %v1442 = vpop.f32.mrb[0].mxu0
    %v1443 = vadd.f32 0.0, %v1442
    %v1444 = vpop.f32.mrb[0].mxu0
    %v1445 = vadd.f32 0.0, %v1444
    %1446 = vdwg.mxu0
    %v1447 = vld [vmem:[#allocation2 + $0x70] sm:$0xff]
    %v1448 = vadd.f32 %v1447, %v1443
    %v1449 = vld [vmem:[#allocation2 + $0x8] sm:$0xff]
    %v1450 = vadd.f32 %v1449, %v1445
    %v1451 = vxor.u32 %v1448, 2147483648
    %v1452 = vmul.f32 %v1451, 1.442695
    %v1453 = vpow.pop %v1452
    %v1454 = vadd.f32 %v1453, 1.0
    %v1455 = vrcp.pop %v1454
    %v1456 = vmul.f32 1.0, %v1455
    %v1457 = vtanh.pop %v1448
    %v1458 = vmul.f32 %v1456, %v1333
    %1460 = vrot.lane.b32.xlu0 %v1457, 64
    %v1461 = vpop.permute.xlu0 %1460
    %v1463 = vmul.f32 %v1456, %v1461
    %1465 = vrot.lane.b32.xlu0 %v1463, 32
    %v1466 = vpop.permute.xlu0 %1465
    %v1468 = vadd.f32 %v1458, %v1466
    %v1469 = vtanh.pop %v1468
    %1471 = vrot.lane.b32.xlu0 %v1469, 64
    %v1472 = vpop.permute.xlu0 %1471
    %v1474 = vmul.f32 %v1456, %v1472
    %v1475 = vxor.u32 %v1450, 2147483648
    %v1476 = vmul.f32 %v1475, 1.442695
    %v1477 = vpow.pop %v1476
    %v1478 = vadd.f32 %v1477, 1.0
    %v1479 = vrcp.pop %v1478
    %v1480 = vmul.f32 1.0, %v1479
    %v1481 = vtanh.pop %v1450
    %v1482 = vmul.f32 %v1480, %v1357
    %1484 = vrot.lane.b32.xlu0 %v1481, 64
    %v1485 = vpop.permute.xlu0 %1484
    %v1487 = vmul.f32 %v1480, %v1485
    %1489 = vrot.lane.b32.xlu0 %v1487, 32
    %v1490 = vpop.permute.xlu0 %1489
    %v1492 = vadd.f32 %v1482, %v1490
    %v1493 = vtanh.pop %v1492
    %1495 = vrot.lane.b32.xlu0 %v1493, 64
    %v1496 = vpop.permute.xlu0 %1495
    %v1498 = vmul.f32 %v1480, %v1496
    %1500 = vrot.lane.b32.xlu0 %v1474, 32
    %v1501 = vpop.permute.xlu0 %1500
    %1504 = vrot.lane.b32.xlu0 %v1498, 64
    %v1505 = vpop.permute.xlu0 %1504
    %v1507 = vsel %vm561, %v1501, %v1505
    %v1508 = vlaneseq
    %v1509 = vshrl.u32 %v1508, 7
    %v1510 = vld [vmem:[#allocation9] sm:$0x1]
    %v1512 = vlaneseq
    %v1513 = vshrl.u32 %v1512, 7
    %v1514 = vsub.s32 0, %v1513
    %v1515 = vrot.slane %v1510, %v1514
    %vm1517 = vcmp.lt.s32.totalorder %v1509, 3
    %v1518 = vsel %vm1517, %v1507, %v1515
    %v1519 = vld [vmem:[%s8] sm:$0xff]
    %v1520 = vld [vmem:[%s8 + $0x8] sm:$0xff]
    %v1521 = vld [vmem:[%s8 + $0x10] sm:$0xff]
    %v1522 = vld [vmem:[%s8 + $0x18] sm:$0xff]
    %v1523 = vld [vmem:[%s8 + $0x20] sm:$0xff]
    %v1524 = vld [vmem:[%s8 + $0x28] sm:$0xff]
    %v1525 = vld [vmem:[%s8 + $0x30] sm:$0xff]
    %v1526 = vld [vmem:[%s8 + $0x38] sm:$0xff]
    %v1527 = vld [vmem:[%s8 + $0x40] sm:$0xff]
    %v1528 = vld [vmem:[%s8 + $0x48] sm:$0xff]
    %v1529 = vld [vmem:[%s8 + $0x50] sm:$0xff]
    %v1530 = vld [vmem:[%s8 + $0x58] sm:$0xff]
    %v1531 = vld [vmem:[%s8 + $0x60] sm:$0xff]
    %v1532 = vld [vmem:[%s8 + $0x68] sm:$0xff]
    %v1533 = vld [vmem:[%s8 + $0x70] sm:$0xff]
    %v1534 = vld [vmem:[%s8 + $0x78] sm:$0xff]
    %v1535 = vld [vmem:[%s10] sm:$0x3]
    %v1537 = vlaneseq
    %v1538 = vshrl.u32 %v1537, 7
    %v1539 = vsub.s32 0, %v1538
    %v1540 = vrot.slane %v1535, %v1539
    %v1541 = vlaneseq
    %v1542 = vshrl.u32 %v1541, 7
    %v1543 = vsub.s32 1, %v1542
    %v1544 = vrot.slane %v1535, %v1543
    %v1548 = vsel %vm148, %v1518, 0
    %1550 = vmatprep.subr.mxu0 %v1520
    %1551 = vmatpush1.msra.mxu0 %v1519
    %1552 = vmatprep.subr.mxu0 %v1522
    %1553 = vmatpush1.msra.mxu0 %v1521
    %1554 = vmatprep.subr.mxu0 %v1524
    %1555 = vmatpush1.msra.mxu0 %v1523
    %1556 = vmatprep.subr.mxu0 %v1526
    %1557 = vmatpush1.msra.mxu0 %v1525
    %1558 = vmatprep.subr.mxu0 %v1528
    %1559 = vmatpush1.msra.mxu0 %v1527
    %1560 = vmatprep.subr.mxu0 %v1530
    %1561 = vmatpush1.msra.mxu0 %v1529
    %1562 = vmatprep.subr.mxu0 %v1532
    %1563 = vmatpush1.msra.mxu0 %v1531
    %1564 = vmatprep.subr.mxu0 %v1534
    %1565 = vmatpush1.msra.mxu0 %v1533
    %1566 = vmatprep.subr.mxu0 0.0
    %1567 = vmatpush1.msra.mxu0 0.0
    %1568 = vmatprep.subr.mxu0 0.0
    %1569 = vmatpush1.msra.mxu0 0.0
    %1570 = vmatprep.subr.mxu0 0.0
    %1571 = vmatpush1.msra.mxu0 0.0
    %1572 = vmatprep.subr.mxu0 0.0
    %1573 = vmatpush1.msra.mxu0 0.0
    %1574 = vmatprep.subr.mxu0 0.0
    %1575 = vmatpush1.msra.mxu0 0.0
    %1576 = vmatprep.subr.mxu0 0.0
    %1577 = vmatpush1.msra.mxu0 0.0
    %1578 = vmatprep.subr.mxu0 0.0
    %1579 = vmatpush1.msra.mxu0 0.0
    %1580 = vmatprep.subr.mxu0 0.0
    %1581 = vmatpush1.msra.mxu0 0.0
    %1582 = vmatprep.subr.mxu0 0.0
    %1583 = vmatpush1.msra.mxu0 0.0
    %1584 = vmatprep.subr.mxu0 0.0
    %1585 = vmatpush1.msra.mxu0 0.0
    %1586 = vmatprep.subr.mxu0 0.0
    %1587 = vmatpush1.msra.mxu0 0.0
    %1588 = vmatprep.subr.mxu0 0.0
    %1589 = vmatpush1.msra.mxu0 0.0
    %1590 = vmatprep.subr.mxu0 0.0
    %1591 = vmatpush1.msra.mxu0 0.0
    %1592 = vmatprep.subr.mxu0 0.0
    %1593 = vmatpush1.msra.mxu0 0.0
    %1594 = vmatprep.subr.mxu0 0.0
    %1595 = vmatpush1.msra.mxu0 0.0
    %1596 = vmatprep.subr.mxu0 0.0
    %1597 = vmatpush1.msra.mxu0 0.0
    %1598 = vmatprep.subr.mxu0 0.0
    %1599 = vmatpush1.msra.mxu0 0.0
    %1600 = vmatprep.subr.mxu0 0.0
    %1601 = vmatpush1.msra.mxu0 0.0
    %1602 = vmatprep.subr.mxu0 0.0
    %1603 = vmatpush1.msra.mxu0 0.0
    %1604 = vmatprep.subr.mxu0 0.0
    %1605 = vmatpush1.msra.mxu0 0.0
    %1606 = vmatprep.subr.mxu0 0.0
    %1607 = vmatpush1.msra.mxu0 0.0
    %1608 = vmatprep.subr.mxu0 0.0
    %1609 = vmatpush1.msra.mxu0 0.0
    %1610 = vmatprep.subr.mxu0 0.0
    %1611 = vmatpush1.msra.mxu0 0.0
    %1612 = vmatprep.subr.mxu0 0.0
    %1613 = vmatpush1.msra.mxu0 0.0
    %1614 = vmatprep.mubr.f32.mxu0 0.0
    %1615 = vmatmul.mubr.f32.gmra.mrb[0].mxu0 %v1548
    %v1616 = vpop.f32.mrb[0].mxu0
    %v1617 = vadd.f32 %v1540, %v1616
    %v1618 = vpop.f32.mrb[0].mxu0
    %v1619 = vadd.f32 %v1544, %v1618
    %1620 = vdwg.mxu0
    %v1623 = vcombine.low %v1617, %v1619
    %1625 = vst [vmem:[#allocation3] sm:$0xff] %v1623
    %v1626 = vld [vmem:[#allocation15] sm:$0xff]
    %v1627 = vld [vmem:[#allocation15 + $0x8] sm:$0xff]
    %v1628 = vld [vmem:[#allocation15 + $0x10] sm:$0xff]
    %v1629 = vld [vmem:[#allocation15 + $0x18] sm:$0xff]
    %v1630 = vld [vmem:[#allocation15 + $0x20] sm:$0xff]
    %v1631 = vld [vmem:[#allocation15 + $0x28] sm:$0xff]
    %v1632 = vld [vmem:[#allocation15 + $0x30] sm:$0xff]
    %v1633 = vld [vmem:[#allocation15 + $0x38] sm:$0xff]
    %v1634 = vld [vmem:[#allocation15 + $0x40] sm:$0xff]
    %v1635 = vld [vmem:[#allocation15 + $0x48] sm:$0xff]
    %v1636 = vld [vmem:[#allocation15 + $0x50] sm:$0xff]
    %v1637 = vld [vmem:[#allocation15 + $0x58] sm:$0xff]
    %v1638 = vld [vmem:[#allocation15 + $0x60] sm:$0xff]
    %v1639 = vld [vmem:[#allocation15 + $0x68] sm:$0xff]
    %v1640 = vld [vmem:[#allocation15 + $0x70] sm:$0xff]
    %v1641 = vld [vmem:[#allocation15 + $0x78] sm:$0xff]
    %1642 = vmatprep.subr.mxu0 %v1627
    %1643 = vmatpush1.msra.mxu0 %v1626
    %1644 = vmatprep.subr.mxu0 %v1629
    %1645 = vmatpush1.msra.mxu0 %v1628
    %1646 = vmatprep.subr.mxu0 %v1631
    %1647 = vmatpush1.msra.mxu0 %v1630
    %1648 = vmatprep.subr.mxu0 %v1633
    %1649 = vmatpush1.msra.mxu0 %v1632
    %1650 = vmatprep.subr.mxu0 %v1635
    %1651 = vmatpush1.msra.mxu0 %v1634
    %1652 = vmatprep.subr.mxu0 %v1637
    %1653 = vmatpush1.msra.mxu0 %v1636
    %1654 = vmatprep.subr.mxu0 %v1639
    %1655 = vmatpush1.msra.mxu0 %v1638
    %1656 = vmatprep.subr.mxu0 %v1641
    %1657 = vmatpush1.msra.mxu0 %v1640
    %1658 = vmatprep.subr.mxu0 0.0
    %1659 = vmatpush1.msra.mxu0 0.0
    %1660 = vmatprep.subr.mxu0 0.0
    %1661 = vmatpush1.msra.mxu0 0.0
    %1662 = vmatprep.subr.mxu0 0.0
    %1663 = vmatpush1.msra.mxu0 0.0
    %1664 = vmatprep.subr.mxu0 0.0
    %1665 = vmatpush1.msra.mxu0 0.0
    %1666 = vmatprep.subr.mxu0 0.0
    %1667 = vmatpush1.msra.mxu0 0.0
    %1668 = vmatprep.subr.mxu0 0.0
    %1669 = vmatpush1.msra.mxu0 0.0
    %1670 = vmatprep.subr.mxu0 0.0
    %1671 = vmatpush1.msra.mxu0 0.0
    %1672 = vmatprep.subr.mxu0 0.0
    %1673 = vmatpush1.msra.mxu0 0.0
    %1674 = vmatprep.subr.mxu0 0.0
    %1675 = vmatpush1.msra.mxu0 0.0
    %1676 = vmatprep.subr.mxu0 0.0
    %1677 = vmatpush1.msra.mxu0 0.0
    %1678 = vmatprep.subr.mxu0 0.0
    %1679 = vmatpush1.msra.mxu0 0.0
    %1680 = vmatprep.subr.mxu0 0.0
    %1681 = vmatpush1.msra.mxu0 0.0
    %1682 = vmatprep.subr.mxu0 0.0
    %1683 = vmatpush1.msra.mxu0 0.0
    %1684 = vmatprep.subr.mxu0 0.0
    %1685 = vmatpush1.msra.mxu0 0.0
    %1686 = vmatprep.subr.mxu0 0.0
    %1687 = vmatpush1.msra.mxu0 0.0
    %1688 = vmatprep.subr.mxu0 0.0
    %1689 = vmatpush1.msra.mxu0 0.0
    %1690 = vmatprep.subr.mxu0 0.0
    %1691 = vmatpush1.msra.mxu0 0.0
    %1692 = vmatprep.subr.mxu0 0.0
    %1693 = vmatpush1.msra.mxu0 0.0
    %1694 = vmatprep.subr.mxu0 0.0
    %1695 = vmatpush1.msra.mxu0 0.0
    %1696 = vmatprep.subr.mxu0 0.0
    %1697 = vmatpush1.msra.mxu0 0.0
    %1698 = vmatprep.subr.mxu0 0.0
    %1699 = vmatpush1.msra.mxu0 0.0
    %1700 = vmatprep.subr.mxu0 0.0
    %1701 = vmatpush1.msra.mxu0 0.0
    %1702 = vmatprep.subr.mxu0 0.0
    %1703 = vmatpush1.msra.mxu0 0.0
    %1704 = vmatprep.subr.mxu0 0.0
    %1705 = vmatpush1.msra.mxu0 0.0
    %1706 = vmatprep.mubr.f32.mxu0 0.0
    %1707 = vmatmul.mubr.f32.gmra.mrb[0].mxu0 %v428
    %v1708 = vpop.f32.mrb[0].mxu0
    %v1709 = vadd.f32 0.0, %v1708
    %v1710 = vpop.f32.mrb[0].mxu0
    %v1711 = vadd.f32 0.0, %v1710
    %1712 = vdwg.mxu0
    %v1713 = vld [vmem:[#allocation3] sm:$0x1]
    %v1714 = vadd.f32 %v1713, %v1709
    %v1715 = vld [vmem:[#allocation3 + $0x7] sm:$0x1]
    %v1716 = vadd.f32 %v1715, %v1711
    %v1717 = vxor.u32 %v1714, 2147483648
    %v1718 = vmul.f32 %v1717, 1.442695
    %v1719 = vpow.pop %v1718
    %v1720 = vadd.f32 %v1719, 1.0
    %v1721 = vrcp.pop %v1720
    %v1722 = vmul.f32 1.0, %v1721
    %v1723 = vtanh.pop %v1714
    %v1724 = vmul.f32 %v1722, 0.0
    %1726 = vrot.lane.b32.xlu0 %v1723, 64
    %v1727 = vpop.permute.xlu0 %1726
    %v1729 = vmul.f32 %v1722, %v1727
    %1731 = vrot.lane.b32.xlu0 %v1729, 32
    %v1732 = vpop.permute.xlu0 %1731
    %v1734 = vadd.f32 %v1724, %v1732
    %v1735 = vtanh.pop %v1734
    %1737 = vrot.lane.b32.xlu0 %v1735, 64
    %v1738 = vpop.permute.xlu0 %1737
    %v1740 = vmul.f32 %v1722, %v1738
    %v1741 = vxor.u32 %v1716, 2147483648
    %v1742 = vmul.f32 %v1741, 1.442695
    %v1743 = vpow.pop %v1742
    %v1744 = vadd.f32 %v1743, 1.0
    %v1745 = vrcp.pop %v1744
    %v1746 = vmul.f32 1.0, %v1745
    %v1747 = vtanh.pop %v1716
    %v1748 = vmul.f32 %v1746, 0.0
    %1750 = vrot.lane.b32.xlu0 %v1747, 64
    %v1751 = vpop.permute.xlu0 %1750
    %v1753 = vmul.f32 %v1746, %v1751
    %1755 = vrot.lane.b32.xlu0 %v1753, 32
    %v1756 = vpop.permute.xlu0 %1755
    %v1758 = vadd.f32 %v1748, %v1756
    %v1759 = vtanh.pop %v1758
    %1761 = vrot.lane.b32.xlu0 %v1759, 64
    %v1762 = vpop.permute.xlu0 %1761
    %v1764 = vmul.f32 %v1746, %v1762
    %v1766 = vlaneseq
    %v1767 = vshrl.u32 %v1766, 7
    %v1768 = vsub.s32 0, %v1767
    %v1769 = vrot.slane %v1740, %v1768
    %1770 = vrot.lane.b32.xlu0 %v1769, 32
    %v1771 = vpop.permute.xlu0 %1770
    %v1774 = vlaneseq
    %v1775 = vshrl.u32 %v1774, 7
    %v1776 = vsub.s32 0, %v1775
    %v1777 = vrot.slane %v1764, %v1776
    %1778 = vrot.lane.b32.xlu0 %v1777, 64
    %v1779 = vpop.permute.xlu0 %1778
    %v1781 = vsel %vm561, %v1771, %v1779
    %v1783 = vsel %vm148, %v1781, 0
    %1785 = vmatprep.subr.mxu0 %v1627
    %1786 = vmatpush1.msra.mxu0 %v1626
    %1787 = vmatprep.subr.mxu0 %v1629
    %1788 = vmatpush1.msra.mxu0 %v1628
    %1789 = vmatprep.subr.mxu0 %v1631
    %1790 = vmatpush1.msra.mxu0 %v1630
    %1791 = vmatprep.subr.mxu0 %v1633
    %1792 = vmatpush1.msra.mxu0 %v1632
    %1793 = vmatprep.subr.mxu0 %v1635
    %1794 = vmatpush1.msra.mxu0 %v1634
    %1795 = vmatprep.subr.mxu0 %v1637
    %1796 = vmatpush1.msra.mxu0 %v1636
    %1797 = vmatprep.subr.mxu0 %v1639
    %1798 = vmatpush1.msra.mxu0 %v1638
    %1799 = vmatprep.subr.mxu0 %v1641
    %1800 = vmatpush1.msra.mxu0 %v1640
    %1801 = vmatprep.subr.mxu0 0.0
    %1802 = vmatpush1.msra.mxu0 0.0
    %1803 = vmatprep.subr.mxu0 0.0
    %1804 = vmatpush1.msra.mxu0 0.0
    %1805 = vmatprep.subr.mxu0 0.0
    %1806 = vmatpush1.msra.mxu0 0.0
    %1807 = vmatprep.subr.mxu0 0.0
    %1808 = vmatpush1.msra.mxu0 0.0
    %1809 = vmatprep.subr.mxu0 0.0
    %1810 = vmatpush1.msra.mxu0 0.0
    %1811 = vmatprep.subr.mxu0 0.0
    %1812 = vmatpush1.msra.mxu0 0.0
    %1813 = vmatprep.subr.mxu0 0.0
    %1814 = vmatpush1.msra.mxu0 0.0
    %1815 = vmatprep.subr.mxu0 0.0
    %1816 = vmatpush1.msra.mxu0 0.0
    %1817 = vmatprep.subr.mxu0 0.0
    %1818 = vmatpush1.msra.mxu0 0.0
    %1819 = vmatprep.subr.mxu0 0.0
    %1820 = vmatpush1.msra.mxu0 0.0
    %1821 = vmatprep.subr.mxu0 0.0
    %1822 = vmatpush1.msra.mxu0 0.0
    %1823 = vmatprep.subr.mxu0 0.0
    %1824 = vmatpush1.msra.mxu0 0.0
    %1825 = vmatprep.subr.mxu0 0.0
    %1826 = vmatpush1.msra.mxu0 0.0
    %1827 = vmatprep.subr.mxu0 0.0
    %1828 = vmatpush1.msra.mxu0 0.0
    %1829 = vmatprep.subr.mxu0 0.0
    %1830 = vmatpush1.msra.mxu0 0.0
    %1831 = vmatprep.subr.mxu0 0.0
    %1832 = vmatpush1.msra.mxu0 0.0
    %1833 = vmatprep.subr.mxu0 0.0
    %1834 = vmatpush1.msra.mxu0 0.0
    %1835 = vmatprep.subr.mxu0 0.0
    %1836 = vmatpush1.msra.mxu0 0.0
    %1837 = vmatprep.subr.mxu0 0.0
    %1838 = vmatpush1.msra.mxu0 0.0
    %1839 = vmatprep.subr.mxu0 0.0
    %1840 = vmatpush1.msra.mxu0 0.0
    %1841 = vmatprep.subr.mxu0 0.0
    %1842 = vmatpush1.msra.mxu0 0.0
    %1843 = vmatprep.subr.mxu0 0.0
    %1844 = vmatpush1.msra.mxu0 0.0
    %1845 = vmatprep.subr.mxu0 0.0
    %1846 = vmatpush1.msra.mxu0 0.0
    %1847 = vmatprep.subr.mxu0 0.0
    %1848 = vmatpush1.msra.mxu0 0.0
    %1849 = vmatprep.mubr.f32.mxu0 0.0
    %1850 = vmatmul.mubr.f32.gmra.mrb[0].mxu0 %v1783
    %v1851 = vpop.f32.mrb[0].mxu0
    %v1852 = vadd.f32 0.0, %v1851
    %v1853 = vpop.f32.mrb[0].mxu0
    %v1854 = vadd.f32 0.0, %v1853
    %1855 = vdwg.mxu0
    %v1856 = vld [vmem:[#allocation3 + $0x1] sm:$0x1]
    %v1857 = vadd.f32 %v1856, %v1852
    %v1858 = vld [vmem:[#allocation3 + $0x6] sm:$0x1]
    %v1859 = vadd.f32 %v1858, %v1854
    %v1860 = vxor.u32 %v1857, 2147483648
    %v1861 = vmul.f32 %v1860, 1.442695
    %v1862 = vpow.pop %v1861
    %v1863 = vadd.f32 %v1862, 1.0
    %v1864 = vrcp.pop %v1863
    %v1865 = vmul.f32 1.0, %v1864
    %v1866 = vtanh.pop %v1857
    %v1867 = vmul.f32 %v1865, %v1734
    %1869 = vrot.lane.b32.xlu0 %v1866, 64
    %v1870 = vpop.permute.xlu0 %1869
    %v1872 = vmul.f32 %v1865, %v1870
    %1874 = vrot.lane.b32.xlu0 %v1872, 32
    %v1875 = vpop.permute.xlu0 %1874
    %v1877 = vadd.f32 %v1867, %v1875
    %v1878 = vtanh.pop %v1877
    %1880 = vrot.lane.b32.xlu0 %v1878, 64
    %v1881 = vpop.permute.xlu0 %1880
    %v1883 = vmul.f32 %v1865, %v1881
    %v1884 = vxor.u32 %v1859, 2147483648
    %v1885 = vmul.f32 %v1884, 1.442695
    %v1886 = vpow.pop %v1885
    %v1887 = vadd.f32 %v1886, 1.0
    %v1888 = vrcp.pop %v1887
    %v1889 = vmul.f32 1.0, %v1888
    %v1890 = vtanh.pop %v1859
    %v1891 = vmul.f32 %v1889, %v1758
    %1893 = vrot.lane.b32.xlu0 %v1890, 64
    %v1894 = vpop.permute.xlu0 %1893
    %v1896 = vmul.f32 %v1889, %v1894
    %1898 = vrot.lane.b32.xlu0 %v1896, 32
    %v1899 = vpop.permute.xlu0 %1898
    %v1901 = vadd.f32 %v1891, %v1899
    %v1902 = vtanh.pop %v1901
    %1904 = vrot.lane.b32.xlu0 %v1902, 64
    %v1905 = vpop.permute.xlu0 %1904
    %v1907 = vmul.f32 %v1889, %v1905
    %v1909 = vlaneseq
    %v1910 = vshrl.u32 %v1909, 7
    %v1911 = vsub.s32 0, %v1910
    %v1912 = vrot.slane %v1883, %v1911
    %1913 = vrot.lane.b32.xlu0 %v1912, 32
    %v1914 = vpop.permute.xlu0 %1913
    %v1917 = vlaneseq
    %v1918 = vshrl.u32 %v1917, 7
    %v1919 = vsub.s32 0, %v1918
    %v1920 = vrot.slane %v1907, %v1919
    %1921 = vrot.lane.b32.xlu0 %v1920, 64
    %v1922 = vpop.permute.xlu0 %1921
    %v1924 = vsel %vm561, %v1914, %v1922
    %v1926 = vsel %vm148, %v1924, 0
    %1928 = vmatprep.subr.mxu0 %v1627
    %1929 = vmatpush1.msra.mxu0 %v1626
    %1930 = vmatprep.subr.mxu0 %v1629
    %1931 = vmatpush1.msra.mxu0 %v1628
    %1932 = vmatprep.subr.mxu0 %v1631
    %1933 = vmatpush1.msra.mxu0 %v1630
    %1934 = vmatprep.subr.mxu0 %v1633
    %1935 = vmatpush1.msra.mxu0 %v1632
    %1936 = vmatprep.subr.mxu0 %v1635
    %1937 = vmatpush1.msra.mxu0 %v1634
    %1938 = vmatprep.subr.mxu0 %v1637
    %1939 = vmatpush1.msra.mxu0 %v1636
    %1940 = vmatprep.subr.mxu0 %v1639
    %1941 = vmatpush1.msra.mxu0 %v1638
    %1942 = vmatprep.subr.mxu0 %v1641
    %1943 = vmatpush1.msra.mxu0 %v1640
    %1944 = vmatprep.subr.mxu0 0.0
    %1945 = vmatpush1.msra.mxu0 0.0
    %1946 = vmatprep.subr.mxu0 0.0
    %1947 = vmatpush1.msra.mxu0 0.0
    %1948 = vmatprep.subr.mxu0 0.0
    %1949 = vmatpush1.msra.mxu0 0.0
    %1950 = vmatprep.subr.mxu0 0.0
    %1951 = vmatpush1.msra.mxu0 0.0
    %1952 = vmatprep.subr.mxu0 0.0
    %1953 = vmatpush1.msra.mxu0 0.0
    %1954 = vmatprep.subr.mxu0 0.0
    %1955 = vmatpush1.msra.mxu0 0.0
    %1956 = vmatprep.subr.mxu0 0.0
    %1957 = vmatpush1.msra.mxu0 0.0
    %1958 = vmatprep.subr.mxu0 0.0
    %1959 = vmatpush1.msra.mxu0 0.0
    %1960 = vmatprep.subr.mxu0 0.0
    %1961 = vmatpush1.msra.mxu0 0.0
    %1962 = vmatprep.subr.mxu0 0.0
    %1963 = vmatpush1.msra.mxu0 0.0
    %1964 = vmatprep.subr.mxu0 0.0
    %1965 = vmatpush1.msra.mxu0 0.0
    %1966 = vmatprep.subr.mxu0 0.0
    %1967 = vmatpush1.msra.mxu0 0.0
    %1968 = vmatprep.subr.mxu0 0.0
    %1969 = vmatpush1.msra.mxu0 0.0
    %1970 = vmatprep.subr.mxu0 0.0
    %1971 = vmatpush1.msra.mxu0 0.0
    %1972 = vmatprep.subr.mxu0 0.0
    %1973 = vmatpush1.msra.mxu0 0.0
    %1974 = vmatprep.subr.mxu0 0.0
    %1975 = vmatpush1.msra.mxu0 0.0
    %1976 = vmatprep.subr.mxu0 0.0
    %1977 = vmatpush1.msra.mxu0 0.0
    %1978 = vmatprep.subr.mxu0 0.0
    %1979 = vmatpush1.msra.mxu0 0.0
    %1980 = vmatprep.subr.mxu0 0.0
    %1981 = vmatpush1.msra.mxu0 0.0
    %1982 = vmatprep.subr.mxu0 0.0
    %1983 = vmatpush1.msra.mxu0 0.0
    %1984 = vmatprep.subr.mxu0 0.0
    %1985 = vmatpush1.msra.mxu0 0.0
    %1986 = vmatprep.subr.mxu0 0.0
    %1987 = vmatpush1.msra.mxu0 0.0
    %1988 = vmatprep.subr.mxu0 0.0
    %1989 = vmatpush1.msra.mxu0 0.0
    %1990 = vmatprep.subr.mxu0 0.0
    %1991 = vmatpush1.msra.mxu0 0.0
    %1992 = vmatprep.mubr.f32.mxu0 0.0
    %1993 = vmatmul.mubr.f32.gmra.mrb[0].mxu0 %v1926
    %v1994 = vpop.f32.mrb[0].mxu0
    %v1995 = vadd.f32 0.0, %v1994
    %v1996 = vpop.f32.mrb[0].mxu0
    %v1997 = vadd.f32 0.0, %v1996
    %1998 = vdwg.mxu0
    %v1999 = vld [vmem:[#allocation3 + $0x2] sm:$0x1]
    %v2000 = vadd.f32 %v1999, %v1995
    %v2001 = vld [vmem:[#allocation3 + $0x5] sm:$0x1]
    %v2002 = vadd.f32 %v2001, %v1997
    %v2003 = vxor.u32 %v2000, 2147483648
    %v2004 = vmul.f32 %v2003, 1.442695
    %v2005 = vpow.pop %v2004
    %v2006 = vadd.f32 %v2005, 1.0
    %v2007 = vrcp.pop %v2006
    %v2008 = vmul.f32 1.0, %v2007
    %v2009 = vtanh.pop %v2000
    %v2010 = vmul.f32 %v2008, %v1877
    %2012 = vrot.lane.b32.xlu0 %v2009, 64
    %v2013 = vpop.permute.xlu0 %2012
    %v2015 = vmul.f32 %v2008, %v2013
    %2017 = vrot.lane.b32.xlu0 %v2015, 32
    %v2018 = vpop.permute.xlu0 %2017
    %v2020 = vadd.f32 %v2010, %v2018
    %v2021 = vtanh.pop %v2020
    %2023 = vrot.lane.b32.xlu0 %v2021, 64
    %v2024 = vpop.permute.xlu0 %2023
    %v2026 = vmul.f32 %v2008, %v2024
    %v2027 = vxor.u32 %v2002, 2147483648
    %v2028 = vmul.f32 %v2027, 1.442695
    %v2029 = vpow.pop %v2028
    %v2030 = vadd.f32 %v2029, 1.0
    %v2031 = vrcp.pop %v2030
    %v2032 = vmul.f32 1.0, %v2031
    %v2033 = vtanh.pop %v2002
    %v2034 = vmul.f32 %v2032, %v1901
    %2036 = vrot.lane.b32.xlu0 %v2033, 64
    %v2037 = vpop.permute.xlu0 %2036
    %v2039 = vmul.f32 %v2032, %v2037
    %2041 = vrot.lane.b32.xlu0 %v2039, 32
    %v2042 = vpop.permute.xlu0 %2041
    %v2044 = vadd.f32 %v2034, %v2042
    %v2045 = vtanh.pop %v2044
    %2047 = vrot.lane.b32.xlu0 %v2045, 64
    %v2048 = vpop.permute.xlu0 %2047
    %v2050 = vmul.f32 %v2032, %v2048
    %v2052 = vlaneseq
    %v2053 = vshrl.u32 %v2052, 7
    %v2054 = vsub.s32 0, %v2053
    %v2055 = vrot.slane %v2026, %v2054
    %2056 = vrot.lane.b32.xlu0 %v2055, 32
    %v2057 = vpop.permute.xlu0 %2056
    %v2060 = vlaneseq
    %v2061 = vshrl.u32 %v2060, 7
    %v2062 = vsub.s32 0, %v2061
    %v2063 = vrot.slane %v2050, %v2062
    %2064 = vrot.lane.b32.xlu0 %v2063, 64
    %v2065 = vpop.permute.xlu0 %2064
    %v2067 = vsel %vm561, %v2057, %v2065
    %v2069 = vsel %vm148, %v2067, 0
    %2071 = vmatprep.subr.mxu0 %v1627
    %2072 = vmatpush1.msra.mxu0 %v1626
    %2073 = vmatprep.subr.mxu0 %v1629
    %2074 = vmatpush1.msra.mxu0 %v1628
    %2075 = vmatprep.subr.mxu0 %v1631
    %2076 = vmatpush1.msra.mxu0 %v1630
    %2077 = vmatprep.subr.mxu0 %v1633
    %2078 = vmatpush1.msra.mxu0 %v1632
    %2079 = vmatprep.subr.mxu0 %v1635
    %2080 = vmatpush1.msra.mxu0 %v1634
    %2081 = vmatprep.subr.mxu0 %v1637
    %2082 = vmatpush1.msra.mxu0 %v1636
    %2083 = vmatprep.subr.mxu0 %v1639
    %2084 = vmatpush1.msra.mxu0 %v1638
    %2085 = vmatprep.subr.mxu0 %v1641
    %2086 = vmatpush1.msra.mxu0 %v1640
    %2087 = vmatprep.subr.mxu0 0.0
    %2088 = vmatpush1.msra.mxu0 0.0
    %2089 = vmatprep.subr.mxu0 0.0
    %2090 = vmatpush1.msra.mxu0 0.0
    %2091 = vmatprep.subr.mxu0 0.0
    %2092 = vmatpush1.msra.mxu0 0.0
    %2093 = vmatprep.subr.mxu0 0.0
    %2094 = vmatpush1.msra.mxu0 0.0
    %2095 = vmatprep.subr.mxu0 0.0
    %2096 = vmatpush1.msra.mxu0 0.0
    %2097 = vmatprep.subr.mxu0 0.0
    %2098 = vmatpush1.msra.mxu0 0.0
    %2099 = vmatprep.subr.mxu0 0.0
    %2100 = vmatpush1.msra.mxu0 0.0
    %2101 = vmatprep.subr.mxu0 0.0
    %2102 = vmatpush1.msra.mxu0 0.0
    %2103 = vmatprep.subr.mxu0 0.0
    %2104 = vmatpush1.msra.mxu0 0.0
    %2105 = vmatprep.subr.mxu0 0.0
    %2106 = vmatpush1.msra.mxu0 0.0
    %2107 = vmatprep.subr.mxu0 0.0
    %2108 = vmatpush1.msra.mxu0 0.0
    %2109 = vmatprep.subr.mxu0 0.0
    %2110 = vmatpush1.msra.mxu0 0.0
    %2111 = vmatprep.subr.mxu0 0.0
    %2112 = vmatpush1.msra.mxu0 0.0
    %2113 = vmatprep.subr.mxu0 0.0
    %2114 = vmatpush1.msra.mxu0 0.0
    %2115 = vmatprep.subr.mxu0 0.0
    %2116 = vmatpush1.msra.mxu0 0.0
    %2117 = vmatprep.subr.mxu0 0.0
    %2118 = vmatpush1.msra.mxu0 0.0
    %2119 = vmatprep.subr.mxu0 0.0
    %2120 = vmatpush1.msra.mxu0 0.0
    %2121 = vmatprep.subr.mxu0 0.0
    %2122 = vmatpush1.msra.mxu0 0.0
    %2123 = vmatprep.subr.mxu0 0.0
    %2124 = vmatpush1.msra.mxu0 0.0
    %2125 = vmatprep.subr.mxu0 0.0
    %2126 = vmatpush1.msra.mxu0 0.0
    %2127 = vmatprep.subr.mxu0 0.0
    %2128 = vmatpush1.msra.mxu0 0.0
    %2129 = vmatprep.subr.mxu0 0.0
    %2130 = vmatpush1.msra.mxu0 0.0
    %2131 = vmatprep.subr.mxu0 0.0
    %2132 = vmatpush1.msra.mxu0 0.0
    %2133 = vmatprep.subr.mxu0 0.0
    %2134 = vmatpush1.msra.mxu0 0.0
    %2135 = vmatprep.mubr.f32.mxu0 0.0
    %2136 = vmatmul.mubr.f32.gmra.mrb[0].mxu0 %v2069
    %v2137 = vpop.f32.mrb[0].mxu0
    %v2138 = vadd.f32 0.0, %v2137
    %v2139 = vpop.f32.mrb[0].mxu0
    %v2140 = vadd.f32 0.0, %v2139
    %2141 = vdwg.mxu0
    %v2142 = vld [vmem:[#allocation3 + $0x3] sm:$0x1]
    %v2143 = vadd.f32 %v2142, %v2138
    %v2144 = vld [vmem:[#allocation3 + $0x4] sm:$0x1]
    %v2145 = vadd.f32 %v2144, %v2140
    %v2146 = vxor.u32 %v2143, 2147483648
    %v2147 = vmul.f32 %v2146, 1.442695
    %v2148 = vpow.pop %v2147
    %v2149 = vadd.f32 %v2148, 1.0
    %v2150 = vrcp.pop %v2149
    %v2151 = vmul.f32 1.0, %v2150
    %v2152 = vtanh.pop %v2143
    %v2153 = vmul.f32 %v2151, %v2020
    %2155 = vrot.lane.b32.xlu0 %v2152, 64
    %v2156 = vpop.permute.xlu0 %2155
    %v2158 = vmul.f32 %v2151, %v2156
    %2160 = vrot.lane.b32.xlu0 %v2158, 32
    %v2161 = vpop.permute.xlu0 %2160
    %v2163 = vadd.f32 %v2153, %v2161
    %v2164 = vtanh.pop %v2163
    %2166 = vrot.lane.b32.xlu0 %v2164, 64
    %v2167 = vpop.permute.xlu0 %2166
    %v2169 = vmul.f32 %v2151, %v2167
    %v2170 = vxor.u32 %v2145, 2147483648
    %v2171 = vmul.f32 %v2170, 1.442695
    %v2172 = vpow.pop %v2171
    %v2173 = vadd.f32 %v2172, 1.0
    %v2174 = vrcp.pop %v2173
    %v2175 = vmul.f32 1.0, %v2174
    %v2176 = vtanh.pop %v2145
    %v2177 = vmul.f32 %v2175, %v2044
    %2179 = vrot.lane.b32.xlu0 %v2176, 64
    %v2180 = vpop.permute.xlu0 %2179
    %v2182 = vmul.f32 %v2175, %v2180
    %2184 = vrot.lane.b32.xlu0 %v2182, 32
    %v2185 = vpop.permute.xlu0 %2184
    %v2187 = vadd.f32 %v2177, %v2185
    %v2188 = vtanh.pop %v2187
    %2190 = vrot.lane.b32.xlu0 %v2188, 64
    %v2191 = vpop.permute.xlu0 %2190
    %v2193 = vmul.f32 %v2175, %v2191
    %v2195 = vlaneseq
    %v2196 = vshrl.u32 %v2195, 7
    %v2197 = vsub.s32 0, %v2196
    %v2198 = vrot.slane %v2169, %v2197
    %2199 = vrot.lane.b32.xlu0 %v2198, 32
    %v2200 = vpop.permute.xlu0 %2199
    %v2203 = vlaneseq
    %v2204 = vshrl.u32 %v2203, 7
    %v2205 = vsub.s32 0, %v2204
    %v2206 = vrot.slane %v2193, %v2205
    %2207 = vrot.lane.b32.xlu0 %v2206, 64
    %v2208 = vpop.permute.xlu0 %2207
    %v2210 = vsel %vm561, %v2200, %v2208
    %v2211 = vmul.f32 %v219, %v2210
    %v2212 = vsub.f32 %v219, %v2210
    %v2213 = vand.u32 2147483647, %v2212
    %2215 = vrot.lane.b32.xlu0 %v2213, 64
    %v2216 = vpop.permute.xlu0 %2215
    %2219 = vrot.lane.b32.xlu0 %v2210, 64
    %v2220 = vpop.permute.xlu0 %2219
    %v2222 = vsel %vm148, %v2211, %v2216
    %v2223 = vsel %vm148, %v219, %v2220
    %v2224 = vld [vmem:[%s11] sm:$0xff]
    %v2225 = vld [vmem:[%s11 + $0x8] sm:$0xff]
    %v2226 = vld [vmem:[%s11 + $0x10] sm:$0xff]
    %v2227 = vld [vmem:[%s11 + $0x18] sm:$0xff]
    %v2228 = vld [vmem:[%s11 + $0x20] sm:$0xff]
    %v2229 = vld [vmem:[%s11 + $0x28] sm:$0xff]
    %v2230 = vld [vmem:[%s11 + $0x30] sm:$0xff]
    %v2231 = vld [vmem:[%s11 + $0x38] sm:$0xff]
    %v2232 = vld [vmem:[%s11 + $0x40] sm:$0xff]
    %v2233 = vld [vmem:[%s11 + $0x48] sm:$0xff]
    %v2234 = vld [vmem:[%s11 + $0x50] sm:$0xff]
    %v2235 = vld [vmem:[%s11 + $0x58] sm:$0xff]
    %v2236 = vld [vmem:[%s11 + $0x60] sm:$0xff]
    %v2237 = vld [vmem:[%s11 + $0x68] sm:$0xff]
    %v2238 = vld [vmem:[%s11 + $0x70] sm:$0xff]
    %v2239 = vld [vmem:[%s11 + $0x78] sm:$0xff]
    %v2240 = vld [vmem:[%s11 + $0x80] sm:$0xff]
    %v2241 = vld [vmem:[%s11 + $0x88] sm:$0xff]
    %v2242 = vld [vmem:[%s11 + $0x90] sm:$0xff]
    %v2243 = vld [vmem:[%s11 + $0x98] sm:$0xff]
    %v2244 = vld [vmem:[%s11 + $0xa0] sm:$0xff]
    %v2245 = vld [vmem:[%s11 + $0xa8] sm:$0xff]
    %v2246 = vld [vmem:[%s11 + $0xb0] sm:$0xff]
    %v2247 = vld [vmem:[%s11 + $0xb8] sm:$0xff]
    %v2248 = vld [vmem:[%s11 + $0xc0] sm:$0xff]
    %v2249 = vld [vmem:[%s11 + $0xc8] sm:$0xff]
    %v2250 = vld [vmem:[%s11 + $0xd0] sm:$0xff]
    %v2251 = vld [vmem:[%s11 + $0xd8] sm:$0xff]
    %v2252 = vld [vmem:[%s11 + $0xe0] sm:$0xff]
    %v2253 = vld [vmem:[%s11 + $0xe8] sm:$0xff]
    %v2254 = vld [vmem:[%s11 + $0xf0] sm:$0xff]
    %v2255 = vld [vmem:[%s11 + $0xf8] sm:$0xff]
    %v2256 = vld [vmem:[%s12] sm:$0x1]
    %2257 = vmatprep.subr.mxu0 0.0
    %2258 = vmatpush1.msra.mxu0 %v2224
    %2259 = vmatprep.subr.mxu0 0.0
    %2260 = vmatpush1.msra.mxu0 %v2225
    %2261 = vmatprep.subr.mxu0 0.0
    %2262 = vmatpush1.msra.mxu0 %v2226
    %2263 = vmatprep.subr.mxu0 0.0
    %2264 = vmatpush1.msra.mxu0 %v2227
    %2265 = vmatprep.subr.mxu0 0.0
    %2266 = vmatpush1.msra.mxu0 %v2228
    %2267 = vmatprep.subr.mxu0 0.0
    %2268 = vmatpush1.msra.mxu0 %v2229
    %2269 = vmatprep.subr.mxu0 0.0
    %2270 = vmatpush1.msra.mxu0 %v2230
    %2271 = vmatprep.subr.mxu0 0.0
    %2272 = vmatpush1.msra.mxu0 %v2231
    %2273 = vmatprep.subr.mxu0 0.0
    %2274 = vmatpush1.msra.mxu0 %v2232
    %2275 = vmatprep.subr.mxu0 0.0
    %2276 = vmatpush1.msra.mxu0 %v2233
    %2277 = vmatprep.subr.mxu0 0.0
    %2278 = vmatpush1.msra.mxu0 %v2234
    %2279 = vmatprep.subr.mxu0 0.0
    %2280 = vmatpush1.msra.mxu0 %v2235
    %2281 = vmatprep.subr.mxu0 0.0
    %2282 = vmatpush1.msra.mxu0 %v2236
    %2283 = vmatprep.subr.mxu0 0.0
    %2284 = vmatpush1.msra.mxu0 %v2237
    %2285 = vmatprep.subr.mxu0 0.0
    %2286 = vmatpush1.msra.mxu0 %v2238
    %2287 = vmatprep.subr.mxu0 0.0
    %2288 = vmatpush1.msra.mxu0 %v2239
    %2289 = vmatprep.subr.mxu0 0.0
    %2290 = vmatpush1.msra.mxu0 %v2240
    %2291 = vmatprep.subr.mxu0 0.0
    %2292 = vmatpush1.msra.mxu0 %v2241
    %2293 = vmatprep.subr.mxu0 0.0
    %2294 = vmatpush1.msra.mxu0 %v2242
    %2295 = vmatprep.subr.mxu0 0.0
    %2296 = vmatpush1.msra.mxu0 %v2243
    %2297 = vmatprep.subr.mxu0 0.0
    %2298 = vmatpush1.msra.mxu0 %v2244
    %2299 = vmatprep.subr.mxu0 0.0
    %2300 = vmatpush1.msra.mxu0 %v2245
    %2301 = vmatprep.subr.mxu0 0.0
    %2302 = vmatpush1.msra.mxu0 %v2246
    %2303 = vmatprep.subr.mxu0 0.0
    %2304 = vmatpush1.msra.mxu0 %v2247
    %2305 = vmatprep.subr.mxu0 0.0
    %2306 = vmatpush1.msra.mxu0 %v2248
    %2307 = vmatprep.subr.mxu0 0.0
    %2308 = vmatpush1.msra.mxu0 %v2249
    %2309 = vmatprep.subr.mxu0 0.0
    %2310 = vmatpush1.msra.mxu0 %v2250
    %2311 = vmatprep.subr.mxu0 0.0
    %2312 = vmatpush1.msra.mxu0 %v2251
    %2313 = vmatprep.subr.mxu0 0.0
    %2314 = vmatpush1.msra.mxu0 %v2252
    %2315 = vmatprep.subr.mxu0 0.0
    %2316 = vmatpush1.msra.mxu0 %v2253
    %2317 = vmatprep.subr.mxu0 0.0
    %2318 = vmatpush1.msra.mxu0 %v2254
    %2319 = vmatprep.subr.mxu0 0.0
    %2320 = vmatpush1.msra.mxu0 %v2255
    %2321 = vmatprep.mubr.f32.mxu0 %v2223
    %2322 = vmatmul.mubr.f32.gmra.mrb[0].mxu0 %v2222
    %v2323 = vpop.f32.mrb[0].mxu0
    %v2324 = vadd.f32 %v2256, %v2323
    %v2325 = vpop.f32.mrb[0].mxu0
    %2326 = vdwg.mxu0
    %v2327 = vxor.u32 %v2324, 2147483648
    %v2328 = vmul.f32 %v2327, 1.442695
    %v2329 = vpow.pop %v2328
    %v2330 = vadd.f32 %v2329, 1.0
    %v2331 = vrcp.pop %v2330
    %v2332 = vmul.f32 1.0, %v2331
    %v2333 = vld [vmem:[%s13] sm:$0xff]
    %v2334 = vld [vmem:[%s13 + $0x8] sm:$0xff]
    %v2335 = vld [vmem:[%s13 + $0x10] sm:$0xff]
    %v2336 = vld [vmem:[%s13 + $0x18] sm:$0xff]
    %v2337 = vld [vmem:[%s14] sm:$0x1]
    %v2339 = vsel %vm561, %v2332, 0
    %2341 = vmatprep.subr.mxu0 0.0
    %2342 = vmatpush1.msra.mxu0 %v2333
    %2343 = vmatprep.subr.mxu0 0.0
    %2344 = vmatpush1.msra.mxu0 %v2334
    %2345 = vmatprep.subr.mxu0 0.0
    %2346 = vmatpush1.msra.mxu0 %v2335
    %2347 = vmatprep.subr.mxu0 0.0
    %2348 = vmatpush1.msra.mxu0 %v2336
    %2349 = vmatprep.subr.mxu0 0.0
    %2350 = vmatpush1.msra.mxu0 0.0
    %2351 = vmatprep.subr.mxu0 0.0
    %2352 = vmatpush1.msra.mxu0 0.0
    %2353 = vmatprep.subr.mxu0 0.0
    %2354 = vmatpush1.msra.mxu0 0.0
    %2355 = vmatprep.subr.mxu0 0.0
    %2356 = vmatpush1.msra.mxu0 0.0
    %2357 = vmatprep.subr.mxu0 0.0
    %2358 = vmatpush1.msra.mxu0 0.0
    %2359 = vmatprep.subr.mxu0 0.0
    %2360 = vmatpush1.msra.mxu0 0.0
    %2361 = vmatprep.subr.mxu0 0.0
    %2362 = vmatpush1.msra.mxu0 0.0
    %2363 = vmatprep.subr.mxu0 0.0
    %2364 = vmatpush1.msra.mxu0 0.0
    %2365 = vmatprep.subr.mxu0 0.0
    %2366 = vmatpush1.msra.mxu0 0.0
    %2367 = vmatprep.subr.mxu0 0.0
    %2368 = vmatpush1.msra.mxu0 0.0
    %2369 = vmatprep.subr.mxu0 0.0
    %2370 = vmatpush1.msra.mxu0 0.0
    %2371 = vmatprep.subr.mxu0 0.0
    %2372 = vmatpush1.msra.mxu0 0.0
    %2373 = vmatprep.subr.mxu0 0.0
    %2374 = vmatpush1.msra.mxu0 0.0
    %2375 = vmatprep.subr.mxu0 0.0
    %2376 = vmatpush1.msra.mxu0 0.0
    %2377 = vmatprep.subr.mxu0 0.0
    %2378 = vmatpush1.msra.mxu0 0.0
    %2379 = vmatprep.subr.mxu0 0.0
    %2380 = vmatpush1.msra.mxu0 0.0
    %2381 = vmatprep.subr.mxu0 0.0
    %2382 = vmatpush1.msra.mxu0 0.0
    %2383 = vmatprep.subr.mxu0 0.0
    %2384 = vmatpush1.msra.mxu0 0.0
    %2385 = vmatprep.subr.mxu0 0.0
    %2386 = vmatpush1.msra.mxu0 0.0
    %2387 = vmatprep.subr.mxu0 0.0
    %2388 = vmatpush1.msra.mxu0 0.0
    %2389 = vmatprep.subr.mxu0 0.0
    %2390 = vmatpush1.msra.mxu0 0.0
    %2391 = vmatprep.subr.mxu0 0.0
    %2392 = vmatpush1.msra.mxu0 0.0
    %2393 = vmatprep.subr.mxu0 0.0
    %2394 = vmatpush1.msra.mxu0 0.0
    %2395 = vmatprep.subr.mxu0 0.0
    %2396 = vmatpush1.msra.mxu0 0.0
    %2397 = vmatprep.subr.mxu0 0.0
    %2398 = vmatpush1.msra.mxu0 0.0
    %2399 = vmatprep.subr.mxu0 0.0
    %2400 = vmatpush1.msra.mxu0 0.0
    %2401 = vmatprep.subr.mxu0 0.0
    %2402 = vmatpush1.msra.mxu0 0.0
    %2403 = vmatprep.subr.mxu0 0.0
    %2404 = vmatpush1.msra.mxu0 0.0
    %2405 = vmatprep.mubr.f32.mxu0 0.0
    %2406 = vmatmul.mubr.f32.gmra.mrb[0].mxu0 %v2339
    %v2407 = vpop.f32.mrb[0].mxu0
    %v2408 = vadd.f32 %v2337, %v2407
    %v2409 = vpop.f32.mrb[0].mxu0
    %2410 = vdwg.mxu0
    %vm2411 = vcmask 8192
    %2412 = vst.msk [vmem:[#allocation16] sm:$0x1] %vm2411, %v2408
    // Predicated region
    $region90: #{tpu_custom_call.1} parent=1 // pred_check
      _
    $region91: #{tpu_custom_call.1} parent=1 // pred_check_branch
      %2414 = sbr.rel (0) target = $region93
    $region92: #{tpu_custom_call.1} parent=1 // pred_region
      %s2416 = ssub.s32 16, 16
      %2417 = vsyncadd [#allocation6], %s2416
      %s2419 = sshll.u32 [#allocation16], 4
      %s2420 = int_to_ptr.vmem [resolvable:$true] %s2419
      %2422 = dma.vmem_to_hbm [thread:$0]  %s2420, 16, %s15, [#allocation6]
    $region93: #{tpu_custom_call.1} parent=1 // pred_fallthru
      _
    // Predicated region
    $region94: #{tpu_custom_call.1} parent=1 // pred_check
      _
    $region95: #{tpu_custom_call.1} parent=1 // pred_check_branch
      %2424 = sbr.rel (0) target = $region97
    $region96: #{tpu_custom_call.1} parent=1 // pred_region
      %2425 = dma.done [#allocation6], 16
    $region97: #{tpu_custom_call.1} parent=1 // pred_fallthru
      _
    %2426 = vsyncpa [#allocation5], 1
    %2427 = vsyncpa [#allocation8], 1
    %2428 = vsyncpa [#allocation11], 1
    %2429 = vsyncpa [#allocation14], 1
    %2430 = vsyncpa [#allocation6], 1

</llo_original>
